<compile_context>
chip_gen: v7x
topology: tpu7x:2x2x1
jax: 0.10.0
libtpu: 0.0.40
codegen_flags: <defaults>
</compile_context>

<pallas_src>
import functools

import jax
import jax.numpy as jnp
from jax.experimental import pallas as pl
from jax.experimental.pallas import tpu as pltpu


def encoder_kernel(x_ref,
                   w1_ref, t1_ref,
                   w2_ref, b2_ref,
                   w3g_ref, w3f_ref, t3_ref,
                   w4_ref, b4_ref,
                   o_ref, *, g_tile, n_pts):
    m = g_tile * n_pts
    c_mid = w2_ref.shape[1]   # 256
    c_hid = w3f_ref.shape[1]  # 512
    c_out = w4_ref.shape[1]   # encoder_channel

    x = x_ref[...]                                            # (M, 3) f32

    # Layer 1: Conv1d(3,128,1) + BN(eval) folded.  K=3 contraction as 3 VPU
    # FMAs (avoids a degenerate MXU matmul).
    h = (x[:, 0:1] * w1_ref[0:1, :]
         + x[:, 1:2] * w1_ref[1:2, :]
         + x[:, 2:3] * w1_ref[2:3, :]
         + t1_ref[...])
    h = jnp.maximum(h, 0.0)                                   # (M, 128) f32

    # Layer 2: Conv1d(128,256,1) -- bf16 MXU matmul, f32 accumulation.
    f = jnp.dot(h.astype(jnp.bfloat16), w2_ref[...],
                preferred_element_type=jnp.float32) + b2_ref[...]   # (M, 256)

    # Per-group max over the N points of each group.
    fg = jnp.max(f.reshape(g_tile, n_pts, c_mid), axis=1)     # (g_tile, 256)

    # Layer 3: Conv1d(512,512,1) + BN(eval) folded.  The PyTorch concat is
    # eliminated: global rows of w3 hit fg once per group, per-point rows hit f.
    gpart = jnp.dot(fg.astype(jnp.bfloat16), w3g_ref[...],
                    preferred_element_type=jnp.float32)       # (g_tile, 512)
    ppart = jnp.dot(f.astype(jnp.bfloat16), w3f_ref[...],
                    preferred_element_type=jnp.float32)       # (M, 512)
    h2 = (ppart.reshape(g_tile, n_pts, c_hid)
          + gpart.reshape(g_tile, 1, c_hid)
          + t3_ref[...])
    h2 = jnp.maximum(h2, 0.0)                                 # (g_tile, N, 512)

    # Layer 4: Conv1d(512, C, 1).
    out = jnp.dot(h2.reshape(m, c_hid).astype(jnp.bfloat16), w4_ref[...],
                  preferred_element_type=jnp.float32) + b4_ref[...]  # (M, C)

    # Final per-group max -> lane-dense (g_tile, C) output slab.
    o_ref[...] = jnp.max(out.reshape(g_tile, n_pts, c_out), axis=1)


def _pick_g_tile(bg, n):
    # Aim for M = g_tile * n around ~2048 rows (multiple of 256 for v6e/v7x
    # MXU, 128 for v5e) while keeping VMEM use well under v7x's 64 MiB, and
    # keep >= 2 grid steps when possible so megacore can load-balance.
    target_m = 2048
    g = max(1, target_m // max(n, 1))
    g = min(g, bg)
    if bg > 8 and g >= bg:
        g = bg // 2
    g = max(8, (g // 8) * 8)   # sublane-aligned output tile
    return g


def encoder_forward(point_groups, params, encoder_channel, g_tile=None):
    """point_groups: (B, G, N, 3) float32 -> (B, G, encoder_channel) float32."""
    B, G, N, _ = point_groups.shape
    BG = B * G
    C = encoder_channel

    (w1, b1, g1, be1, m1, v1,
     w2, b2,
     w3, b3, g3, be3, m3, v3,
     w4, b4) = params

    eps = 1e-5
    s1 = g1 / jnp.sqrt(v1 + eps)
    s3 = g3 / jnp.sqrt(v3 + eps)
    # Fold conv bias + eval-mode BN into the weights / a single shift.
    w1p = (w1 * s1[None, :]).astype(jnp.float32)              # (3, 128)
    t1 = (b1 * s1 + be1 - m1 * s1).reshape(1, -1)             # (1, 128)
    w3p = w3 * s3[None, :]                                    # (512, 512)
    t3 = (b3 * s3 + be3 - m3 * s3).reshape(1, -1)             # (1, 512)

    # bf16 weights for the MXU (accumulation stays f32 inside the kernel).
    w2b = w2.astype(jnp.bfloat16)
    w3g = w3p[:256, :].astype(jnp.bfloat16)   # rows hit by the global feature
    w3f = w3p[256:, :].astype(jnp.bfloat16)   # rows hit by the per-point feature
    w4b = w4.astype(jnp.bfloat16)
    b2r = b2.reshape(1, -1).astype(jnp.float32)
    b4r = b4.reshape(1, -1).astype(jnp.float32)

    if g_tile is None:
        g_tile = _pick_g_tile(BG, N)
    n_tiles = -(-BG // g_tile)
    bg_pad = n_tiles * g_tile
    M = g_tile * N

    x = point_groups.reshape(BG, N, 3).astype(jnp.float32)
    if bg_pad != BG:
        x = jnp.pad(x, ((0, bg_pad - BG), (0, 0), (0, 0)))
    x = x.reshape(bg_pad * N, 3)

    def _const2d(arr):
        return pl.BlockSpec(arr.shape, lambda i: (0, 0))

    in_specs = [
        pl.BlockSpec((M, 3), lambda i: (i, 0)),               # points slab
        _const2d(w1p), _const2d(t1),
        _const2d(w2b), _const2d(b2r),
        _const2d(w3g), _const2d(w3f), _const2d(t3),
        _const2d(w4b), _const2d(b4r),
    ]

    flops = (2 * bg_pad * N * (3 * 128 + 128 * 256 + 256 * 512 + 512 * C)
             + 2 * bg_pad * 256 * 512)
    bytes_accessed = (x.size * 4 + bg_pad * C * 4
                      + (w1p.size + t1.size + b2r.size + t3.size + b4r.size) * 4
                      + (w2b.size + w3g.size + w3f.size + w4b.size) * 2)

    out = pl.pallas_call(
        functools.partial(encoder_kernel, g_tile=g_tile, n_pts=N),
        out_shape=jax.ShapeDtypeStruct((bg_pad, C), jnp.float32),
        grid=(n_tiles,),
        in_specs=in_specs,
        out_specs=pl.BlockSpec((g_tile, C), lambda i: (i, 0)),
        compiler_params=pltpu.CompilerParams(
            dimension_semantics=("parallel",),
            vmem_limit_bytes=64 * 1024 * 1024),
        cost_estimate=pl.CostEstimate(
            flops=flops, transcendentals=0, bytes_accessed=bytes_accessed),
    )(x, w1p, t1, w2b, b2r, w3g, w3f, t3, w4b, b4r)

    return out[:BG].reshape(B, G, C)


def encoder_reference(point_groups, params, encoder_channel):
    """Pure-JAX f32 reference (exact module math, channels-last)."""
    B, G, N, _ = point_groups.shape
    x = point_groups.reshape(B * G, N, 3).astype(jnp.float32)
    (w1, b1, g1, be1, m1, v1,
     w2, b2,
     w3, b3, g3, be3, m3, v3,
     w4, b4) = params
    eps = 1e-5
    h = jnp.einsum('bnc,cd->bnd', x, w1) + b1
    h = (h - m1) / jnp.sqrt(v1 + eps) * g1 + be1
    h = jnp.maximum(h, 0.0)
    f = jnp.einsum('bnc,cd->bnd', h, w2) + b2
    fg = jnp.max(f, axis=1, keepdims=True)
    cat = jnp.concatenate([jnp.broadcast_to(fg, f.shape), f], axis=-1)
    h2 = jnp.einsum('bnc,cd->bnd', cat, w3) + b3
    h2 = (h2 - m3) / jnp.sqrt(v3 + eps) * g3 + be3
    h2 = jnp.maximum(h2, 0.0)
    out = jnp.einsum('bnc,cd->bnd', h2, w4) + b4
    return jnp.max(out, axis=1).reshape(B, G, encoder_channel)


def encoder_reference_mixed(point_groups, params, encoder_channel):
    """Pure-JAX reference mirroring the kernel's bf16-matmul / f32-accum math."""
    B, G, N, _ = point_groups.shape
    x = point_groups.reshape(B * G, N, 3).astype(jnp.float32)
    (w1, b1, g1, be1, m1, v1,
     w2, b2,
     w3, b3, g3, be3, m3, v3,
     w4, b4) = params
    eps = 1e-5
    s1 = g1 / jnp.sqrt(v1 + eps)
    s3 = g3 / jnp.sqrt(v3 + eps)
    w1p = w1 * s1[None, :]
    t1 = b1 * s1 + be1 - m1 * s1
    w3p = w3 * s3[None, :]
    t3 = b3 * s3 + be3 - m3 * s3
    bf16, f32 = jnp.bfloat16, jnp.float32

    h = (x[..., 0:1] * w1p[0] + x[..., 1:2] * w1p[1] + x[..., 2:3] * w1p[2] + t1)
    h = jnp.maximum(h, 0.0)
    f = jnp.einsum('bnc,cd->bnd', h.astype(bf16), w2.astype(bf16),
                   preferred_element_type=f32) + b2
    fg = jnp.max(f, axis=1)
    gpart = jnp.einsum('bc,cd->bd', fg.astype(bf16), w3p[:256].astype(bf16),
                       preferred_element_type=f32)
    ppart = jnp.einsum('bnc,cd->bnd', f.astype(bf16), w3p[256:].astype(bf16),
                       preferred_element_type=f32)
    h2 = jnp.maximum(ppart + gpart[:, None, :] + t3, 0.0)
    out = jnp.einsum('bnc,cd->bnd', h2.astype(bf16), w4.astype(bf16),
                     preferred_element_type=f32) + b4
    return jnp.max(out, axis=1).reshape(B, G, encoder_channel)


def make_params(key, encoder_channel):
    C = encoder_channel
    ks = jax.random.split(key, 16)
    f32 = jnp.float32
    w1 = 0.1 * jax.random.normal(ks[0], (3, 128), f32)
    b1 = 0.1 * jax.random.normal(ks[1], (128,), f32)
    g1 = 1.0 + 0.1 * jax.random.normal(ks[2], (128,), f32)
    be1 = 0.1 * jax.random.normal(ks[3], (128,), f32)
    m1 = 0.1 * jax.random.normal(ks[4], (128,), f32)
    v1 = 1.0 + 0.1 * jnp.abs(jax.random.normal(ks[5], (128,), f32))
    w2 = 0.1 * jax.random.normal(ks[6], (128, 256), f32)
    b2 = 0.1 * jax.random.normal(ks[7], (256,), f32)
    w3 = 0.05 * jax.random.normal(ks[8], (512, 512), f32)
    b3 = 0.1 * jax.random.normal(ks[9], (512,), f32)
    g3 = 1.0 + 0.1 * jax.random.normal(ks[10], (512,), f32)
    be3 = 0.1 * jax.random.normal(ks[11], (512,), f32)
    m3 = 0.1 * jax.random.normal(ks[12], (512,), f32)
    v3 = 1.0 + 0.1 * jnp.abs(jax.random.normal(ks[13], (512,), f32))
    w4 = 0.05 * jax.random.normal(ks[14], (512, C), f32)
    b4 = 0.1 * jax.random.normal(ks[15], (C,), f32)
    return (w1, b1, g1, be1, m1, v1, w2, b2,
            w3, b3, g3, be3, m3, v3, w4, b4)


if __name__ == "__main__":
    key = jax.random.PRNGKey(0)
    k_pts, k_par = jax.random.split(key)

    B, G, N = 2, 16, 32          # BG = 32 groups -> g_tile = 16, grid = (2,)
    encoder_channel = 128

    point_groups = jax.random.normal(k_pts, (B, G, N, 3), jnp.float32)
    params = make_params(k_par, encoder_channel)

    out = encoder_forward(point_groups, params, encoder_channel)
    out = jax.block_until_ready(out)
    assert out.shape == (B, G, encoder_channel), out.shape

    # Tight check against a reference that mirrors the kernel's mixed precision.
    ref_mixed = encoder_reference_mixed(point_groups, params, encoder_channel)
    assert jnp.allclose(out, ref_mixed, atol=5e-3, rtol=5e-3), (
        float(jnp.max(jnp.abs(out - ref_mixed))))

    # Loose sanity check against the full-f32 module semantics (bf16 drift).
    ref_f32 = encoder_reference(point_groups, params, encoder_channel)
    assert jnp.allclose(out, ref_f32, atol=1e-1, rtol=1e-1), (
        float(jnp.max(jnp.abs(out - ref_f32))))

    print("KERNEL_OK")
</pallas_src>

<mosaic_0001>
module attributes {stable_mosaic.version = 11 : i64} {
  func.func @encoder_kernel(%arg0: i32, %arg1: memref<512x3xf32, #tpu.memory_space<vmem>>, %arg2: memref<3x128xf32, #tpu.memory_space<vmem>>, %arg3: memref<1x128xf32, #tpu.memory_space<vmem>>, %arg4: memref<128x256xbf16, #tpu.memory_space<vmem>>, %arg5: memref<1x256xf32, #tpu.memory_space<vmem>>, %arg6: memref<256x512xbf16, #tpu.memory_space<vmem>>, %arg7: memref<256x512xbf16, #tpu.memory_space<vmem>>, %arg8: memref<1x512xf32, #tpu.memory_space<vmem>>, %arg9: memref<512x128xbf16, #tpu.memory_space<vmem>>, %arg10: memref<1x128xf32, #tpu.memory_space<vmem>>, %arg11: memref<16x128xf32, #tpu.memory_space<vmem>>) attributes {dimension_semantics = [#tpu.dimension_semantics<parallel>], iteration_bounds = array<i64: 2>, scalar_prefetch = 0 : i64, scratch_operands = 0 : i64, tpu.core_type = #tpu.core_type<tc>, window_params = [{transform_indices = @transform_0, window_bounds = array<i64: 512, 3>}, {pipeline_mode = #tpu.pipeline_mode<synchronous>, transform_indices = @transform_1, window_bounds = array<i64: 3, 128>}, {pipeline_mode = #tpu.pipeline_mode<synchronous>, transform_indices = @transform_2, window_bounds = array<i64: 1, 128>}, {pipeline_mode = #tpu.pipeline_mode<synchronous>, transform_indices = @transform_3, window_bounds = array<i64: 128, 256>}, {pipeline_mode = #tpu.pipeline_mode<synchronous>, transform_indices = @transform_4, window_bounds = array<i64: 1, 256>}, {pipeline_mode = #tpu.pipeline_mode<synchronous>, transform_indices = @transform_5, window_bounds = array<i64: 256, 512>}, {pipeline_mode = #tpu.pipeline_mode<synchronous>, transform_indices = @transform_6, window_bounds = array<i64: 256, 512>}, {pipeline_mode = #tpu.pipeline_mode<synchronous>, transform_indices = @transform_7, window_bounds = array<i64: 1, 512>}, {pipeline_mode = #tpu.pipeline_mode<synchronous>, transform_indices = @transform_8, window_bounds = array<i64: 512, 128>}, {pipeline_mode = #tpu.pipeline_mode<synchronous>, transform_indices = @transform_9, window_bounds = array<i64: 1, 128>}, {transform_indices = @transform_10, window_bounds = array<i64: 16, 128>}]} {
    %c0 = arith.constant 0 : index
    %c0_0 = arith.constant 0 : index
    %0 = vector.load %arg1[%c0, %c0_0] : memref<512x3xf32, #tpu.memory_space<vmem>>, vector<512x3xf32>
    %1 = vector.extract_strided_slice %0 {offsets = [0, 0], sizes = [512, 1], strides = [1, 1]} : vector<512x3xf32> to vector<512x1xf32>
    %c0_1 = arith.constant 0 : index
    %c0_2 = arith.constant 0 : index
    %2 = vector.load %arg2[%c0_1, %c0_2] : memref<3x128xf32, #tpu.memory_space<vmem>>, vector<1x128xf32>
    %3 = vector.broadcast %1 : vector<512x1xf32> to vector<512x128xf32>
    %4 = vector.broadcast %2 : vector<1x128xf32> to vector<512x128xf32>
    %5 = arith.mulf %3, %4 : vector<512x128xf32>
    %6 = vector.extract_strided_slice %0 {offsets = [0, 1], sizes = [512, 1], strides = [1, 1]} : vector<512x3xf32> to vector<512x1xf32>
    %c1 = arith.constant 1 : index
    %c0_3 = arith.constant 0 : index
    %7 = vector.load %arg2[%c1, %c0_3] : memref<3x128xf32, #tpu.memory_space<vmem>>, vector<1x128xf32>
    %8 = vector.broadcast %6 : vector<512x1xf32> to vector<512x128xf32>
    %9 = vector.broadcast %7 : vector<1x128xf32> to vector<512x128xf32>
    %10 = arith.mulf %8, %9 : vector<512x128xf32>
    %11 = arith.addf %5, %10 : vector<512x128xf32>
    %12 = vector.extract_strided_slice %0 {offsets = [0, 2], sizes = [512, 1], strides = [1, 1]} : vector<512x3xf32> to vector<512x1xf32>
    %c2 = arith.constant 2 : index
    %c0_4 = arith.constant 0 : index
    %13 = vector.load %arg2[%c2, %c0_4] : memref<3x128xf32, #tpu.memory_space<vmem>>, vector<1x128xf32>
    %14 = vector.broadcast %12 : vector<512x1xf32> to vector<512x128xf32>
    %15 = vector.broadcast %13 : vector<1x128xf32> to vector<512x128xf32>
    %16 = arith.mulf %14, %15 : vector<512x128xf32>
    %17 = arith.addf %11, %16 : vector<512x128xf32>
    %c0_5 = arith.constant 0 : index
    %c0_6 = arith.constant 0 : index
    %18 = vector.load %arg3[%c0_5, %c0_6] : memref<1x128xf32, #tpu.memory_space<vmem>>, vector<1x128xf32>
    %19 = vector.broadcast %18 : vector<1x128xf32> to vector<512x128xf32>
    %20 = arith.addf %17, %19 : vector<512x128xf32>
    %cst = arith.constant 0.000000e+00 : f32
    %21 = vector.broadcast %cst : f32 to vector<512x128xf32>
    %22 = arith.maximumf %20, %21 : vector<512x128xf32>
    %23 = arith.truncf %22 : vector<512x128xf32> to vector<512x128xbf16>
    %c0_7 = arith.constant 0 : index
    %c0_8 = arith.constant 0 : index
    %24 = vector.load %arg4[%c0_7, %c0_8] : memref<128x256xbf16, #tpu.memory_space<vmem>>, vector<128x256xbf16>
    %cst_9 = arith.constant dense<0.000000e+00> : vector<512x256xf32>
    %25 = tpu.matmul %23, %24, %cst_9 {dimension_numbers = #tpu.dot_dimension_numbers<[1], [0], [0], [1], [0, 0, 1, 1], [], []>} : vector<512x128xbf16>, vector<128x256xbf16>, vector<512x256xf32> -> vector<512x256xf32>
    %c0_10 = arith.constant 0 : index
    %c0_11 = arith.constant 0 : index
    %26 = vector.load %arg5[%c0_10, %c0_11] : memref<1x256xf32, #tpu.memory_space<vmem>>, vector<1x256xf32>
    %27 = vector.broadcast %26 : vector<1x256xf32> to vector<512x256xf32>
    %28 = arith.addf %25, %27 : vector<512x256xf32>
    %29 = vector.shape_cast %28 : vector<512x256xf32> to vector<16x32x256xf32>
    %cst_12 = arith.constant dense<0xFF800000> : vector<16x256xf32>
    %30 = vector.multi_reduction <maximumf>, %29, %cst_12 [1] : vector<16x32x256xf32> to vector<16x256xf32>
    %31 = arith.truncf %30 : vector<16x256xf32> to vector<16x256xbf16>
    %c0_13 = arith.constant 0 : index
    %c0_14 = arith.constant 0 : index
    %32 = vector.load %arg6[%c0_13, %c0_14] : memref<256x512xbf16, #tpu.memory_space<vmem>>, vector<256x512xbf16>
    %cst_15 = arith.constant dense<0.000000e+00> : vector<16x512xf32>
    %33 = tpu.matmul %31, %32, %cst_15 {dimension_numbers = #tpu.dot_dimension_numbers<[1], [0], [0], [1], [0, 0, 1, 1], [], []>} : vector<16x256xbf16>, vector<256x512xbf16>, vector<16x512xf32> -> vector<16x512xf32>
    %34 = arith.truncf %28 : vector<512x256xf32> to vector<512x256xbf16>
    %c0_16 = arith.constant 0 : index
    %c0_17 = arith.constant 0 : index
    %35 = vector.load %arg7[%c0_16, %c0_17] : memref<256x512xbf16, #tpu.memory_space<vmem>>, vector<256x512xbf16>
    %cst_18 = arith.constant dense<0.000000e+00> : vector<512x512xf32>
    %36 = tpu.matmul %34, %35, %cst_18 {dimension_numbers = #tpu.dot_dimension_numbers<[1], [0], [0], [1], [0, 0, 1, 1], [], []>} : vector<512x256xbf16>, vector<256x512xbf16>, vector<512x512xf32> -> vector<512x512xf32>
    %37 = vector.shape_cast %36 : vector<512x512xf32> to vector<16x32x512xf32>
    %38 = vector.shape_cast %33 : vector<16x512xf32> to vector<16x1x512xf32>
    %39 = vector.broadcast %38 : vector<16x1x512xf32> to vector<16x32x512xf32>
    %40 = arith.addf %37, %39 : vector<16x32x512xf32>
    %c0_19 = arith.constant 0 : index
    %c0_20 = arith.constant 0 : index
    %41 = vector.load %arg8[%c0_19, %c0_20] : memref<1x512xf32, #tpu.memory_space<vmem>>, vector<1x512xf32>
    %42 = vector.shape_cast %41 : vector<1x512xf32> to vector<1x1x512xf32>
    %43 = vector.broadcast %42 : vector<1x1x512xf32> to vector<16x32x512xf32>
    %44 = arith.addf %40, %43 : vector<16x32x512xf32>
    %cst_21 = arith.constant 0.000000e+00 : f32
    %45 = vector.broadcast %cst_21 : f32 to vector<16x32x512xf32>
    %46 = arith.maximumf %44, %45 : vector<16x32x512xf32>
    %47 = vector.shape_cast %46 : vector<16x32x512xf32> to vector<512x512xf32>
    %48 = arith.truncf %47 : vector<512x512xf32> to vector<512x512xbf16>
    %c0_22 = arith.constant 0 : index
    %c0_23 = arith.constant 0 : index
    %49 = vector.load %arg9[%c0_22, %c0_23] : memref<512x128xbf16, #tpu.memory_space<vmem>>, vector<512x128xbf16>
    %cst_24 = arith.constant dense<0.000000e+00> : vector<512x128xf32>
    %50 = tpu.matmul %48, %49, %cst_24 {dimension_numbers = #tpu.dot_dimension_numbers<[1], [0], [0], [1], [0, 0, 1, 1], [], []>} : vector<512x512xbf16>, vector<512x128xbf16>, vector<512x128xf32> -> vector<512x128xf32>
    %c0_25 = arith.constant 0 : index
    %c0_26 = arith.constant 0 : index
    %51 = vector.load %arg10[%c0_25, %c0_26] : memref<1x128xf32, #tpu.memory_space<vmem>>, vector<1x128xf32>
    %52 = vector.broadcast %51 : vector<1x128xf32> to vector<512x128xf32>
    %53 = arith.addf %50, %52 : vector<512x128xf32>
    %54 = vector.shape_cast %53 : vector<512x128xf32> to vector<16x32x128xf32>
    %cst_27 = arith.constant dense<0xFF800000> : vector<16x128xf32>
    %55 = vector.multi_reduction <maximumf>, %54, %cst_27 [1] : vector<16x32x128xf32> to vector<16x128xf32>
    %c0_28 = arith.constant 0 : index
    %c0_29 = arith.constant 0 : index
    %56 = vector.load %arg11[%c0_28, %c0_29] : memref<16x128xf32, #tpu.memory_space<vmem>>, vector<16x128xf32>
    tpu.vector_store %arg11[%c0_28, %c0_29], %55 {strides = array<i32>} : memref<16x128xf32, #tpu.memory_space<vmem>>, vector<16x128xf32>,
    return
  }
  func.func @transform_0(%arg0: i32) -> (i32, i32) {
    %c0_i32 = arith.constant 0 : i32
    %c0_i32_0 = arith.constant 0 : i32
    return %arg0, %c0_i32 : i32, i32
  }
  func.func @transform_1(%arg0: i32) -> (i32, i32) {
    %c0_i32 = arith.constant 0 : i32
    %c0_i32_0 = arith.constant 0 : i32
    %c0_i32_1 = arith.constant 0 : i32
    return %c0_i32, %c0_i32_0 : i32, i32
  }
  func.func @transform_2(%arg0: i32) -> (i32, i32) {
    %c0_i32 = arith.constant 0 : i32
    %c0_i32_0 = arith.constant 0 : i32
    %c0_i32_1 = arith.constant 0 : i32
    return %c0_i32, %c0_i32_0 : i32, i32
  }
  func.func @transform_3(%arg0: i32) -> (i32, i32) {
    %c0_i32 = arith.constant 0 : i32
    %c0_i32_0 = arith.constant 0 : i32
    %c0_i32_1 = arith.constant 0 : i32
    return %c0_i32, %c0_i32_0 : i32, i32
  }
  func.func @transform_4(%arg0: i32) -> (i32, i32) {
    %c0_i32 = arith.constant 0 : i32
    %c0_i32_0 = arith.constant 0 : i32
    %c0_i32_1 = arith.constant 0 : i32
    return %c0_i32, %c0_i32_0 : i32, i32
  }
  func.func @transform_5(%arg0: i32) -> (i32, i32) {
    %c0_i32 = arith.constant 0 : i32
    %c0_i32_0 = arith.constant 0 : i32
    %c0_i32_1 = arith.constant 0 : i32
    return %c0_i32, %c0_i32_0 : i32, i32
  }
  func.func @transform_6(%arg0: i32) -> (i32, i32) {
    %c0_i32 = arith.constant 0 : i32
    %c0_i32_0 = arith.constant 0 : i32
    %c0_i32_1 = arith.constant 0 : i32
    return %c0_i32, %c0_i32_0 : i32, i32
  }
  func.func @transform_7(%arg0: i32) -> (i32, i32) {
    %c0_i32 = arith.constant 0 : i32
    %c0_i32_0 = arith.constant 0 : i32
    %c0_i32_1 = arith.constant 0 : i32
    return %c0_i32, %c0_i32_0 : i32, i32
  }
  func.func @transform_8(%arg0: i32) -> (i32, i32) {
    %c0_i32 = arith.constant 0 : i32
    %c0_i32_0 = arith.constant 0 : i32
    %c0_i32_1 = arith.constant 0 : i32
    return %c0_i32, %c0_i32_0 : i32, i32
  }
  func.func @transform_9(%arg0: i32) -> (i32, i32) {
    %c0_i32 = arith.constant 0 : i32
    %c0_i32_0 = arith.constant 0 : i32
    %c0_i32_1 = arith.constant 0 : i32
    return %c0_i32, %c0_i32_0 : i32, i32
  }
  func.func @transform_10(%arg0: i32) -> (i32, i32) {
    %c0_i32 = arith.constant 0 : i32
    %c0_i32_0 = arith.constant 0 : i32
    return %arg0, %c0_i32 : i32, i32
  }
}

</mosaic_0001>

<llo_original>
// kernel: tpu_custom_call.1
$region0: #{tpu_custom_call.1}
  #allocation0 [shape = 'u32[]', space=smem, size = 0x4, offset = 0x4, fixed_abs, tag = 'smem constant byte address 0x4 - core index']
  #allocation1 [shape = 'u32[144,128]{1,0:T(1,128)}', space=vmem, size = 0x12000, scoped, tag = 'internal scratch']
  %s0 = inlined_call_operand.hbm [shape: f32[1024,3], index: 0, kind: input, shape index: {}]
  %s1 = inlined_call_operand.hbm [shape: f32[3,128], index: 1, kind: input, shape index: {}]
  %s2 = inlined_call_operand.hbm [shape: f32[1,128], index: 2, kind: input, shape index: {}]
  %s3 = inlined_call_operand.hbm [shape: bf16[128,256], index: 3, kind: input, shape index: {}]
  %s4 = inlined_call_operand.hbm [shape: f32[1,256], index: 4, kind: input, shape index: {}]
  %s5 = inlined_call_operand.hbm [shape: bf16[256,512], index: 5, kind: input, shape index: {}]
  %s6 = inlined_call_operand.hbm [shape: bf16[256,512], index: 6, kind: input, shape index: {}]
  %s7 = inlined_call_operand.hbm [shape: f32[1,512], index: 7, kind: input, shape index: {}]
  %s8 = inlined_call_operand.hbm [shape: bf16[512,128], index: 8, kind: input, shape index: {}]
  %s9 = inlined_call_operand.hbm [shape: f32[1,128], index: 9, kind: input, shape index: {}]
  %s10 = inlined_call_operand.hbm [shape: f32[32,128], index: 10, kind: output, shape index: {}]
  %s11 = sld [smem:[#allocation0]]
  $region113: #{tpu_custom_call.1} parent=0
    _
  %s13 = ssub.s32 1, %s11
  %s14 = scalar_select 0, %s13, %s11
  $region1: #{tpu_custom_call.1} parent=0
    #allocation2 [shape = 'u8[524288]{0}', space=vmem, size = 0x80000, scoped, tag = 'input window, operand 0']
    #allocation3 [shape = 's32[2]{0}', space=sflag, size = 0x8, scoped, tag = 'scoped memory for tpu_custom_call.1']
    #allocation4 [shape = 's32[2]{0}', space=sflag, size = 0x8, scoped, tag = 'scoped memory for tpu_custom_call.1']
    #allocation5 [shape = 'u8[2048]{0}', space=vmem, size = 0x800, scoped, tag = 'input window, operand 1, single buffered']
    #allocation6 [shape = 's32[1]{0}', space=sflag, size = 0x4, scoped, tag = 'scoped memory for tpu_custom_call.1']
    #allocation7 [shape = 'u8[512]{0}', space=vmem, size = 0x400, scoped, tag = 'input window, operand 2, single buffered']
    #allocation8 [shape = 'u8[65536]{0}', space=vmem, size = 0x10000, scoped, tag = 'input window, operand 3, single buffered']
    #allocation9 [shape = 's32[1]{0}', space=sflag, size = 0x4, scoped, tag = 'scoped memory for tpu_custom_call.1']
    #allocation10 [shape = 'u8[1024]{0}', space=vmem, size = 0x400, scoped, tag = 'input window, operand 4, single buffered']
    #allocation11 [shape = 'u8[262144]{0}', space=vmem, size = 0x40000, scoped, tag = 'input window, operand 5, single buffered']
    #allocation12 [shape = 's32[1]{0}', space=sflag, size = 0x4, scoped, tag = 'scoped memory for tpu_custom_call.1']
    #allocation13 [shape = 'u8[262144]{0}', space=vmem, size = 0x40000, scoped, tag = 'input window, operand 6, single buffered']
    #allocation14 [shape = 'u8[2048]{0}', space=vmem, size = 0x800, scoped, tag = 'input window, operand 7, single buffered']
    #allocation15 [shape = 's32[1]{0}', space=sflag, size = 0x4, scoped, tag = 'scoped memory for tpu_custom_call.1']
    #allocation16 [shape = 'u8[131072]{0}', space=vmem, size = 0x20000, scoped, tag = 'input window, operand 8, single buffered']
    #allocation17 [shape = 'u8[512]{0}', space=vmem, size = 0x400, scoped, tag = 'input window, operand 9, single buffered']
    #allocation18 [shape = 's32[1]{0}', space=sflag, size = 0x4, scoped, tag = 'scoped memory for tpu_custom_call.1']
    #allocation19 [shape = 'u8[16384]{0}', space=vmem, size = 0x4000, scoped, tag = 'output window, operand 0']
    %15 = vsyncpa [#allocation3], 0
    %s16 = scalar_lea.sflag [#allocation3], 1
    %17 = vsyncpa %s16, 0
    %18 = vsyncpa [#allocation6], 0
    %19 = vsyncpa [#allocation9], 0
    %20 = vsyncpa [#allocation12], 0
    %21 = vsyncpa [#allocation15], 0
    %22 = vsyncpa [#allocation18], 0
    %23 = vsyncpa [#allocation4], 0
    %s24 = scalar_lea.sflag [#allocation4], 1
    %25 = vsyncpa %s24, 0
    loop: start=0, step=1, limit=4
    $region2: #{tpu_custom_call.1} parent=1 // loop_pre_header
      _
    $region3: #{tpu_custom_call.1} parent=1 // loop_header
      %s27 = sphi 0, %s31
      %p28 = scmp.ge.s32.totalorder %s27, 4
      %s37 = sphi 0, %s39
      %s40 = sphi 0, %s37
      %s41 = sphi 0, %s40
      %s57 = sphi 0, %s41
      %s61 = sphi 0, %s61
      %s63 = sphi 0, %s61
      %s64 = sphi 0, %s63
      %s78 = sphi 0, %s64
      %s82 = sphi 0, %s82
      %s84 = sphi 0, %s82
      %s85 = sphi 0, %s84
      %s99 = sphi 0, %s85
      %s103 = sphi 0, %s103
      %s105 = sphi 0, %s103
      %s106 = sphi 0, %s105
      %s120 = sphi 0, %s106
      %s124 = sphi 0, %s124
      %s126 = sphi 0, %s124
      %s127 = sphi 0, %s126
      %s141 = sphi 0, %s127
      %s145 = sphi 0, %s145
      %s147 = sphi 0, %s145
      %s148 = sphi 0, %s147
      %s162 = sphi 0, %s148
      %s166 = sphi 0, %s166
      %s168 = sphi 0, %s166
      %s169 = sphi 0, %s168
      %s183 = sphi 0, %s169
      %s187 = sphi 0, %s187
      %s189 = sphi 0, %s187
      %s190 = sphi 0, %s189
      %s204 = sphi 0, %s190
      %s208 = sphi 0, %s208
      %s210 = sphi 0, %s208
      %s211 = sphi 0, %s210
      %s225 = sphi 0, %s211
      %s229 = sphi 0, %s229
      %s231 = sphi 0, %s229
      %s232 = sphi 0, %s231
      %s246 = sphi 0, %s232
      %s252 = sphi 0, %s254
      %s255 = sphi 0, %s252
      %s256 = sphi 0, %s255
      %s272 = sphi 0, %s256
    $region4: #{tpu_custom_call.1} parent=1 // loop_header_branch
      %30 = sbr.rel (%p28) target = $region8
    $region5: #{tpu_custom_call.1} parent=1 // loop_body
      %s32 = ssub.s32 %s27, 1
      %s33 = ssub.s32 %s27, 2
      %s34 = sadd.s32 %s27, 1
      %s35 = ssub.s32 %s27, %s34
      %p36 = scmp.eq.s32.totalorder %s35, 0
      %s38 = sadd.s32 %s37, 1
      %s39 = scalar_select %p36, %s37, %s38
      %p42 = pneg %p36
      %p43 = scmp.eq.s32.totalorder %s27, 1
      %p44 = por %p42, %p43
      %p45 = scmp.ne.s32.totalorder %s37, %s40
      %p46 = scmp.eq.s32.totalorder %s27, 0
      %p47 = por %p45, %p46
      %p48 = scmp.ne.s32.totalorder %s37, %s40
      %p49 = scmp.eq.s32.totalorder %s32, 1
      %p50 = por %p48, %p49
      %p51 = scmp.ne.s32.totalorder %s40, %s41
      %p52 = scmp.eq.s32.totalorder %s32, 0
      %p53 = por %p51, %p52
      %p54 = scmp.ne.s32.totalorder %s40, %s41
      %p55 = scmp.eq.s32.totalorder %s33, 1
      %p56 = por %p54, %p55
      %p58 = scmp.ne.s32.totalorder %s41, %s57
      %p59 = scmp.eq.s32.totalorder %s33, 0
      %p60 = por %p58, %p59
      %s62 = sadd.s32 %s61, 1
      %p65 = scmp.eq.s32.totalorder %s27, 1
      %p66 = scmp.ne.s32.totalorder %s61, %s63
      %p67 = scmp.eq.s32.totalorder %s27, 0
      %p68 = por %p66, %p67
      %p69 = scmp.ne.s32.totalorder %s61, %s63
      %p70 = scmp.eq.s32.totalorder %s32, 1
      %p71 = por %p69, %p70
      %p72 = scmp.ne.s32.totalorder %s63, %s64
      %p73 = scmp.eq.s32.totalorder %s32, 0
      %p74 = por %p72, %p73
      %p75 = scmp.ne.s32.totalorder %s63, %s64
      %p76 = scmp.eq.s32.totalorder %s33, 1
      %p77 = por %p75, %p76
      %p79 = scmp.ne.s32.totalorder %s64, %s78
      %p80 = scmp.eq.s32.totalorder %s33, 0
      %p81 = por %p79, %p80
      %s83 = sadd.s32 %s82, 1
      %p86 = scmp.eq.s32.totalorder %s27, 1
      %p87 = scmp.ne.s32.totalorder %s82, %s84
      %p88 = scmp.eq.s32.totalorder %s27, 0
      %p89 = por %p87, %p88
      %p90 = scmp.ne.s32.totalorder %s82, %s84
      %p91 = scmp.eq.s32.totalorder %s32, 1
      %p92 = por %p90, %p91
      %p93 = scmp.ne.s32.totalorder %s84, %s85
      %p94 = scmp.eq.s32.totalorder %s32, 0
      %p95 = por %p93, %p94
      %p96 = scmp.ne.s32.totalorder %s84, %s85
      %p97 = scmp.eq.s32.totalorder %s33, 1
      %p98 = por %p96, %p97
      %p100 = scmp.ne.s32.totalorder %s85, %s99
      %p101 = scmp.eq.s32.totalorder %s33, 0
      %p102 = por %p100, %p101
      %s104 = sadd.s32 %s103, 1
      %p107 = scmp.eq.s32.totalorder %s27, 1
      %p108 = scmp.ne.s32.totalorder %s103, %s105
      %p109 = scmp.eq.s32.totalorder %s27, 0
      %p110 = por %p108, %p109
      %p111 = scmp.ne.s32.totalorder %s103, %s105
      %p112 = scmp.eq.s32.totalorder %s32, 1
      %p113 = por %p111, %p112
      %p114 = scmp.ne.s32.totalorder %s105, %s106
      %p115 = scmp.eq.s32.totalorder %s32, 0
      %p116 = por %p114, %p115
      %p117 = scmp.ne.s32.totalorder %s105, %s106
      %p118 = scmp.eq.s32.totalorder %s33, 1
      %p119 = por %p117, %p118
      %p121 = scmp.ne.s32.totalorder %s106, %s120
      %p122 = scmp.eq.s32.totalorder %s33, 0
      %p123 = por %p121, %p122
      %s125 = sadd.s32 %s124, 1
      %p128 = scmp.eq.s32.totalorder %s27, 1
      %p129 = scmp.ne.s32.totalorder %s124, %s126
      %p130 = scmp.eq.s32.totalorder %s27, 0
      %p131 = por %p129, %p130
      %p132 = scmp.ne.s32.totalorder %s124, %s126
      %p133 = scmp.eq.s32.totalorder %s32, 1
      %p134 = por %p132, %p133
      %p135 = scmp.ne.s32.totalorder %s126, %s127
      %p136 = scmp.eq.s32.totalorder %s32, 0
      %p137 = por %p135, %p136
      %p138 = scmp.ne.s32.totalorder %s126, %s127
      %p139 = scmp.eq.s32.totalorder %s33, 1
      %p140 = por %p138, %p139
      %p142 = scmp.ne.s32.totalorder %s127, %s141
      %p143 = scmp.eq.s32.totalorder %s33, 0
      %p144 = por %p142, %p143
      %s146 = sadd.s32 %s145, 1
      %p149 = scmp.eq.s32.totalorder %s27, 1
      %p150 = scmp.ne.s32.totalorder %s145, %s147
      %p151 = scmp.eq.s32.totalorder %s27, 0
      %p152 = por %p150, %p151
      %p153 = scmp.ne.s32.totalorder %s145, %s147
      %p154 = scmp.eq.s32.totalorder %s32, 1
      %p155 = por %p153, %p154
      %p156 = scmp.ne.s32.totalorder %s147, %s148
      %p157 = scmp.eq.s32.totalorder %s32, 0
      %p158 = por %p156, %p157
      %p159 = scmp.ne.s32.totalorder %s147, %s148
      %p160 = scmp.eq.s32.totalorder %s33, 1
      %p161 = por %p159, %p160
      %p163 = scmp.ne.s32.totalorder %s148, %s162
      %p164 = scmp.eq.s32.totalorder %s33, 0
      %p165 = por %p163, %p164
      %s167 = sadd.s32 %s166, 1
      %p170 = scmp.eq.s32.totalorder %s27, 1
      %p171 = scmp.ne.s32.totalorder %s166, %s168
      %p172 = scmp.eq.s32.totalorder %s27, 0
      %p173 = por %p171, %p172
      %p174 = scmp.ne.s32.totalorder %s166, %s168
      %p175 = scmp.eq.s32.totalorder %s32, 1
      %p176 = por %p174, %p175
      %p177 = scmp.ne.s32.totalorder %s168, %s169
      %p178 = scmp.eq.s32.totalorder %s32, 0
      %p179 = por %p177, %p178
      %p180 = scmp.ne.s32.totalorder %s168, %s169
      %p181 = scmp.eq.s32.totalorder %s33, 1
      %p182 = por %p180, %p181
      %p184 = scmp.ne.s32.totalorder %s169, %s183
      %p185 = scmp.eq.s32.totalorder %s33, 0
      %p186 = por %p184, %p185
      %s188 = sadd.s32 %s187, 1
      %p191 = scmp.eq.s32.totalorder %s27, 1
      %p192 = scmp.ne.s32.totalorder %s187, %s189
      %p193 = scmp.eq.s32.totalorder %s27, 0
      %p194 = por %p192, %p193
      %p195 = scmp.ne.s32.totalorder %s187, %s189
      %p196 = scmp.eq.s32.totalorder %s32, 1
      %p197 = por %p195, %p196
      %p198 = scmp.ne.s32.totalorder %s189, %s190
      %p199 = scmp.eq.s32.totalorder %s32, 0
      %p200 = por %p198, %p199
      %p201 = scmp.ne.s32.totalorder %s189, %s190
      %p202 = scmp.eq.s32.totalorder %s33, 1
      %p203 = por %p201, %p202
      %p205 = scmp.ne.s32.totalorder %s190, %s204
      %p206 = scmp.eq.s32.totalorder %s33, 0
      %p207 = por %p205, %p206
      %s209 = sadd.s32 %s208, 1
      %p212 = scmp.eq.s32.totalorder %s27, 1
      %p213 = scmp.ne.s32.totalorder %s208, %s210
      %p214 = scmp.eq.s32.totalorder %s27, 0
      %p215 = por %p213, %p214
      %p216 = scmp.ne.s32.totalorder %s208, %s210
      %p217 = scmp.eq.s32.totalorder %s32, 1
      %p218 = por %p216, %p217
      %p219 = scmp.ne.s32.totalorder %s210, %s211
      %p220 = scmp.eq.s32.totalorder %s32, 0
      %p221 = por %p219, %p220
      %p222 = scmp.ne.s32.totalorder %s210, %s211
      %p223 = scmp.eq.s32.totalorder %s33, 1
      %p224 = por %p222, %p223
      %p226 = scmp.ne.s32.totalorder %s211, %s225
      %p227 = scmp.eq.s32.totalorder %s33, 0
      %p228 = por %p226, %p227
      %s230 = sadd.s32 %s229, 1
      %p233 = scmp.eq.s32.totalorder %s27, 1
      %p234 = scmp.ne.s32.totalorder %s229, %s231
      %p235 = scmp.eq.s32.totalorder %s27, 0
      %p236 = por %p234, %p235
      %p237 = scmp.ne.s32.totalorder %s229, %s231
      %p238 = scmp.eq.s32.totalorder %s32, 1
      %p239 = por %p237, %p238
      %p240 = scmp.ne.s32.totalorder %s231, %s232
      %p241 = scmp.eq.s32.totalorder %s32, 0
      %p242 = por %p240, %p241
      %p243 = scmp.ne.s32.totalorder %s231, %s232
      %p244 = scmp.eq.s32.totalorder %s33, 1
      %p245 = por %p243, %p244
      %p247 = scmp.ne.s32.totalorder %s232, %s246
      %p248 = scmp.eq.s32.totalorder %s33, 0
      %p249 = por %p247, %p248
      %s250 = ssub.s32 %s27, %s34
      %p251 = scmp.eq.s32.totalorder %s250, 0
      %s253 = sadd.s32 %s252, 1
      %s254 = scalar_select %p251, %s252, %s253
      %p257 = pneg %p251
      %p258 = scmp.eq.s32.totalorder %s27, 1
      %p259 = por %p257, %p258
      %p260 = scmp.ne.s32.totalorder %s252, %s255
      %p261 = scmp.eq.s32.totalorder %s27, 0
      %p262 = por %p260, %p261
      %p263 = scmp.ne.s32.totalorder %s252, %s255
      %p264 = scmp.eq.s32.totalorder %s32, 1
      %p265 = por %p263, %p264
      %p266 = scmp.ne.s32.totalorder %s255, %s256
      %p267 = scmp.eq.s32.totalorder %s32, 0
      %p268 = por %p266, %p267
      %p269 = scmp.ne.s32.totalorder %s255, %s256
      %p270 = scmp.eq.s32.totalorder %s33, 1
      %p271 = por %p269, %p270
      %p273 = scmp.ne.s32.totalorder %s256, %s272
      %p274 = scmp.eq.s32.totalorder %s33, 0
      %p275 = por %p273, %p274
      %p276 = scmp.le.s32.totalorder 1, %s27
      %p277 = scmp.lt.s32.totalorder %s27, 3
      %p278 = pnand %p276, %p277
      %p279 = pneg %p278
      // Predicated region
      $region9: #{tpu_custom_call.1} parent=5 // pred_check
        _
      $region10: #{tpu_custom_call.1} parent=5 // pred_check_branch
        %281 = sbr.rel (%p278) target = $region12
      $region11: #{tpu_custom_call.1} parent=5 // pred_region
        %s282 = ssub.s32 %s27, 1
        // Predicated region
        $region13: #{tpu_custom_call.1} parent=11 // pred_check
          %p283 = pneg %p74
        $region14: #{tpu_custom_call.1} parent=11 // pred_check_branch
          %285 = sbr.rel (%p283) target = $region16
        $region15: #{tpu_custom_call.1} parent=11 // pred_region
          %s287 = ssub.s32 64, 64
          %288 = vsyncadd [#allocation6], %s287
          %s290 = sshll.u32 [#allocation5], 4
          %s291 = int_to_ptr.vmem [resolvable:$true] %s290
          %293 = dma.hbm_to_vmem [thread:$0]  %s1, 64, %s291, [#allocation6]
        $region16: #{tpu_custom_call.1} parent=11 // pred_fallthru
          _
        // Predicated region
        $region17: #{tpu_custom_call.1} parent=11 // pred_check
          %p294 = pneg %p95
        $region18: #{tpu_custom_call.1} parent=11 // pred_check_branch
          %296 = sbr.rel (%p294) target = $region20
        $region19: #{tpu_custom_call.1} parent=11 // pred_region
          %s298 = ssub.s32 16, 16
          %299 = vsyncadd [#allocation6], %s298
          %s301 = sshll.u32 [#allocation7], 4
          %s302 = int_to_ptr.vmem [resolvable:$true] %s301
          %304 = dma.hbm_to_vmem [thread:$0]  %s2, 16, %s302, [#allocation6]
        $region20: #{tpu_custom_call.1} parent=11 // pred_fallthru
          _
        // Predicated region
        $region21: #{tpu_custom_call.1} parent=11 // pred_check
          %p305 = pneg %p116
        $region22: #{tpu_custom_call.1} parent=11 // pred_check_branch
          %307 = sbr.rel (%p305) target = $region24
        $region23: #{tpu_custom_call.1} parent=11 // pred_region
          %s309 = ssub.s32 2048, 2048
          %310 = vsyncadd [#allocation9], %s309
          %s311 = sshll.u32 [#allocation8], 4
          %s312 = int_to_ptr.vmem [resolvable:$true] %s311
          %317 = dma.hbm_to_vmem [thread:$0]  %s3, 2048, %s312, [#allocation9], 128, 128, 8
        $region24: #{tpu_custom_call.1} parent=11 // pred_fallthru
          _
        // Predicated region
        $region25: #{tpu_custom_call.1} parent=11 // pred_check
          %p318 = pneg %p137
        $region26: #{tpu_custom_call.1} parent=11 // pred_check_branch
          %320 = sbr.rel (%p318) target = $region28
        $region27: #{tpu_custom_call.1} parent=11 // pred_region
          %s322 = ssub.s32 32, 32
          %323 = vsyncadd [#allocation9], %s322
          %s325 = sshll.u32 [#allocation10], 4
          %s326 = int_to_ptr.vmem [resolvable:$true] %s325
          %328 = dma.hbm_to_vmem [thread:$0]  %s4, 32, %s326, [#allocation9]
        $region28: #{tpu_custom_call.1} parent=11 // pred_fallthru
          _
        // Predicated region
        $region29: #{tpu_custom_call.1} parent=11 // pred_check
          %p329 = pneg %p158
        $region30: #{tpu_custom_call.1} parent=11 // pred_check_branch
          %331 = sbr.rel (%p329) target = $region32
        $region31: #{tpu_custom_call.1} parent=11 // pred_region
          %s333 = ssub.s32 8192, 8192
          %334 = vsyncadd [#allocation12], %s333
          %s335 = sshll.u32 [#allocation11], 4
          %s336 = int_to_ptr.vmem [resolvable:$true] %s335
          %341 = dma.hbm_to_vmem [thread:$0]  %s5, 8192, %s336, [#allocation12], 256, 256, 16
        $region32: #{tpu_custom_call.1} parent=11 // pred_fallthru
          _
        // Predicated region
        $region33: #{tpu_custom_call.1} parent=11 // pred_check
          %p342 = pneg %p179
        $region34: #{tpu_custom_call.1} parent=11 // pred_check_branch
          %344 = sbr.rel (%p342) target = $region36
        $region35: #{tpu_custom_call.1} parent=11 // pred_region
          %s346 = ssub.s32 8192, 8192
          %347 = vsyncadd [#allocation12], %s346
          %s348 = sshll.u32 [#allocation13], 4
          %s349 = int_to_ptr.vmem [resolvable:$true] %s348
          %354 = dma.hbm_to_vmem [thread:$0]  %s6, 8192, %s349, [#allocation12], 256, 256, 16
        $region36: #{tpu_custom_call.1} parent=11 // pred_fallthru
          _
        // Predicated region
        $region37: #{tpu_custom_call.1} parent=11 // pred_check
          %p355 = pneg %p200
        $region38: #{tpu_custom_call.1} parent=11 // pred_check_branch
          %357 = sbr.rel (%p355) target = $region40
        $region39: #{tpu_custom_call.1} parent=11 // pred_region
          %s359 = ssub.s32 64, 64
          %360 = vsyncadd [#allocation15], %s359
          %s362 = sshll.u32 [#allocation14], 4
          %s363 = int_to_ptr.vmem [resolvable:$true] %s362
          %365 = dma.hbm_to_vmem [thread:$0]  %s7, 64, %s363, [#allocation15]
        $region40: #{tpu_custom_call.1} parent=11 // pred_fallthru
          _
        // Predicated region
        $region41: #{tpu_custom_call.1} parent=11 // pred_check
          %p366 = pneg %p221
        $region42: #{tpu_custom_call.1} parent=11 // pred_check_branch
          %368 = sbr.rel (%p366) target = $region44
        $region43: #{tpu_custom_call.1} parent=11 // pred_region
          %s370 = ssub.s32 4096, 4096
          %371 = vsyncadd [#allocation15], %s370
          %s372 = sshll.u32 [#allocation16], 4
          %s373 = int_to_ptr.vmem [resolvable:$true] %s372
          %378 = dma.hbm_to_vmem [thread:$0]  %s8, 4096, %s373, [#allocation15], 64, 64, 4
        $region44: #{tpu_custom_call.1} parent=11 // pred_fallthru
          _
        // Predicated region
        $region45: #{tpu_custom_call.1} parent=11 // pred_check
          %p379 = pneg %p242
        $region46: #{tpu_custom_call.1} parent=11 // pred_check_branch
          %381 = sbr.rel (%p379) target = $region48
        $region47: #{tpu_custom_call.1} parent=11 // pred_region
          %s383 = ssub.s32 16, 16
          %384 = vsyncadd [#allocation18], %s383
          %s386 = sshll.u32 [#allocation17], 4
          %s387 = int_to_ptr.vmem [resolvable:$true] %s386
          %389 = dma.hbm_to_vmem [thread:$0]  %s9, 16, %s387, [#allocation18]
        $region48: #{tpu_custom_call.1} parent=11 // pred_fallthru
          _
      $region12: #{tpu_custom_call.1} parent=5 // pred_fallthru
        _
      %p390 = scmp.lt.s32.totalorder %s27, 2
      // Predicated region
      $region49: #{tpu_custom_call.1} parent=5 // pred_check
        %p391 = pneg %p390
      $region50: #{tpu_custom_call.1} parent=5 // pred_check_branch
        %393 = sbr.rel (%p391) target = $region52
      $region51: #{tpu_custom_call.1} parent=5 // pred_region
        // Predicated region
        $region53: #{tpu_custom_call.1} parent=51 // pred_check
          %p394 = pneg %p47
        $region54: #{tpu_custom_call.1} parent=51 // pred_check_branch
          %396 = sbr.rel (%p394) target = $region56
        $region55: #{tpu_custom_call.1} parent=51 // pred_region
          %s397 = sand.u32 %s37, 1
          %s398 = scalar_lea.sflag [#allocation3], %s397
          %s399 = sand.u32 %s37, 1
          %s400 = smul.addr %s399, 512
          %s401 = scalar_lea.vmem [#allocation2], %s400
          %s402 = smul.u32 64, %s27
          %s404 = ssub.s32 8192, 8192
          %405 = vsyncadd %s398, %s404
          %s406 = smul.addr %s402, 128
          %s407 = scalar_lea.hbm %s0, %s406
          %s408 = sshll.u32 %s401, 4
          %s409 = int_to_ptr.vmem [resolvable:$true] %s408
          %414 = dma.hbm_to_vmem [thread:$0]  %s407, 8192, %s409, %s398, 128, 128, 8
        $region56: #{tpu_custom_call.1} parent=51 // pred_fallthru
          _
      $region52: #{tpu_custom_call.1} parent=5 // pred_fallthru
        _
      %p415 = scmp.le.s32.totalorder 1, %s27
      %p416 = scmp.lt.s32.totalorder %s27, 3
      %p417 = pnand %p415, %p416
      %p418 = pneg %p417
      // Predicated region
      $region57: #{tpu_custom_call.1} parent=5 // pred_check
        _
      $region58: #{tpu_custom_call.1} parent=5 // pred_check_branch
        %420 = sbr.rel (%p417) target = $region60
      $region59: #{tpu_custom_call.1} parent=5 // pred_region
        %s421 = ssub.s32 %s27, 1
        %s422 = sand.u32 %s40, 1
        %s423 = scalar_lea.sflag [#allocation3], %s422
        %s424 = sand.u32 %s40, 1
        %s425 = smul.addr %s424, 512
        %s426 = scalar_lea.vmem [#allocation2], %s425
        // Predicated region
        $region61: #{tpu_custom_call.1} parent=59 // pred_check
          %p427 = pneg %p53
        $region62: #{tpu_custom_call.1} parent=59 // pred_check_branch
          %429 = sbr.rel (%p427) target = $region64
        $region63: #{tpu_custom_call.1} parent=59 // pred_region
          %430 = dma.done %s423, 8192
        $region64: #{tpu_custom_call.1} parent=59 // pred_fallthru
          _
        // Predicated region
        $region65: #{tpu_custom_call.1} parent=59 // pred_check
          %p431 = pneg %p74
        $region66: #{tpu_custom_call.1} parent=59 // pred_check_branch
          %433 = sbr.rel (%p431) target = $region68
        $region67: #{tpu_custom_call.1} parent=59 // pred_region
          %434 = dma.done [#allocation6], 64
        $region68: #{tpu_custom_call.1} parent=59 // pred_fallthru
          _
        // Predicated region
        $region69: #{tpu_custom_call.1} parent=59 // pred_check
          %p435 = pneg %p95
        $region70: #{tpu_custom_call.1} parent=59 // pred_check_branch
          %437 = sbr.rel (%p435) target = $region72
        $region71: #{tpu_custom_call.1} parent=59 // pred_region
          %438 = dma.done [#allocation6], 16
        $region72: #{tpu_custom_call.1} parent=59 // pred_fallthru
          _
        // Predicated region
        $region73: #{tpu_custom_call.1} parent=59 // pred_check
          %p439 = pneg %p116
        $region74: #{tpu_custom_call.1} parent=59 // pred_check_branch
          %441 = sbr.rel (%p439) target = $region76
        $region75: #{tpu_custom_call.1} parent=59 // pred_region
          %442 = dma.done [#allocation9], 2048
        $region76: #{tpu_custom_call.1} parent=59 // pred_fallthru
          _
        // Predicated region
        $region77: #{tpu_custom_call.1} parent=59 // pred_check
          %p443 = pneg %p137
        $region78: #{tpu_custom_call.1} parent=59 // pred_check_branch
          %445 = sbr.rel (%p443) target = $region80
        $region79: #{tpu_custom_call.1} parent=59 // pred_region
          %446 = dma.done [#allocation9], 32
        $region80: #{tpu_custom_call.1} parent=59 // pred_fallthru
          _
        // Predicated region
        $region81: #{tpu_custom_call.1} parent=59 // pred_check
          %p447 = pneg %p158
        $region82: #{tpu_custom_call.1} parent=59 // pred_check_branch
          %449 = sbr.rel (%p447) target = $region84
        $region83: #{tpu_custom_call.1} parent=59 // pred_region
          %450 = dma.done [#allocation12], 8192
        $region84: #{tpu_custom_call.1} parent=59 // pred_fallthru
          _
        // Predicated region
        $region85: #{tpu_custom_call.1} parent=59 // pred_check
          %p451 = pneg %p179
        $region86: #{tpu_custom_call.1} parent=59 // pred_check_branch
          %453 = sbr.rel (%p451) target = $region88
        $region87: #{tpu_custom_call.1} parent=59 // pred_region
          %454 = dma.done [#allocation12], 8192
        $region88: #{tpu_custom_call.1} parent=59 // pred_fallthru
          _
        // Predicated region
        $region89: #{tpu_custom_call.1} parent=59 // pred_check
          %p455 = pneg %p200
        $region90: #{tpu_custom_call.1} parent=59 // pred_check_branch
          %457 = sbr.rel (%p455) target = $region92
        $region91: #{tpu_custom_call.1} parent=59 // pred_region
          %458 = dma.done [#allocation15], 64
        $region92: #{tpu_custom_call.1} parent=59 // pred_fallthru
          _
        // Predicated region
        $region93: #{tpu_custom_call.1} parent=59 // pred_check
          %p459 = pneg %p221
        $region94: #{tpu_custom_call.1} parent=59 // pred_check_branch
          %461 = sbr.rel (%p459) target = $region96
        $region95: #{tpu_custom_call.1} parent=59 // pred_region
          %462 = dma.done [#allocation15], 4096
        $region96: #{tpu_custom_call.1} parent=59 // pred_fallthru
          _
        // Predicated region
        $region97: #{tpu_custom_call.1} parent=59 // pred_check
          %p463 = pneg %p242
        $region98: #{tpu_custom_call.1} parent=59 // pred_check_branch
          %465 = sbr.rel (%p463) target = $region100
        $region99: #{tpu_custom_call.1} parent=59 // pred_region
          %466 = dma.done [#allocation18], 16
        $region100: #{tpu_custom_call.1} parent=59 // pred_fallthru
          _
        %s467 = sand.u32 %s40, 1
        %s468 = scalar_lea.sflag [#allocation3], %s467
        %s469 = sand.u32 %s40, 1
        %s470 = smul.addr %s469, 512
        %s471 = scalar_lea.vmem [#allocation2], %s470
        %p472 = pneg %p53
        %p473 = pneg %p50
        %p474 = pneg %p74
        %p475 = pneg %p71
        %p476 = pneg %p95
        %p477 = pneg %p92
        %p478 = pneg %p116
        %p479 = pneg %p113
        %p480 = pneg %p137
        %p481 = pneg %p134
        %p482 = pneg %p158
        %p483 = pneg %p155
        %p484 = pneg %p179
        %p485 = pneg %p176
        %p486 = pneg %p200
        %p487 = pneg %p197
        %p488 = pneg %p221
        %p489 = pneg %p218
        %p490 = pneg %p242
        %p491 = pneg %p239
        %p492 = pneg %p268
        %p493 = pneg %p265
        %s494 = sand.u32 %s255, 1
        %s495 = scalar_lea.sflag [#allocation4], %s494
        %s496 = sand.u32 %s255, 1
        %s497 = smul.addr %s496, 16
        %s498 = scalar_lea.vmem [#allocation19], %s497
        %s499 = smul.u32 64, %s32
        %s500 = smul.u32 2, %s32
        %v502 = vld [vmem:[%s426] sm:$0xff]
        %v503 = vld [vmem:[%s426 + $0x8] sm:$0xff]
        %v504 = vld [vmem:[%s426 + $0x10] sm:$0xff]
        %v505 = vld [vmem:[%s426 + $0x18] sm:$0xff]
        %v506 = vld [vmem:[%s426 + $0x20] sm:$0xff]
        %v507 = vld [vmem:[%s426 + $0x28] sm:$0xff]
        %v508 = vld [vmem:[%s426 + $0x30] sm:$0xff]
        %v509 = vld [vmem:[%s426 + $0x38] sm:$0xff]
        %v510 = vld [vmem:[%s426 + $0x40] sm:$0xff]
        %v511 = vld [vmem:[%s426 + $0x48] sm:$0xff]
        %v512 = vld [vmem:[%s426 + $0x50] sm:$0xff]
        %v513 = vld [vmem:[%s426 + $0x58] sm:$0xff]
        %v514 = vld [vmem:[%s426 + $0x60] sm:$0xff]
        %v515 = vld [vmem:[%s426 + $0x68] sm:$0xff]
        %v516 = vld [vmem:[%s426 + $0x70] sm:$0xff]
        %v517 = vld [vmem:[%s426 + $0x78] sm:$0xff]
        %v518 = vld [vmem:[%s426 + $0x80] sm:$0xff]
        %v519 = vld [vmem:[%s426 + $0x88] sm:$0xff]
        %v520 = vld [vmem:[%s426 + $0x90] sm:$0xff]
        %v521 = vld [vmem:[%s426 + $0x98] sm:$0xff]
        %v522 = vld [vmem:[%s426 + $0xa0] sm:$0xff]
        %v523 = vld [vmem:[%s426 + $0xa8] sm:$0xff]
        %v524 = vld [vmem:[%s426 + $0xb0] sm:$0xff]
        %v525 = vld [vmem:[%s426 + $0xb8] sm:$0xff]
        %v526 = vld [vmem:[%s426 + $0xc0] sm:$0xff]
        %v527 = vld [vmem:[%s426 + $0xc8] sm:$0xff]
        %v528 = vld [vmem:[%s426 + $0xd0] sm:$0xff]
        %v529 = vld [vmem:[%s426 + $0xd8] sm:$0xff]
        %v530 = vld [vmem:[%s426 + $0xe0] sm:$0xff]
        %v531 = vld [vmem:[%s426 + $0xe8] sm:$0xff]
        %v532 = vld [vmem:[%s426 + $0xf0] sm:$0xff]
        %v533 = vld [vmem:[%s426 + $0xf8] sm:$0xff]
        %v534 = vld [vmem:[%s426 + $0x100] sm:$0xff]
        %v535 = vld [vmem:[%s426 + $0x108] sm:$0xff]
        %v536 = vld [vmem:[%s426 + $0x110] sm:$0xff]
        %v537 = vld [vmem:[%s426 + $0x118] sm:$0xff]
        %v538 = vld [vmem:[%s426 + $0x120] sm:$0xff]
        %v539 = vld [vmem:[%s426 + $0x128] sm:$0xff]
        %v540 = vld [vmem:[%s426 + $0x130] sm:$0xff]
        %v541 = vld [vmem:[%s426 + $0x138] sm:$0xff]
        %v542 = vld [vmem:[%s426 + $0x140] sm:$0xff]
        %v543 = vld [vmem:[%s426 + $0x148] sm:$0xff]
        %v544 = vld [vmem:[%s426 + $0x150] sm:$0xff]
        %v545 = vld [vmem:[%s426 + $0x158] sm:$0xff]
        %v546 = vld [vmem:[%s426 + $0x160] sm:$0xff]
        %v547 = vld [vmem:[%s426 + $0x168] sm:$0xff]
        %v548 = vld [vmem:[%s426 + $0x170] sm:$0xff]
        %v549 = vld [vmem:[%s426 + $0x178] sm:$0xff]
        %v550 = vld [vmem:[%s426 + $0x180] sm:$0xff]
        %v551 = vld [vmem:[%s426 + $0x188] sm:$0xff]
        %v552 = vld [vmem:[%s426 + $0x190] sm:$0xff]
        %v553 = vld [vmem:[%s426 + $0x198] sm:$0xff]
        %v554 = vld [vmem:[%s426 + $0x1a0] sm:$0xff]
        %v555 = vld [vmem:[%s426 + $0x1a8] sm:$0xff]
        %v556 = vld [vmem:[%s426 + $0x1b0] sm:$0xff]
        %v557 = vld [vmem:[%s426 + $0x1b8] sm:$0xff]
        %v558 = vld [vmem:[%s426 + $0x1c0] sm:$0xff]
        %v559 = vld [vmem:[%s426 + $0x1c8] sm:$0xff]
        %v560 = vld [vmem:[%s426 + $0x1d0] sm:$0xff]
        %v561 = vld [vmem:[%s426 + $0x1d8] sm:$0xff]
        %v562 = vld [vmem:[%s426 + $0x1e0] sm:$0xff]
        %v563 = vld [vmem:[%s426 + $0x1e8] sm:$0xff]
        %v564 = vld [vmem:[%s426 + $0x1f0] sm:$0xff]
        %v565 = vld [vmem:[%s426 + $0x1f8] sm:$0xff]
        %v566 = vld [vmem:[#allocation5] sm:$0x1]
        %568 = vset.pattern.permute.xlu0 0
        %569 = vperm.xlu0 %568, %v502
        %v570 = vpop.permute.xlu0 %569
        %573 = vset.pattern.permute.xlu0 0
        %574 = vperm.xlu0 %573, %v503
        %v575 = vpop.permute.xlu0 %574
        %578 = vset.pattern.permute.xlu0 0
        %579 = vperm.xlu0 %578, %v504
        %v580 = vpop.permute.xlu0 %579
        %583 = vset.pattern.permute.xlu0 0
        %584 = vperm.xlu0 %583, %v505
        %v585 = vpop.permute.xlu0 %584
        %588 = vset.pattern.permute.xlu0 0
        %589 = vperm.xlu0 %588, %v506
        %v590 = vpop.permute.xlu0 %589
        %593 = vset.pattern.permute.xlu0 0
        %594 = vperm.xlu0 %593, %v507
        %v595 = vpop.permute.xlu0 %594
        %598 = vset.pattern.permute.xlu0 0
        %599 = vperm.xlu0 %598, %v508
        %v600 = vpop.permute.xlu0 %599
        %603 = vset.pattern.permute.xlu0 0
        %604 = vperm.xlu0 %603, %v509
        %v605 = vpop.permute.xlu0 %604
        %608 = vset.pattern.permute.xlu0 0
        %609 = vperm.xlu0 %608, %v510
        %v610 = vpop.permute.xlu0 %609
        %613 = vset.pattern.permute.xlu0 0
        %614 = vperm.xlu0 %613, %v511
        %v615 = vpop.permute.xlu0 %614
        %618 = vset.pattern.permute.xlu0 0
        %619 = vperm.xlu0 %618, %v512
        %v620 = vpop.permute.xlu0 %619
        %623 = vset.pattern.permute.xlu0 0
        %624 = vperm.xlu0 %623, %v513
        %v625 = vpop.permute.xlu0 %624
        %628 = vset.pattern.permute.xlu0 0
        %629 = vperm.xlu0 %628, %v514
        %v630 = vpop.permute.xlu0 %629
        %633 = vset.pattern.permute.xlu0 0
        %634 = vperm.xlu0 %633, %v515
        %v635 = vpop.permute.xlu0 %634
        %638 = vset.pattern.permute.xlu0 0
        %639 = vperm.xlu0 %638, %v516
        %v640 = vpop.permute.xlu0 %639
        %643 = vset.pattern.permute.xlu0 0
        %644 = vperm.xlu0 %643, %v517
        %v645 = vpop.permute.xlu0 %644
        %648 = vset.pattern.permute.xlu0 0
        %649 = vperm.xlu0 %648, %v518
        %v650 = vpop.permute.xlu0 %649
        %653 = vset.pattern.permute.xlu0 0
        %654 = vperm.xlu0 %653, %v519
        %v655 = vpop.permute.xlu0 %654
        %658 = vset.pattern.permute.xlu0 0
        %659 = vperm.xlu0 %658, %v520
        %v660 = vpop.permute.xlu0 %659
        %663 = vset.pattern.permute.xlu0 0
        %664 = vperm.xlu0 %663, %v521
        %v665 = vpop.permute.xlu0 %664
        %668 = vset.pattern.permute.xlu0 0
        %669 = vperm.xlu0 %668, %v522
        %v670 = vpop.permute.xlu0 %669
        %673 = vset.pattern.permute.xlu0 0
        %674 = vperm.xlu0 %673, %v523
        %v675 = vpop.permute.xlu0 %674
        %678 = vset.pattern.permute.xlu0 0
        %679 = vperm.xlu0 %678, %v524
        %v680 = vpop.permute.xlu0 %679
        %683 = vset.pattern.permute.xlu0 0
        %684 = vperm.xlu0 %683, %v525
        %v685 = vpop.permute.xlu0 %684
        %688 = vset.pattern.permute.xlu0 0
        %689 = vperm.xlu0 %688, %v526
        %v690 = vpop.permute.xlu0 %689
        %693 = vset.pattern.permute.xlu0 0
        %694 = vperm.xlu0 %693, %v527
        %v695 = vpop.permute.xlu0 %694
        %698 = vset.pattern.permute.xlu0 0
        %699 = vperm.xlu0 %698, %v528
        %v700 = vpop.permute.xlu0 %699
        %703 = vset.pattern.permute.xlu0 0
        %704 = vperm.xlu0 %703, %v529
        %v705 = vpop.permute.xlu0 %704
        %708 = vset.pattern.permute.xlu0 0
        %709 = vperm.xlu0 %708, %v530
        %v710 = vpop.permute.xlu0 %709
        %713 = vset.pattern.permute.xlu0 0
        %714 = vperm.xlu0 %713, %v531
        %v715 = vpop.permute.xlu0 %714
        %718 = vset.pattern.permute.xlu0 0
        %719 = vperm.xlu0 %718, %v532
        %v720 = vpop.permute.xlu0 %719
        %723 = vset.pattern.permute.xlu0 0
        %724 = vperm.xlu0 %723, %v533
        %v725 = vpop.permute.xlu0 %724
        %728 = vset.pattern.permute.xlu0 0
        %729 = vperm.xlu0 %728, %v534
        %v730 = vpop.permute.xlu0 %729
        %733 = vset.pattern.permute.xlu0 0
        %734 = vperm.xlu0 %733, %v535
        %v735 = vpop.permute.xlu0 %734
        %738 = vset.pattern.permute.xlu0 0
        %739 = vperm.xlu0 %738, %v536
        %v740 = vpop.permute.xlu0 %739
        %743 = vset.pattern.permute.xlu0 0
        %744 = vperm.xlu0 %743, %v537
        %v745 = vpop.permute.xlu0 %744
        %748 = vset.pattern.permute.xlu0 0
        %749 = vperm.xlu0 %748, %v538
        %v750 = vpop.permute.xlu0 %749
        %753 = vset.pattern.permute.xlu0 0
        %754 = vperm.xlu0 %753, %v539
        %v755 = vpop.permute.xlu0 %754
        %758 = vset.pattern.permute.xlu0 0
        %759 = vperm.xlu0 %758, %v540
        %v760 = vpop.permute.xlu0 %759
        %763 = vset.pattern.permute.xlu0 0
        %764 = vperm.xlu0 %763, %v541
        %v765 = vpop.permute.xlu0 %764
        %768 = vset.pattern.permute.xlu0 0
        %769 = vperm.xlu0 %768, %v542
        %v770 = vpop.permute.xlu0 %769
        %773 = vset.pattern.permute.xlu0 0
        %774 = vperm.xlu0 %773, %v543
        %v775 = vpop.permute.xlu0 %774
        %778 = vset.pattern.permute.xlu0 0
        %779 = vperm.xlu0 %778, %v544
        %v780 = vpop.permute.xlu0 %779
        %783 = vset.pattern.permute.xlu0 0
        %784 = vperm.xlu0 %783, %v545
        %v785 = vpop.permute.xlu0 %784
        %788 = vset.pattern.permute.xlu0 0
        %789 = vperm.xlu0 %788, %v546
        %v790 = vpop.permute.xlu0 %789
        %793 = vset.pattern.permute.xlu0 0
        %794 = vperm.xlu0 %793, %v547
        %v795 = vpop.permute.xlu0 %794
        %798 = vset.pattern.permute.xlu0 0
        %799 = vperm.xlu0 %798, %v548
        %v800 = vpop.permute.xlu0 %799
        %803 = vset.pattern.permute.xlu0 0
        %804 = vperm.xlu0 %803, %v549
        %v805 = vpop.permute.xlu0 %804
        %808 = vset.pattern.permute.xlu0 0
        %809 = vperm.xlu0 %808, %v550
        %v810 = vpop.permute.xlu0 %809
        %813 = vset.pattern.permute.xlu0 0
        %814 = vperm.xlu0 %813, %v551
        %v815 = vpop.permute.xlu0 %814
        %818 = vset.pattern.permute.xlu0 0
        %819 = vperm.xlu0 %818, %v552
        %v820 = vpop.permute.xlu0 %819
        %823 = vset.pattern.permute.xlu0 0
        %824 = vperm.xlu0 %823, %v553
        %v825 = vpop.permute.xlu0 %824
        %828 = vset.pattern.permute.xlu0 0
        %829 = vperm.xlu0 %828, %v554
        %v830 = vpop.permute.xlu0 %829
        %833 = vset.pattern.permute.xlu0 0
        %834 = vperm.xlu0 %833, %v555
        %v835 = vpop.permute.xlu0 %834
        %838 = vset.pattern.permute.xlu0 0
        %839 = vperm.xlu0 %838, %v556
        %v840 = vpop.permute.xlu0 %839
        %843 = vset.pattern.permute.xlu0 0
        %844 = vperm.xlu0 %843, %v557
        %v845 = vpop.permute.xlu0 %844
        %848 = vset.pattern.permute.xlu0 0
        %849 = vperm.xlu0 %848, %v558
        %v850 = vpop.permute.xlu0 %849
        %853 = vset.pattern.permute.xlu0 0
        %854 = vperm.xlu0 %853, %v559
        %v855 = vpop.permute.xlu0 %854
        %858 = vset.pattern.permute.xlu0 0
        %859 = vperm.xlu0 %858, %v560
        %v860 = vpop.permute.xlu0 %859
        %863 = vset.pattern.permute.xlu0 0
        %864 = vperm.xlu0 %863, %v561
        %v865 = vpop.permute.xlu0 %864
        %868 = vset.pattern.permute.xlu0 0
        %869 = vperm.xlu0 %868, %v562
        %v870 = vpop.permute.xlu0 %869
        %873 = vset.pattern.permute.xlu0 0
        %874 = vperm.xlu0 %873, %v563
        %v875 = vpop.permute.xlu0 %874
        %878 = vset.pattern.permute.xlu0 0
        %879 = vperm.xlu0 %878, %v564
        %v880 = vpop.permute.xlu0 %879
        %883 = vset.pattern.permute.xlu0 0
        %884 = vperm.xlu0 %883, %v565
        %v885 = vpop.permute.xlu0 %884
        %v887 = vlaneseq
        %v888 = vshrl.u32 %v887, 7
        %v889 = vsub.s32 0, %v888
        %v890 = vrot.slane %v566, %v889
        %v891 = vmul.f32 %v570, %v890
        %v892 = vmul.f32 %v575, %v890
        %v893 = vmul.f32 %v580, %v890
        %v894 = vmul.f32 %v585, %v890
        %v895 = vmul.f32 %v590, %v890
        %v896 = vmul.f32 %v595, %v890
        %v897 = vmul.f32 %v600, %v890
        %v898 = vmul.f32 %v605, %v890
        %v899 = vmul.f32 %v610, %v890
        %v900 = vmul.f32 %v615, %v890
        %v901 = vmul.f32 %v620, %v890
        %v902 = vmul.f32 %v625, %v890
        %v903 = vmul.f32 %v630, %v890
        %v904 = vmul.f32 %v635, %v890
        %v905 = vmul.f32 %v640, %v890
        %v906 = vmul.f32 %v645, %v890
        %v907 = vmul.f32 %v650, %v890
        %v908 = vmul.f32 %v655, %v890
        %v909 = vmul.f32 %v660, %v890
        %v910 = vmul.f32 %v665, %v890
        %v911 = vmul.f32 %v670, %v890
        %v912 = vmul.f32 %v675, %v890
        %v913 = vmul.f32 %v680, %v890
        %v914 = vmul.f32 %v685, %v890
        %v915 = vmul.f32 %v690, %v890
        %v916 = vmul.f32 %v695, %v890
        %v917 = vmul.f32 %v700, %v890
        %v918 = vmul.f32 %v705, %v890
        %v919 = vmul.f32 %v710, %v890
        %v920 = vmul.f32 %v715, %v890
        %v921 = vmul.f32 %v720, %v890
        %v922 = vmul.f32 %v725, %v890
        %v923 = vmul.f32 %v730, %v890
        %v924 = vmul.f32 %v735, %v890
        %v925 = vmul.f32 %v740, %v890
        %v926 = vmul.f32 %v745, %v890
        %v927 = vmul.f32 %v750, %v890
        %v928 = vmul.f32 %v755, %v890
        %v929 = vmul.f32 %v760, %v890
        %v930 = vmul.f32 %v765, %v890
        %v931 = vmul.f32 %v770, %v890
        %v932 = vmul.f32 %v775, %v890
        %v933 = vmul.f32 %v780, %v890
        %v934 = vmul.f32 %v785, %v890
        %v935 = vmul.f32 %v790, %v890
        %v936 = vmul.f32 %v795, %v890
        %v937 = vmul.f32 %v800, %v890
        %v938 = vmul.f32 %v805, %v890
        %v939 = vmul.f32 %v810, %v890
        %v940 = vmul.f32 %v815, %v890
        %v941 = vmul.f32 %v820, %v890
        %v942 = vmul.f32 %v825, %v890
        %v943 = vmul.f32 %v830, %v890
        %v944 = vmul.f32 %v835, %v890
        %v945 = vmul.f32 %v840, %v890
        %v946 = vmul.f32 %v845, %v890
        %v947 = vmul.f32 %v850, %v890
        %v948 = vmul.f32 %v855, %v890
        %v949 = vmul.f32 %v860, %v890
        %v950 = vmul.f32 %v865, %v890
        %v951 = vmul.f32 %v870, %v890
        %v952 = vmul.f32 %v875, %v890
        %v953 = vmul.f32 %v880, %v890
        %v954 = vmul.f32 %v885, %v890
        %v955 = vld [vmem:[#allocation5 + $0x1] sm:$0x1]
        %956 = vset.pattern.permute.xlu0 1
        %957 = vperm.xlu0 %956, %v502
        %v958 = vpop.permute.xlu0 %957
        %960 = vset.pattern.permute.xlu0 1
        %961 = vperm.xlu0 %960, %v503
        %v962 = vpop.permute.xlu0 %961
        %964 = vset.pattern.permute.xlu0 1
        %965 = vperm.xlu0 %964, %v504
        %v966 = vpop.permute.xlu0 %965
        %968 = vset.pattern.permute.xlu0 1
        %969 = vperm.xlu0 %968, %v505
        %v970 = vpop.permute.xlu0 %969
        %972 = vset.pattern.permute.xlu0 1
        %973 = vperm.xlu0 %972, %v506
        %v974 = vpop.permute.xlu0 %973
        %976 = vset.pattern.permute.xlu0 1
        %977 = vperm.xlu0 %976, %v507
        %v978 = vpop.permute.xlu0 %977
        %980 = vset.pattern.permute.xlu0 1
        %981 = vperm.xlu0 %980, %v508
        %v982 = vpop.permute.xlu0 %981
        %984 = vset.pattern.permute.xlu0 1
        %985 = vperm.xlu0 %984, %v509
        %v986 = vpop.permute.xlu0 %985
        %988 = vset.pattern.permute.xlu0 1
        %989 = vperm.xlu0 %988, %v510
        %v990 = vpop.permute.xlu0 %989
        %992 = vset.pattern.permute.xlu0 1
        %993 = vperm.xlu0 %992, %v511
        %v994 = vpop.permute.xlu0 %993
        %996 = vset.pattern.permute.xlu0 1
        %997 = vperm.xlu0 %996, %v512
        %v998 = vpop.permute.xlu0 %997
        %1000 = vset.pattern.permute.xlu0 1
        %1001 = vperm.xlu0 %1000, %v513
        %v1002 = vpop.permute.xlu0 %1001
        %1004 = vset.pattern.permute.xlu0 1
        %1005 = vperm.xlu0 %1004, %v514
        %v1006 = vpop.permute.xlu0 %1005
        %1008 = vset.pattern.permute.xlu0 1
        %1009 = vperm.xlu0 %1008, %v515
        %v1010 = vpop.permute.xlu0 %1009
        %1012 = vset.pattern.permute.xlu0 1
        %1013 = vperm.xlu0 %1012, %v516
        %v1014 = vpop.permute.xlu0 %1013
        %1016 = vset.pattern.permute.xlu0 1
        %1017 = vperm.xlu0 %1016, %v517
        %v1018 = vpop.permute.xlu0 %1017
        %1020 = vset.pattern.permute.xlu0 1
        %1021 = vperm.xlu0 %1020, %v518
        %v1022 = vpop.permute.xlu0 %1021
        %1024 = vset.pattern.permute.xlu0 1
        %1025 = vperm.xlu0 %1024, %v519
        %v1026 = vpop.permute.xlu0 %1025
        %1028 = vset.pattern.permute.xlu0 1
        %1029 = vperm.xlu0 %1028, %v520
        %v1030 = vpop.permute.xlu0 %1029
        %1032 = vset.pattern.permute.xlu0 1
        %1033 = vperm.xlu0 %1032, %v521
        %v1034 = vpop.permute.xlu0 %1033
        %1036 = vset.pattern.permute.xlu0 1
        %1037 = vperm.xlu0 %1036, %v522
        %v1038 = vpop.permute.xlu0 %1037
        %1040 = vset.pattern.permute.xlu0 1
        %1041 = vperm.xlu0 %1040, %v523
        %v1042 = vpop.permute.xlu0 %1041
        %1044 = vset.pattern.permute.xlu0 1
        %1045 = vperm.xlu0 %1044, %v524
        %v1046 = vpop.permute.xlu0 %1045
        %1048 = vset.pattern.permute.xlu0 1
        %1049 = vperm.xlu0 %1048, %v525
        %v1050 = vpop.permute.xlu0 %1049
        %1052 = vset.pattern.permute.xlu0 1
        %1053 = vperm.xlu0 %1052, %v526
        %v1054 = vpop.permute.xlu0 %1053
        %1056 = vset.pattern.permute.xlu0 1
        %1057 = vperm.xlu0 %1056, %v527
        %v1058 = vpop.permute.xlu0 %1057
        %1060 = vset.pattern.permute.xlu0 1
        %1061 = vperm.xlu0 %1060, %v528
        %v1062 = vpop.permute.xlu0 %1061
        %1064 = vset.pattern.permute.xlu0 1
        %1065 = vperm.xlu0 %1064, %v529
        %v1066 = vpop.permute.xlu0 %1065
        %1068 = vset.pattern.permute.xlu0 1
        %1069 = vperm.xlu0 %1068, %v530
        %v1070 = vpop.permute.xlu0 %1069
        %1072 = vset.pattern.permute.xlu0 1
        %1073 = vperm.xlu0 %1072, %v531
        %v1074 = vpop.permute.xlu0 %1073
        %1076 = vset.pattern.permute.xlu0 1
        %1077 = vperm.xlu0 %1076, %v532
        %v1078 = vpop.permute.xlu0 %1077
        %1080 = vset.pattern.permute.xlu0 1
        %1081 = vperm.xlu0 %1080, %v533
        %v1082 = vpop.permute.xlu0 %1081
        %1084 = vset.pattern.permute.xlu0 1
        %1085 = vperm.xlu0 %1084, %v534
        %v1086 = vpop.permute.xlu0 %1085
        %1088 = vset.pattern.permute.xlu0 1
        %1089 = vperm.xlu0 %1088, %v535
        %v1090 = vpop.permute.xlu0 %1089
        %1092 = vset.pattern.permute.xlu0 1
        %1093 = vperm.xlu0 %1092, %v536
        %v1094 = vpop.permute.xlu0 %1093
        %1096 = vset.pattern.permute.xlu0 1
        %1097 = vperm.xlu0 %1096, %v537
        %v1098 = vpop.permute.xlu0 %1097
        %1100 = vset.pattern.permute.xlu0 1
        %1101 = vperm.xlu0 %1100, %v538
        %v1102 = vpop.permute.xlu0 %1101
        %1104 = vset.pattern.permute.xlu0 1
        %1105 = vperm.xlu0 %1104, %v539
        %v1106 = vpop.permute.xlu0 %1105
        %1108 = vset.pattern.permute.xlu0 1
        %1109 = vperm.xlu0 %1108, %v540
        %v1110 = vpop.permute.xlu0 %1109
        %1112 = vset.pattern.permute.xlu0 1
        %1113 = vperm.xlu0 %1112, %v541
        %v1114 = vpop.permute.xlu0 %1113
        %1116 = vset.pattern.permute.xlu0 1
        %1117 = vperm.xlu0 %1116, %v542
        %v1118 = vpop.permute.xlu0 %1117
        %1120 = vset.pattern.permute.xlu0 1
        %1121 = vperm.xlu0 %1120, %v543
        %v1122 = vpop.permute.xlu0 %1121
        %1124 = vset.pattern.permute.xlu0 1
        %1125 = vperm.xlu0 %1124, %v544
        %v1126 = vpop.permute.xlu0 %1125
        %1128 = vset.pattern.permute.xlu0 1
        %1129 = vperm.xlu0 %1128, %v545
        %v1130 = vpop.permute.xlu0 %1129
        %1132 = vset.pattern.permute.xlu0 1
        %1133 = vperm.xlu0 %1132, %v546
        %v1134 = vpop.permute.xlu0 %1133
        %1136 = vset.pattern.permute.xlu0 1
        %1137 = vperm.xlu0 %1136, %v547
        %v1138 = vpop.permute.xlu0 %1137
        %1140 = vset.pattern.permute.xlu0 1
        %1141 = vperm.xlu0 %1140, %v548
        %v1142 = vpop.permute.xlu0 %1141
        %1144 = vset.pattern.permute.xlu0 1
        %1145 = vperm.xlu0 %1144, %v549
        %v1146 = vpop.permute.xlu0 %1145
        %1148 = vset.pattern.permute.xlu0 1
        %1149 = vperm.xlu0 %1148, %v550
        %v1150 = vpop.permute.xlu0 %1149
        %1152 = vset.pattern.permute.xlu0 1
        %1153 = vperm.xlu0 %1152, %v551
        %v1154 = vpop.permute.xlu0 %1153
        %1156 = vset.pattern.permute.xlu0 1
        %1157 = vperm.xlu0 %1156, %v552
        %v1158 = vpop.permute.xlu0 %1157
        %1160 = vset.pattern.permute.xlu0 1
        %1161 = vperm.xlu0 %1160, %v553
        %v1162 = vpop.permute.xlu0 %1161
        %1164 = vset.pattern.permute.xlu0 1
        %1165 = vperm.xlu0 %1164, %v554
        %v1166 = vpop.permute.xlu0 %1165
        %1168 = vset.pattern.permute.xlu0 1
        %1169 = vperm.xlu0 %1168, %v555
        %v1170 = vpop.permute.xlu0 %1169
        %1172 = vset.pattern.permute.xlu0 1
        %1173 = vperm.xlu0 %1172, %v556
        %v1174 = vpop.permute.xlu0 %1173
        %1176 = vset.pattern.permute.xlu0 1
        %1177 = vperm.xlu0 %1176, %v557
        %v1178 = vpop.permute.xlu0 %1177
        %1180 = vset.pattern.permute.xlu0 1
        %1181 = vperm.xlu0 %1180, %v558
        %v1182 = vpop.permute.xlu0 %1181
        %1184 = vset.pattern.permute.xlu0 1
        %1185 = vperm.xlu0 %1184, %v559
        %v1186 = vpop.permute.xlu0 %1185
        %1188 = vset.pattern.permute.xlu0 1
        %1189 = vperm.xlu0 %1188, %v560
        %v1190 = vpop.permute.xlu0 %1189
        %1192 = vset.pattern.permute.xlu0 1
        %1193 = vperm.xlu0 %1192, %v561
        %v1194 = vpop.permute.xlu0 %1193
        %1196 = vset.pattern.permute.xlu0 1
        %1197 = vperm.xlu0 %1196, %v562
        %v1198 = vpop.permute.xlu0 %1197
        %1200 = vset.pattern.permute.xlu0 1
        %1201 = vperm.xlu0 %1200, %v563
        %v1202 = vpop.permute.xlu0 %1201
        %1204 = vset.pattern.permute.xlu0 1
        %1205 = vperm.xlu0 %1204, %v564
        %v1206 = vpop.permute.xlu0 %1205
        %1208 = vset.pattern.permute.xlu0 1
        %1209 = vperm.xlu0 %1208, %v565
        %v1210 = vpop.permute.xlu0 %1209
        %v1212 = vlaneseq
        %v1213 = vshrl.u32 %v1212, 7
        %v1214 = vsub.s32 0, %v1213
        %v1215 = vrot.slane %v955, %v1214
        %v1216 = vmul.f32 %v958, %v1215
        %v1217 = vmul.f32 %v962, %v1215
        %v1218 = vmul.f32 %v966, %v1215
        %v1219 = vmul.f32 %v970, %v1215
        %v1220 = vmul.f32 %v974, %v1215
        %v1221 = vmul.f32 %v978, %v1215
        %v1222 = vmul.f32 %v982, %v1215
        %v1223 = vmul.f32 %v986, %v1215
        %v1224 = vmul.f32 %v990, %v1215
        %v1225 = vmul.f32 %v994, %v1215
        %v1226 = vmul.f32 %v998, %v1215
        %v1227 = vmul.f32 %v1002, %v1215
        %v1228 = vmul.f32 %v1006, %v1215
        %v1229 = vmul.f32 %v1010, %v1215
        %v1230 = vmul.f32 %v1014, %v1215
        %v1231 = vmul.f32 %v1018, %v1215
        %v1232 = vmul.f32 %v1022, %v1215
        %v1233 = vmul.f32 %v1026, %v1215
        %v1234 = vmul.f32 %v1030, %v1215
        %v1235 = vmul.f32 %v1034, %v1215
        %v1236 = vmul.f32 %v1038, %v1215
        %v1237 = vmul.f32 %v1042, %v1215
        %v1238 = vmul.f32 %v1046, %v1215
        %v1239 = vmul.f32 %v1050, %v1215
        %v1240 = vmul.f32 %v1054, %v1215
        %v1241 = vmul.f32 %v1058, %v1215
        %v1242 = vmul.f32 %v1062, %v1215
        %v1243 = vmul.f32 %v1066, %v1215
        %v1244 = vmul.f32 %v1070, %v1215
        %v1245 = vmul.f32 %v1074, %v1215
        %v1246 = vmul.f32 %v1078, %v1215
        %v1247 = vmul.f32 %v1082, %v1215
        %v1248 = vmul.f32 %v1086, %v1215
        %v1249 = vmul.f32 %v1090, %v1215
        %v1250 = vmul.f32 %v1094, %v1215
        %v1251 = vmul.f32 %v1098, %v1215
        %v1252 = vmul.f32 %v1102, %v1215
        %v1253 = vmul.f32 %v1106, %v1215
        %v1254 = vmul.f32 %v1110, %v1215
        %v1255 = vmul.f32 %v1114, %v1215
        %v1256 = vmul.f32 %v1118, %v1215
        %v1257 = vmul.f32 %v1122, %v1215
        %v1258 = vmul.f32 %v1126, %v1215
        %v1259 = vmul.f32 %v1130, %v1215
        %v1260 = vmul.f32 %v1134, %v1215
        %v1261 = vmul.f32 %v1138, %v1215
        %v1262 = vmul.f32 %v1142, %v1215
        %v1263 = vmul.f32 %v1146, %v1215
        %v1264 = vmul.f32 %v1150, %v1215
        %v1265 = vmul.f32 %v1154, %v1215
        %v1266 = vmul.f32 %v1158, %v1215
        %v1267 = vmul.f32 %v1162, %v1215
        %v1268 = vmul.f32 %v1166, %v1215
        %v1269 = vmul.f32 %v1170, %v1215
        %v1270 = vmul.f32 %v1174, %v1215
        %v1271 = vmul.f32 %v1178, %v1215
        %v1272 = vmul.f32 %v1182, %v1215
        %v1273 = vmul.f32 %v1186, %v1215
        %v1274 = vmul.f32 %v1190, %v1215
        %v1275 = vmul.f32 %v1194, %v1215
        %v1276 = vmul.f32 %v1198, %v1215
        %v1277 = vmul.f32 %v1202, %v1215
        %v1278 = vmul.f32 %v1206, %v1215
        %v1279 = vmul.f32 %v1210, %v1215
        %v1280 = vadd.f32 %v891, %v1216
        %v1281 = vadd.f32 %v892, %v1217
        %v1282 = vadd.f32 %v893, %v1218
        %v1283 = vadd.f32 %v894, %v1219
        %v1284 = vadd.f32 %v895, %v1220
        %v1285 = vadd.f32 %v896, %v1221
        %v1286 = vadd.f32 %v897, %v1222
        %v1287 = vadd.f32 %v898, %v1223
        %v1288 = vadd.f32 %v899, %v1224
        %v1289 = vadd.f32 %v900, %v1225
        %v1290 = vadd.f32 %v901, %v1226
        %v1291 = vadd.f32 %v902, %v1227
        %v1292 = vadd.f32 %v903, %v1228
        %v1293 = vadd.f32 %v904, %v1229
        %v1294 = vadd.f32 %v905, %v1230
        %v1295 = vadd.f32 %v906, %v1231
        %v1296 = vadd.f32 %v907, %v1232
        %v1297 = vadd.f32 %v908, %v1233
        %v1298 = vadd.f32 %v909, %v1234
        %v1299 = vadd.f32 %v910, %v1235
        %v1300 = vadd.f32 %v911, %v1236
        %v1301 = vadd.f32 %v912, %v1237
        %v1302 = vadd.f32 %v913, %v1238
        %v1303 = vadd.f32 %v914, %v1239
        %v1304 = vadd.f32 %v915, %v1240
        %v1305 = vadd.f32 %v916, %v1241
        %v1306 = vadd.f32 %v917, %v1242
        %v1307 = vadd.f32 %v918, %v1243
        %v1308 = vadd.f32 %v919, %v1244
        %v1309 = vadd.f32 %v920, %v1245
        %v1310 = vadd.f32 %v921, %v1246
        %v1311 = vadd.f32 %v922, %v1247
        %v1312 = vadd.f32 %v923, %v1248
        %v1313 = vadd.f32 %v924, %v1249
        %v1314 = vadd.f32 %v925, %v1250
        %v1315 = vadd.f32 %v926, %v1251
        %v1316 = vadd.f32 %v927, %v1252
        %v1317 = vadd.f32 %v928, %v1253
        %v1318 = vadd.f32 %v929, %v1254
        %v1319 = vadd.f32 %v930, %v1255
        %v1320 = vadd.f32 %v931, %v1256
        %v1321 = vadd.f32 %v932, %v1257
        %v1322 = vadd.f32 %v933, %v1258
        %v1323 = vadd.f32 %v934, %v1259
        %v1324 = vadd.f32 %v935, %v1260
        %v1325 = vadd.f32 %v936, %v1261
        %v1326 = vadd.f32 %v937, %v1262
        %v1327 = vadd.f32 %v938, %v1263
        %v1328 = vadd.f32 %v939, %v1264
        %v1329 = vadd.f32 %v940, %v1265
        %v1330 = vadd.f32 %v941, %v1266
        %v1331 = vadd.f32 %v942, %v1267
        %v1332 = vadd.f32 %v943, %v1268
        %v1333 = vadd.f32 %v944, %v1269
        %v1334 = vadd.f32 %v945, %v1270
        %v1335 = vadd.f32 %v946, %v1271
        %v1336 = vadd.f32 %v947, %v1272
        %v1337 = vadd.f32 %v948, %v1273
        %v1338 = vadd.f32 %v949, %v1274
        %v1339 = vadd.f32 %v950, %v1275
        %v1340 = vadd.f32 %v951, %v1276
        %v1341 = vadd.f32 %v952, %v1277
        %v1342 = vadd.f32 %v953, %v1278
        %v1343 = vadd.f32 %v954, %v1279
        %v1344 = vld [vmem:[#allocation5 + $0x2] sm:$0x1]
        %1345 = vset.pattern.permute.xlu0 2
        %1346 = vperm.xlu0 %1345, %v502
        %v1347 = vpop.permute.xlu0 %1346
        %1349 = vset.pattern.permute.xlu0 2
        %1350 = vperm.xlu0 %1349, %v503
        %v1351 = vpop.permute.xlu0 %1350
        %1353 = vset.pattern.permute.xlu0 2
        %1354 = vperm.xlu0 %1353, %v504
        %v1355 = vpop.permute.xlu0 %1354
        %1357 = vset.pattern.permute.xlu0 2
        %1358 = vperm.xlu0 %1357, %v505
        %v1359 = vpop.permute.xlu0 %1358
        %1361 = vset.pattern.permute.xlu0 2
        %1362 = vperm.xlu0 %1361, %v506
        %v1363 = vpop.permute.xlu0 %1362
        %1365 = vset.pattern.permute.xlu0 2
        %1366 = vperm.xlu0 %1365, %v507
        %v1367 = vpop.permute.xlu0 %1366
        %1369 = vset.pattern.permute.xlu0 2
        %1370 = vperm.xlu0 %1369, %v508
        %v1371 = vpop.permute.xlu0 %1370
        %1373 = vset.pattern.permute.xlu0 2
        %1374 = vperm.xlu0 %1373, %v509
        %v1375 = vpop.permute.xlu0 %1374
        %1377 = vset.pattern.permute.xlu0 2
        %1378 = vperm.xlu0 %1377, %v510
        %v1379 = vpop.permute.xlu0 %1378
        %1381 = vset.pattern.permute.xlu0 2
        %1382 = vperm.xlu0 %1381, %v511
        %v1383 = vpop.permute.xlu0 %1382
        %1385 = vset.pattern.permute.xlu0 2
        %1386 = vperm.xlu0 %1385, %v512
        %v1387 = vpop.permute.xlu0 %1386
        %1389 = vset.pattern.permute.xlu0 2
        %1390 = vperm.xlu0 %1389, %v513
        %v1391 = vpop.permute.xlu0 %1390
        %1393 = vset.pattern.permute.xlu0 2
        %1394 = vperm.xlu0 %1393, %v514
        %v1395 = vpop.permute.xlu0 %1394
        %1397 = vset.pattern.permute.xlu0 2
        %1398 = vperm.xlu0 %1397, %v515
        %v1399 = vpop.permute.xlu0 %1398
        %1401 = vset.pattern.permute.xlu0 2
        %1402 = vperm.xlu0 %1401, %v516
        %v1403 = vpop.permute.xlu0 %1402
        %1405 = vset.pattern.permute.xlu0 2
        %1406 = vperm.xlu0 %1405, %v517
        %v1407 = vpop.permute.xlu0 %1406
        %1409 = vset.pattern.permute.xlu0 2
        %1410 = vperm.xlu0 %1409, %v518
        %v1411 = vpop.permute.xlu0 %1410
        %1413 = vset.pattern.permute.xlu0 2
        %1414 = vperm.xlu0 %1413, %v519
        %v1415 = vpop.permute.xlu0 %1414
        %1417 = vset.pattern.permute.xlu0 2
        %1418 = vperm.xlu0 %1417, %v520
        %v1419 = vpop.permute.xlu0 %1418
        %1421 = vset.pattern.permute.xlu0 2
        %1422 = vperm.xlu0 %1421, %v521
        %v1423 = vpop.permute.xlu0 %1422
        %1425 = vset.pattern.permute.xlu0 2
        %1426 = vperm.xlu0 %1425, %v522
        %v1427 = vpop.permute.xlu0 %1426
        %1429 = vset.pattern.permute.xlu0 2
        %1430 = vperm.xlu0 %1429, %v523
        %v1431 = vpop.permute.xlu0 %1430
        %1433 = vset.pattern.permute.xlu0 2
        %1434 = vperm.xlu0 %1433, %v524
        %v1435 = vpop.permute.xlu0 %1434
        %1437 = vset.pattern.permute.xlu0 2
        %1438 = vperm.xlu0 %1437, %v525
        %v1439 = vpop.permute.xlu0 %1438
        %1441 = vset.pattern.permute.xlu0 2
        %1442 = vperm.xlu0 %1441, %v526
        %v1443 = vpop.permute.xlu0 %1442
        %1445 = vset.pattern.permute.xlu0 2
        %1446 = vperm.xlu0 %1445, %v527
        %v1447 = vpop.permute.xlu0 %1446
        %1449 = vset.pattern.permute.xlu0 2
        %1450 = vperm.xlu0 %1449, %v528
        %v1451 = vpop.permute.xlu0 %1450
        %1453 = vset.pattern.permute.xlu0 2
        %1454 = vperm.xlu0 %1453, %v529
        %v1455 = vpop.permute.xlu0 %1454
        %1457 = vset.pattern.permute.xlu0 2
        %1458 = vperm.xlu0 %1457, %v530
        %v1459 = vpop.permute.xlu0 %1458
        %1461 = vset.pattern.permute.xlu0 2
        %1462 = vperm.xlu0 %1461, %v531
        %v1463 = vpop.permute.xlu0 %1462
        %1465 = vset.pattern.permute.xlu0 2
        %1466 = vperm.xlu0 %1465, %v532
        %v1467 = vpop.permute.xlu0 %1466
        %1469 = vset.pattern.permute.xlu0 2
        %1470 = vperm.xlu0 %1469, %v533
        %v1471 = vpop.permute.xlu0 %1470
        %1473 = vset.pattern.permute.xlu0 2
        %1474 = vperm.xlu0 %1473, %v534
        %v1475 = vpop.permute.xlu0 %1474
        %1477 = vset.pattern.permute.xlu0 2
        %1478 = vperm.xlu0 %1477, %v535
        %v1479 = vpop.permute.xlu0 %1478
        %1481 = vset.pattern.permute.xlu0 2
        %1482 = vperm.xlu0 %1481, %v536
        %v1483 = vpop.permute.xlu0 %1482
        %1485 = vset.pattern.permute.xlu0 2
        %1486 = vperm.xlu0 %1485, %v537
        %v1487 = vpop.permute.xlu0 %1486
        %1489 = vset.pattern.permute.xlu0 2
        %1490 = vperm.xlu0 %1489, %v538
        %v1491 = vpop.permute.xlu0 %1490
        %1493 = vset.pattern.permute.xlu0 2
        %1494 = vperm.xlu0 %1493, %v539
        %v1495 = vpop.permute.xlu0 %1494
        %1497 = vset.pattern.permute.xlu0 2
        %1498 = vperm.xlu0 %1497, %v540
        %v1499 = vpop.permute.xlu0 %1498
        %1501 = vset.pattern.permute.xlu0 2
        %1502 = vperm.xlu0 %1501, %v541
        %v1503 = vpop.permute.xlu0 %1502
        %1505 = vset.pattern.permute.xlu0 2
        %1506 = vperm.xlu0 %1505, %v542
        %v1507 = vpop.permute.xlu0 %1506
        %1509 = vset.pattern.permute.xlu0 2
        %1510 = vperm.xlu0 %1509, %v543
        %v1511 = vpop.permute.xlu0 %1510
        %1513 = vset.pattern.permute.xlu0 2
        %1514 = vperm.xlu0 %1513, %v544
        %v1515 = vpop.permute.xlu0 %1514
        %1517 = vset.pattern.permute.xlu0 2
        %1518 = vperm.xlu0 %1517, %v545
        %v1519 = vpop.permute.xlu0 %1518
        %1521 = vset.pattern.permute.xlu0 2
        %1522 = vperm.xlu0 %1521, %v546
        %v1523 = vpop.permute.xlu0 %1522
        %1525 = vset.pattern.permute.xlu0 2
        %1526 = vperm.xlu0 %1525, %v547
        %v1527 = vpop.permute.xlu0 %1526
        %1529 = vset.pattern.permute.xlu0 2
        %1530 = vperm.xlu0 %1529, %v548
        %v1531 = vpop.permute.xlu0 %1530
        %1533 = vset.pattern.permute.xlu0 2
        %1534 = vperm.xlu0 %1533, %v549
        %v1535 = vpop.permute.xlu0 %1534
        %1537 = vset.pattern.permute.xlu0 2
        %1538 = vperm.xlu0 %1537, %v550
        %v1539 = vpop.permute.xlu0 %1538
        %1541 = vset.pattern.permute.xlu0 2
        %1542 = vperm.xlu0 %1541, %v551
        %v1543 = vpop.permute.xlu0 %1542
        %1545 = vset.pattern.permute.xlu0 2
        %1546 = vperm.xlu0 %1545, %v552
        %v1547 = vpop.permute.xlu0 %1546
        %1549 = vset.pattern.permute.xlu0 2
        %1550 = vperm.xlu0 %1549, %v553
        %v1551 = vpop.permute.xlu0 %1550
        %1553 = vset.pattern.permute.xlu0 2
        %1554 = vperm.xlu0 %1553, %v554
        %v1555 = vpop.permute.xlu0 %1554
        %1557 = vset.pattern.permute.xlu0 2
        %1558 = vperm.xlu0 %1557, %v555
        %v1559 = vpop.permute.xlu0 %1558
        %1561 = vset.pattern.permute.xlu0 2
        %1562 = vperm.xlu0 %1561, %v556
        %v1563 = vpop.permute.xlu0 %1562
        %1565 = vset.pattern.permute.xlu0 2
        %1566 = vperm.xlu0 %1565, %v557
        %v1567 = vpop.permute.xlu0 %1566
        %1569 = vset.pattern.permute.xlu0 2
        %1570 = vperm.xlu0 %1569, %v558
        %v1571 = vpop.permute.xlu0 %1570
        %1573 = vset.pattern.permute.xlu0 2
        %1574 = vperm.xlu0 %1573, %v559
        %v1575 = vpop.permute.xlu0 %1574
        %1577 = vset.pattern.permute.xlu0 2
        %1578 = vperm.xlu0 %1577, %v560
        %v1579 = vpop.permute.xlu0 %1578
        %1581 = vset.pattern.permute.xlu0 2
        %1582 = vperm.xlu0 %1581, %v561
        %v1583 = vpop.permute.xlu0 %1582
        %1585 = vset.pattern.permute.xlu0 2
        %1586 = vperm.xlu0 %1585, %v562
        %v1587 = vpop.permute.xlu0 %1586
        %1589 = vset.pattern.permute.xlu0 2
        %1590 = vperm.xlu0 %1589, %v563
        %v1591 = vpop.permute.xlu0 %1590
        %1593 = vset.pattern.permute.xlu0 2
        %1594 = vperm.xlu0 %1593, %v564
        %v1595 = vpop.permute.xlu0 %1594
        %1597 = vset.pattern.permute.xlu0 2
        %1598 = vperm.xlu0 %1597, %v565
        %v1599 = vpop.permute.xlu0 %1598
        %v1601 = vlaneseq
        %v1602 = vshrl.u32 %v1601, 7
        %v1603 = vsub.s32 0, %v1602
        %v1604 = vrot.slane %v1344, %v1603
        %v1605 = vmul.f32 %v1347, %v1604
        %v1606 = vmul.f32 %v1351, %v1604
        %v1607 = vmul.f32 %v1355, %v1604
        %v1608 = vmul.f32 %v1359, %v1604
        %v1609 = vmul.f32 %v1363, %v1604
        %v1610 = vmul.f32 %v1367, %v1604
        %v1611 = vmul.f32 %v1371, %v1604
        %v1612 = vmul.f32 %v1375, %v1604
        %v1613 = vmul.f32 %v1379, %v1604
        %v1614 = vmul.f32 %v1383, %v1604
        %v1615 = vmul.f32 %v1387, %v1604
        %v1616 = vmul.f32 %v1391, %v1604
        %v1617 = vmul.f32 %v1395, %v1604
        %v1618 = vmul.f32 %v1399, %v1604
        %v1619 = vmul.f32 %v1403, %v1604
        %v1620 = vmul.f32 %v1407, %v1604
        %v1621 = vmul.f32 %v1411, %v1604
        %v1622 = vmul.f32 %v1415, %v1604
        %v1623 = vmul.f32 %v1419, %v1604
        %v1624 = vmul.f32 %v1423, %v1604
        %v1625 = vmul.f32 %v1427, %v1604
        %v1626 = vmul.f32 %v1431, %v1604
        %v1627 = vmul.f32 %v1435, %v1604
        %v1628 = vmul.f32 %v1439, %v1604
        %v1629 = vmul.f32 %v1443, %v1604
        %v1630 = vmul.f32 %v1447, %v1604
        %v1631 = vmul.f32 %v1451, %v1604
        %v1632 = vmul.f32 %v1455, %v1604
        %v1633 = vmul.f32 %v1459, %v1604
        %v1634 = vmul.f32 %v1463, %v1604
        %v1635 = vmul.f32 %v1467, %v1604
        %v1636 = vmul.f32 %v1471, %v1604
        %v1637 = vmul.f32 %v1475, %v1604
        %v1638 = vmul.f32 %v1479, %v1604
        %v1639 = vmul.f32 %v1483, %v1604
        %v1640 = vmul.f32 %v1487, %v1604
        %v1641 = vmul.f32 %v1491, %v1604
        %v1642 = vmul.f32 %v1495, %v1604
        %v1643 = vmul.f32 %v1499, %v1604
        %v1644 = vmul.f32 %v1503, %v1604
        %v1645 = vmul.f32 %v1507, %v1604
        %v1646 = vmul.f32 %v1511, %v1604
        %v1647 = vmul.f32 %v1515, %v1604
        %v1648 = vmul.f32 %v1519, %v1604
        %v1649 = vmul.f32 %v1523, %v1604
        %v1650 = vmul.f32 %v1527, %v1604
        %v1651 = vmul.f32 %v1531, %v1604
        %v1652 = vmul.f32 %v1535, %v1604
        %v1653 = vmul.f32 %v1539, %v1604
        %v1654 = vmul.f32 %v1543, %v1604
        %v1655 = vmul.f32 %v1547, %v1604
        %v1656 = vmul.f32 %v1551, %v1604
        %v1657 = vmul.f32 %v1555, %v1604
        %v1658 = vmul.f32 %v1559, %v1604
        %v1659 = vmul.f32 %v1563, %v1604
        %v1660 = vmul.f32 %v1567, %v1604
        %v1661 = vmul.f32 %v1571, %v1604
        %v1662 = vmul.f32 %v1575, %v1604
        %v1663 = vmul.f32 %v1579, %v1604
        %v1664 = vmul.f32 %v1583, %v1604
        %v1665 = vmul.f32 %v1587, %v1604
        %v1666 = vmul.f32 %v1591, %v1604
        %v1667 = vmul.f32 %v1595, %v1604
        %v1668 = vmul.f32 %v1599, %v1604
        %v1669 = vadd.f32 %v1280, %v1605
        %v1670 = vadd.f32 %v1281, %v1606
        %v1671 = vadd.f32 %v1282, %v1607
        %v1672 = vadd.f32 %v1283, %v1608
        %v1673 = vadd.f32 %v1284, %v1609
        %v1674 = vadd.f32 %v1285, %v1610
        %v1675 = vadd.f32 %v1286, %v1611
        %v1676 = vadd.f32 %v1287, %v1612
        %v1677 = vadd.f32 %v1288, %v1613
        %v1678 = vadd.f32 %v1289, %v1614
        %v1679 = vadd.f32 %v1290, %v1615
        %v1680 = vadd.f32 %v1291, %v1616
        %v1681 = vadd.f32 %v1292, %v1617
        %v1682 = vadd.f32 %v1293, %v1618
        %v1683 = vadd.f32 %v1294, %v1619
        %v1684 = vadd.f32 %v1295, %v1620
        %v1685 = vadd.f32 %v1296, %v1621
        %v1686 = vadd.f32 %v1297, %v1622
        %v1687 = vadd.f32 %v1298, %v1623
        %v1688 = vadd.f32 %v1299, %v1624
        %v1689 = vadd.f32 %v1300, %v1625
        %v1690 = vadd.f32 %v1301, %v1626
        %v1691 = vadd.f32 %v1302, %v1627
        %v1692 = vadd.f32 %v1303, %v1628
        %v1693 = vadd.f32 %v1304, %v1629
        %v1694 = vadd.f32 %v1305, %v1630
        %v1695 = vadd.f32 %v1306, %v1631
        %v1696 = vadd.f32 %v1307, %v1632
        %v1697 = vadd.f32 %v1308, %v1633
        %v1698 = vadd.f32 %v1309, %v1634
        %v1699 = vadd.f32 %v1310, %v1635
        %v1700 = vadd.f32 %v1311, %v1636
        %v1701 = vadd.f32 %v1312, %v1637
        %v1702 = vadd.f32 %v1313, %v1638
        %v1703 = vadd.f32 %v1314, %v1639
        %v1704 = vadd.f32 %v1315, %v1640
        %v1705 = vadd.f32 %v1316, %v1641
        %v1706 = vadd.f32 %v1317, %v1642
        %v1707 = vadd.f32 %v1318, %v1643
        %v1708 = vadd.f32 %v1319, %v1644
        %v1709 = vadd.f32 %v1320, %v1645
        %v1710 = vadd.f32 %v1321, %v1646
        %v1711 = vadd.f32 %v1322, %v1647
        %v1712 = vadd.f32 %v1323, %v1648
        %v1713 = vadd.f32 %v1324, %v1649
        %v1714 = vadd.f32 %v1325, %v1650
        %v1715 = vadd.f32 %v1326, %v1651
        %v1716 = vadd.f32 %v1327, %v1652
        %v1717 = vadd.f32 %v1328, %v1653
        %v1718 = vadd.f32 %v1329, %v1654
        %v1719 = vadd.f32 %v1330, %v1655
        %v1720 = vadd.f32 %v1331, %v1656
        %v1721 = vadd.f32 %v1332, %v1657
        %v1722 = vadd.f32 %v1333, %v1658
        %v1723 = vadd.f32 %v1334, %v1659
        %v1724 = vadd.f32 %v1335, %v1660
        %v1725 = vadd.f32 %v1336, %v1661
        %v1726 = vadd.f32 %v1337, %v1662
        %v1727 = vadd.f32 %v1338, %v1663
        %v1728 = vadd.f32 %v1339, %v1664
        %v1729 = vadd.f32 %v1340, %v1665
        %v1730 = vadd.f32 %v1341, %v1666
        %v1731 = vadd.f32 %v1342, %v1667
        %v1732 = vadd.f32 %v1343, %v1668
        %v1733 = vld [vmem:[#allocation7] sm:$0x1]
        %v1735 = vlaneseq
        %v1736 = vshrl.u32 %v1735, 7
        %v1737 = vsub.s32 0, %v1736
        %v1738 = vrot.slane %v1733, %v1737
        %v1740 = vadd.f32 %v1669, %v1738
        %v1741 = vadd.f32 %v1670, %v1738
        %v1742 = vadd.f32 %v1671, %v1738
        %v1743 = vadd.f32 %v1672, %v1738
        %v1744 = vadd.f32 %v1673, %v1738
        %v1745 = vadd.f32 %v1674, %v1738
        %v1746 = vadd.f32 %v1675, %v1738
        %v1747 = vadd.f32 %v1676, %v1738
        %v1748 = vadd.f32 %v1677, %v1738
        %v1749 = vadd.f32 %v1678, %v1738
        %v1750 = vadd.f32 %v1679, %v1738
        %v1751 = vadd.f32 %v1680, %v1738
        %v1752 = vadd.f32 %v1681, %v1738
        %v1753 = vadd.f32 %v1682, %v1738
        %v1754 = vadd.f32 %v1683, %v1738
        %v1755 = vadd.f32 %v1684, %v1738
        %v1756 = vadd.f32 %v1685, %v1738
        %v1757 = vadd.f32 %v1686, %v1738
        %v1758 = vadd.f32 %v1687, %v1738
        %v1759 = vadd.f32 %v1688, %v1738
        %v1760 = vadd.f32 %v1689, %v1738
        %v1761 = vadd.f32 %v1690, %v1738
        %v1762 = vadd.f32 %v1691, %v1738
        %v1763 = vadd.f32 %v1692, %v1738
        %v1764 = vadd.f32 %v1693, %v1738
        %v1765 = vadd.f32 %v1694, %v1738
        %v1766 = vadd.f32 %v1695, %v1738
        %v1767 = vadd.f32 %v1696, %v1738
        %v1768 = vadd.f32 %v1697, %v1738
        %v1769 = vadd.f32 %v1698, %v1738
        %v1770 = vadd.f32 %v1699, %v1738
        %v1771 = vadd.f32 %v1700, %v1738
        %v1772 = vadd.f32 %v1701, %v1738
        %v1773 = vadd.f32 %v1702, %v1738
        %v1774 = vadd.f32 %v1703, %v1738
        %v1775 = vadd.f32 %v1704, %v1738
        %v1776 = vadd.f32 %v1705, %v1738
        %v1777 = vadd.f32 %v1706, %v1738
        %v1778 = vadd.f32 %v1707, %v1738
        %v1779 = vadd.f32 %v1708, %v1738
        %v1780 = vadd.f32 %v1709, %v1738
        %v1781 = vadd.f32 %v1710, %v1738
        %v1782 = vadd.f32 %v1711, %v1738
        %v1783 = vadd.f32 %v1712, %v1738
        %v1784 = vadd.f32 %v1713, %v1738
        %v1785 = vadd.f32 %v1714, %v1738
        %v1786 = vadd.f32 %v1715, %v1738
        %v1787 = vadd.f32 %v1716, %v1738
        %v1788 = vadd.f32 %v1717, %v1738
        %v1789 = vadd.f32 %v1718, %v1738
        %v1790 = vadd.f32 %v1719, %v1738
        %v1791 = vadd.f32 %v1720, %v1738
        %v1792 = vadd.f32 %v1721, %v1738
        %v1793 = vadd.f32 %v1722, %v1738
        %v1794 = vadd.f32 %v1723, %v1738
        %v1795 = vadd.f32 %v1724, %v1738
        %v1796 = vadd.f32 %v1725, %v1738
        %v1797 = vadd.f32 %v1726, %v1738
        %v1798 = vadd.f32 %v1727, %v1738
        %v1799 = vadd.f32 %v1728, %v1738
        %v1800 = vadd.f32 %v1729, %v1738
        %v1801 = vadd.f32 %v1730, %v1738
        %v1802 = vadd.f32 %v1731, %v1738
        %v1803 = vadd.f32 %v1732, %v1738
        %v1804 = vmax.f32 %v1740, 0.0
        %v1805 = vmax.f32 %v1741, 0.0
        %v1806 = vmax.f32 %v1742, 0.0
        %v1807 = vmax.f32 %v1743, 0.0
        %v1808 = vmax.f32 %v1744, 0.0
        %v1809 = vmax.f32 %v1745, 0.0
        %v1810 = vmax.f32 %v1746, 0.0
        %v1811 = vmax.f32 %v1747, 0.0
        %v1812 = vmax.f32 %v1748, 0.0
        %v1813 = vmax.f32 %v1749, 0.0
        %v1814 = vmax.f32 %v1750, 0.0
        %v1815 = vmax.f32 %v1751, 0.0
        %v1816 = vmax.f32 %v1752, 0.0
        %v1817 = vmax.f32 %v1753, 0.0
        %v1818 = vmax.f32 %v1754, 0.0
        %v1819 = vmax.f32 %v1755, 0.0
        %v1820 = vmax.f32 %v1756, 0.0
        %v1821 = vmax.f32 %v1757, 0.0
        %v1822 = vmax.f32 %v1758, 0.0
        %v1823 = vmax.f32 %v1759, 0.0
        %v1824 = vmax.f32 %v1760, 0.0
        %v1825 = vmax.f32 %v1761, 0.0
        %v1826 = vmax.f32 %v1762, 0.0
        %v1827 = vmax.f32 %v1763, 0.0
        %v1828 = vmax.f32 %v1764, 0.0
        %v1829 = vmax.f32 %v1765, 0.0
        %v1830 = vmax.f32 %v1766, 0.0
        %v1831 = vmax.f32 %v1767, 0.0
        %v1832 = vmax.f32 %v1768, 0.0
        %v1833 = vmax.f32 %v1769, 0.0
        %v1834 = vmax.f32 %v1770, 0.0
        %v1835 = vmax.f32 %v1771, 0.0
        %v1836 = vmax.f32 %v1772, 0.0
        %v1837 = vmax.f32 %v1773, 0.0
        %v1838 = vmax.f32 %v1774, 0.0
        %v1839 = vmax.f32 %v1775, 0.0
        %v1840 = vmax.f32 %v1776, 0.0
        %v1841 = vmax.f32 %v1777, 0.0
        %v1842 = vmax.f32 %v1778, 0.0
        %v1843 = vmax.f32 %v1779, 0.0
        %v1844 = vmax.f32 %v1780, 0.0
        %v1845 = vmax.f32 %v1781, 0.0
        %v1846 = vmax.f32 %v1782, 0.0
        %v1847 = vmax.f32 %v1783, 0.0
        %v1848 = vmax.f32 %v1784, 0.0
        %v1849 = vmax.f32 %v1785, 0.0
        %v1850 = vmax.f32 %v1786, 0.0
        %v1851 = vmax.f32 %v1787, 0.0
        %v1852 = vmax.f32 %v1788, 0.0
        %v1853 = vmax.f32 %v1789, 0.0
        %v1854 = vmax.f32 %v1790, 0.0
        %v1855 = vmax.f32 %v1791, 0.0
        %v1856 = vmax.f32 %v1792, 0.0
        %v1857 = vmax.f32 %v1793, 0.0
        %v1858 = vmax.f32 %v1794, 0.0
        %v1859 = vmax.f32 %v1795, 0.0
        %v1860 = vmax.f32 %v1796, 0.0
        %v1861 = vmax.f32 %v1797, 0.0
        %v1862 = vmax.f32 %v1798, 0.0
        %v1863 = vmax.f32 %v1799, 0.0
        %v1864 = vmax.f32 %v1800, 0.0
        %v1865 = vmax.f32 %v1801, 0.0
        %v1866 = vmax.f32 %v1802, 0.0
        %v1867 = vmax.f32 %v1803, 0.0
        %v1868 = vpack.c.bf16 %v1805, %v1804
        %v1869 = vpack.c.bf16 %v1807, %v1806
        %v1870 = vpack.c.bf16 %v1809, %v1808
        %v1871 = vpack.c.bf16 %v1811, %v1810
        %v1872 = vpack.c.bf16 %v1813, %v1812
        %v1873 = vpack.c.bf16 %v1815, %v1814
        %v1874 = vpack.c.bf16 %v1817, %v1816
        %v1875 = vpack.c.bf16 %v1819, %v1818
        %v1876 = vpack.c.bf16 %v1821, %v1820
        %v1877 = vpack.c.bf16 %v1823, %v1822
        %v1878 = vpack.c.bf16 %v1825, %v1824
        %v1879 = vpack.c.bf16 %v1827, %v1826
        %v1880 = vpack.c.bf16 %v1829, %v1828
        %v1881 = vpack.c.bf16 %v1831, %v1830
        %v1882 = vpack.c.bf16 %v1833, %v1832
        %v1883 = vpack.c.bf16 %v1835, %v1834
        %v1884 = vpack.c.bf16 %v1837, %v1836
        %v1885 = vpack.c.bf16 %v1839, %v1838
        %v1886 = vpack.c.bf16 %v1841, %v1840
        %v1887 = vpack.c.bf16 %v1843, %v1842
        %v1888 = vpack.c.bf16 %v1845, %v1844
        %v1889 = vpack.c.bf16 %v1847, %v1846
        %v1890 = vpack.c.bf16 %v1849, %v1848
        %v1891 = vpack.c.bf16 %v1851, %v1850
        %v1892 = vpack.c.bf16 %v1853, %v1852
        %v1893 = vpack.c.bf16 %v1855, %v1854
        %v1894 = vpack.c.bf16 %v1857, %v1856
        %v1895 = vpack.c.bf16 %v1859, %v1858
        %v1896 = vpack.c.bf16 %v1861, %v1860
        %v1897 = vpack.c.bf16 %v1863, %v1862
        %v1898 = vpack.c.bf16 %v1865, %v1864
        %v1899 = vpack.c.bf16 %v1867, %v1866
        %v1900 = vld [vmem:[#allocation8] sm:$0xff]
        %v1901 = vld [vmem:[#allocation8 + $0x8] sm:$0xff]
        %v1902 = vld [vmem:[#allocation8 + $0x10] sm:$0xff]
        %v1903 = vld [vmem:[#allocation8 + $0x18] sm:$0xff]
        %v1904 = vld [vmem:[#allocation8 + $0x20] sm:$0xff]
        %v1905 = vld [vmem:[#allocation8 + $0x28] sm:$0xff]
        %v1906 = vld [vmem:[#allocation8 + $0x30] sm:$0xff]
        %v1907 = vld [vmem:[#allocation8 + $0x38] sm:$0xff]
        %v1908 = vld [vmem:[#allocation8 + $0x40] sm:$0xff]
        %v1909 = vld [vmem:[#allocation8 + $0x48] sm:$0xff]
        %v1910 = vld [vmem:[#allocation8 + $0x50] sm:$0xff]
        %v1911 = vld [vmem:[#allocation8 + $0x58] sm:$0xff]
        %v1912 = vld [vmem:[#allocation8 + $0x60] sm:$0xff]
        %v1913 = vld [vmem:[#allocation8 + $0x68] sm:$0xff]
        %v1914 = vld [vmem:[#allocation8 + $0x70] sm:$0xff]
        %v1915 = vld [vmem:[#allocation8 + $0x78] sm:$0xff]
        %v1916 = vld [vmem:[#allocation10] sm:$0x3]
        %v1918 = vlaneseq
        %v1919 = vshrl.u32 %v1918, 7
        %v1920 = vsub.s32 0, %v1919
        %v1921 = vrot.slane %v1916, %v1920
        %v1922 = vlaneseq
        %v1923 = vshrl.u32 %v1922, 7
        %v1924 = vsub.s32 1, %v1923
        %v1925 = vrot.slane %v1916, %v1924
        %v1944 = vunpack.c.l.b16 %v1900
        %v1945 = vunpack.c.h.b16 %v1900
        %v1946 = vunpack.c.l.b16 %v1901
        %v1947 = vunpack.c.h.b16 %v1901
        %v1948 = vunpack.c.l.b16 %v1902
        %v1949 = vunpack.c.h.b16 %v1902
        %v1950 = vunpack.c.l.b16 %v1903
        %v1951 = vunpack.c.h.b16 %v1903
        %v1952 = vunpack.c.l.b16 %v1904
        %v1953 = vunpack.c.h.b16 %v1904
        %v1954 = vunpack.c.l.b16 %v1905
        %v1955 = vunpack.c.h.b16 %v1905
        %v1956 = vunpack.c.l.b16 %v1906
        %v1957 = vunpack.c.h.b16 %v1906
        %v1958 = vunpack.c.l.b16 %v1907
        %v1959 = vunpack.c.h.b16 %v1907
        %v1960 = vunpack.c.l.b16 %v1908
        %v1961 = vunpack.c.h.b16 %v1908
        %v1962 = vunpack.c.l.b16 %v1909
        %v1963 = vunpack.c.h.b16 %v1909
        %v1964 = vunpack.c.l.b16 %v1910
        %v1965 = vunpack.c.h.b16 %v1910
        %v1966 = vunpack.c.l.b16 %v1911
        %v1967 = vunpack.c.h.b16 %v1911
        %v1968 = vunpack.c.l.b16 %v1912
        %v1969 = vunpack.c.h.b16 %v1912
        %v1970 = vunpack.c.l.b16 %v1913
        %v1971 = vunpack.c.h.b16 %v1913
        %v1972 = vunpack.c.l.b16 %v1914
        %v1973 = vunpack.c.h.b16 %v1914
        %v1974 = vunpack.c.l.b16 %v1915
        %v1975 = vunpack.c.h.b16 %v1915
        %v1976 = vpack.c.b16 %v1946, %v1944
        %v1977 = vpack.c.b16 %v1947, %v1945
        %v1978 = vpack.c.b16 %v1950, %v1948
        %v1979 = vpack.c.b16 %v1951, %v1949
        %v1980 = vpack.c.b16 %v1954, %v1952
        %v1981 = vpack.c.b16 %v1955, %v1953
        %v1982 = vpack.c.b16 %v1958, %v1956
        %v1983 = vpack.c.b16 %v1959, %v1957
        %v1984 = vpack.c.b16 %v1962, %v1960
        %v1985 = vpack.c.b16 %v1963, %v1961
        %v1986 = vpack.c.b16 %v1966, %v1964
        %v1987 = vpack.c.b16 %v1967, %v1965
        %v1988 = vpack.c.b16 %v1970, %v1968
        %v1989 = vpack.c.b16 %v1971, %v1969
        %v1990 = vpack.c.b16 %v1974, %v1972
        %v1991 = vpack.c.b16 %v1975, %v1973
        %2008 = vmatprep.subr.bf16.mxu0 %v1977
        %2009 = vmatpush1.bf16.msra.mxu0 %v1976
        %2010 = vmatprep.subr.bf16.mxu0 %v1979
        %2011 = vmatpush1.bf16.msra.mxu0 %v1978
        %2012 = vmatprep.subr.bf16.mxu0 %v1981
        %2013 = vmatpush1.bf16.msra.mxu0 %v1980
        %2014 = vmatprep.subr.bf16.mxu0 %v1983
        %2015 = vmatpush1.bf16.msra.mxu0 %v1982
        %2016 = vmatprep.subr.bf16.mxu0 %v1985
        %2017 = vmatpush1.bf16.msra.mxu0 %v1984
        %2018 = vmatprep.subr.bf16.mxu0 %v1987
        %2019 = vmatpush1.bf16.msra.mxu0 %v1986
        %2020 = vmatprep.subr.bf16.mxu0 %v1989
        %2021 = vmatpush1.bf16.msra.mxu0 %v1988
        %2022 = vmatprep.subr.bf16.mxu0 %v1991
        %2023 = vmatpush1.bf16.msra.mxu0 %v1990
        %2024 = vmatprep.subr.bf16.mxu0 0
        %2025 = vmatpush1.bf16.msra.mxu0 0
        %2026 = vmatprep.subr.bf16.mxu0 0
        %2027 = vmatpush1.bf16.msra.mxu0 0
        %2028 = vmatprep.subr.bf16.mxu0 0
        %2029 = vmatpush1.bf16.msra.mxu0 0
        %2030 = vmatprep.subr.bf16.mxu0 0
        %2031 = vmatpush1.bf16.msra.mxu0 0
        %2032 = vmatprep.subr.bf16.mxu0 0
        %2033 = vmatpush1.bf16.msra.mxu0 0
        %2034 = vmatprep.subr.bf16.mxu0 0
        %2035 = vmatpush1.bf16.msra.mxu0 0
        %2036 = vmatprep.subr.bf16.mxu0 0
        %2037 = vmatpush1.bf16.msra.mxu0 0
        %2038 = vmatprep.subr.bf16.mxu0 0
        %2039 = vmatpush1.bf16.msra.mxu0 0
        %2040 = vmatprep.mubr.bf16.mxu0 0
        %2041 = vmatmul.mubr.bf16.gmra.mrb[0].mxu0 %v1868
        %v2042 = vpop.f32.mrb[0].mxu0
        %v2043 = vadd.f32 %v1921, %v2042
        %v2044 = vpop.f32.mrb[0].mxu0
        %v2045 = vadd.f32 %v1925, %v2044
        %v2046 = vpop.f32.mrb[0].mxu0
        %v2047 = vadd.f32 %v1921, %v2046
        %v2048 = vpop.f32.mrb[0].mxu0
        %v2049 = vadd.f32 %v1925, %v2048
        %2050 = vmatprep.mubr.bf16.mxu0 0
        %2051 = vmatmul.mubr.bf16.gmra.mrb[0].mxu0 %v1869
        %v2052 = vpop.f32.mrb[0].mxu0
        %v2053 = vadd.f32 %v1921, %v2052
        %v2054 = vpop.f32.mrb[0].mxu0
        %v2055 = vadd.f32 %v1925, %v2054
        %v2056 = vpop.f32.mrb[0].mxu0
        %v2057 = vadd.f32 %v1921, %v2056
        %v2058 = vpop.f32.mrb[0].mxu0
        %v2059 = vadd.f32 %v1925, %v2058
        %2060 = vmatprep.mubr.bf16.mxu0 0
        %2061 = vmatmul.mubr.bf16.gmra.mrb[0].mxu0 %v1870
        %v2062 = vpop.f32.mrb[0].mxu0
        %v2063 = vadd.f32 %v1921, %v2062
        %v2064 = vpop.f32.mrb[0].mxu0
        %v2065 = vadd.f32 %v1925, %v2064
        %v2066 = vpop.f32.mrb[0].mxu0
        %v2067 = vadd.f32 %v1921, %v2066
        %v2068 = vpop.f32.mrb[0].mxu0
        %v2069 = vadd.f32 %v1925, %v2068
        %2070 = vmatprep.mubr.bf16.mxu0 0
        %2071 = vmatmul.mubr.bf16.gmra.mrb[0].mxu0 %v1871
        %v2072 = vpop.f32.mrb[0].mxu0
        %v2073 = vadd.f32 %v1921, %v2072
        %v2074 = vpop.f32.mrb[0].mxu0
        %v2075 = vadd.f32 %v1925, %v2074
        %v2076 = vpop.f32.mrb[0].mxu0
        %v2077 = vadd.f32 %v1921, %v2076
        %v2078 = vpop.f32.mrb[0].mxu0
        %v2079 = vadd.f32 %v1925, %v2078
        %2080 = vmatprep.mubr.bf16.mxu0 0
        %2081 = vmatmul.mubr.bf16.gmra.mrb[0].mxu0 %v1872
        %v2082 = vpop.f32.mrb[0].mxu0
        %v2083 = vadd.f32 %v1921, %v2082
        %v2084 = vpop.f32.mrb[0].mxu0
        %v2085 = vadd.f32 %v1925, %v2084
        %v2086 = vpop.f32.mrb[0].mxu0
        %v2087 = vadd.f32 %v1921, %v2086
        %v2088 = vpop.f32.mrb[0].mxu0
        %v2089 = vadd.f32 %v1925, %v2088
        %2090 = vmatprep.mubr.bf16.mxu0 0
        %2091 = vmatmul.mubr.bf16.gmra.mrb[0].mxu0 %v1873
        %v2092 = vpop.f32.mrb[0].mxu0
        %v2093 = vadd.f32 %v1921, %v2092
        %v2094 = vpop.f32.mrb[0].mxu0
        %v2095 = vadd.f32 %v1925, %v2094
        %v2096 = vpop.f32.mrb[0].mxu0
        %v2097 = vadd.f32 %v1921, %v2096
        %v2098 = vpop.f32.mrb[0].mxu0
        %v2099 = vadd.f32 %v1925, %v2098
        %2100 = vmatprep.mubr.bf16.mxu0 0
        %2101 = vmatmul.mubr.bf16.gmra.mrb[0].mxu0 %v1874
        %v2102 = vpop.f32.mrb[0].mxu0
        %v2103 = vadd.f32 %v1921, %v2102
        %v2104 = vpop.f32.mrb[0].mxu0
        %v2105 = vadd.f32 %v1925, %v2104
        %v2106 = vpop.f32.mrb[0].mxu0
        %v2107 = vadd.f32 %v1921, %v2106
        %v2108 = vpop.f32.mrb[0].mxu0
        %v2109 = vadd.f32 %v1925, %v2108
        %2110 = vmatprep.mubr.bf16.mxu0 0
        %2111 = vmatmul.mubr.bf16.gmra.mrb[0].mxu0 %v1875
        %v2112 = vpop.f32.mrb[0].mxu0
        %v2113 = vadd.f32 %v1921, %v2112
        %v2114 = vpop.f32.mrb[0].mxu0
        %v2115 = vadd.f32 %v1925, %v2114
        %v2116 = vpop.f32.mrb[0].mxu0
        %v2117 = vadd.f32 %v1921, %v2116
        %v2118 = vpop.f32.mrb[0].mxu0
        %v2119 = vadd.f32 %v1925, %v2118
        %2120 = vmatprep.mubr.bf16.mxu0 0
        %2121 = vmatmul.mubr.bf16.gmra.mrb[0].mxu0 %v1876
        %v2122 = vpop.f32.mrb[0].mxu0
        %v2123 = vadd.f32 %v1921, %v2122
        %v2124 = vpop.f32.mrb[0].mxu0
        %v2125 = vadd.f32 %v1925, %v2124
        %v2126 = vpop.f32.mrb[0].mxu0
        %v2127 = vadd.f32 %v1921, %v2126
        %v2128 = vpop.f32.mrb[0].mxu0
        %v2129 = vadd.f32 %v1925, %v2128
        %2130 = vmatprep.mubr.bf16.mxu0 0
        %2131 = vmatmul.mubr.bf16.gmra.mrb[0].mxu0 %v1877
        %v2132 = vpop.f32.mrb[0].mxu0
        %v2133 = vadd.f32 %v1921, %v2132
        %v2134 = vpop.f32.mrb[0].mxu0
        %v2135 = vadd.f32 %v1925, %v2134
        %v2136 = vpop.f32.mrb[0].mxu0
        %v2137 = vadd.f32 %v1921, %v2136
        %v2138 = vpop.f32.mrb[0].mxu0
        %v2139 = vadd.f32 %v1925, %v2138
        %2140 = vmatprep.mubr.bf16.mxu0 0
        %2141 = vmatmul.mubr.bf16.gmra.mrb[0].mxu0 %v1878
        %v2142 = vpop.f32.mrb[0].mxu0
        %v2143 = vadd.f32 %v1921, %v2142
        %v2144 = vpop.f32.mrb[0].mxu0
        %v2145 = vadd.f32 %v1925, %v2144
        %v2146 = vpop.f32.mrb[0].mxu0
        %v2147 = vadd.f32 %v1921, %v2146
        %v2148 = vpop.f32.mrb[0].mxu0
        %v2149 = vadd.f32 %v1925, %v2148
        %2150 = vmatprep.mubr.bf16.mxu0 0
        %2151 = vmatmul.mubr.bf16.gmra.mrb[0].mxu0 %v1879
        %v2152 = vpop.f32.mrb[0].mxu0
        %v2153 = vadd.f32 %v1921, %v2152
        %v2154 = vpop.f32.mrb[0].mxu0
        %v2155 = vadd.f32 %v1925, %v2154
        %v2156 = vpop.f32.mrb[0].mxu0
        %v2157 = vadd.f32 %v1921, %v2156
        %v2158 = vpop.f32.mrb[0].mxu0
        %v2159 = vadd.f32 %v1925, %v2158
        %2160 = vmatprep.mubr.bf16.mxu0 0
        %2161 = vmatmul.mubr.bf16.gmra.mrb[0].mxu0 %v1880
        %v2162 = vpop.f32.mrb[0].mxu0
        %v2163 = vadd.f32 %v1921, %v2162
        %v2164 = vpop.f32.mrb[0].mxu0
        %v2165 = vadd.f32 %v1925, %v2164
        %v2166 = vpop.f32.mrb[0].mxu0
        %v2167 = vadd.f32 %v1921, %v2166
        %v2168 = vpop.f32.mrb[0].mxu0
        %v2169 = vadd.f32 %v1925, %v2168
        %2170 = vmatprep.mubr.bf16.mxu0 0
        %2171 = vmatmul.mubr.bf16.gmra.mrb[0].mxu0 %v1881
        %v2172 = vpop.f32.mrb[0].mxu0
        %v2173 = vadd.f32 %v1921, %v2172
        %v2174 = vpop.f32.mrb[0].mxu0
        %v2175 = vadd.f32 %v1925, %v2174
        %v2176 = vpop.f32.mrb[0].mxu0
        %v2177 = vadd.f32 %v1921, %v2176
        %v2178 = vpop.f32.mrb[0].mxu0
        %v2179 = vadd.f32 %v1925, %v2178
        %2180 = vmatprep.mubr.bf16.mxu0 0
        %2181 = vmatmul.mubr.bf16.gmra.mrb[0].mxu0 %v1882
        %v2182 = vpop.f32.mrb[0].mxu0
        %v2183 = vadd.f32 %v1921, %v2182
        %v2184 = vpop.f32.mrb[0].mxu0
        %v2185 = vadd.f32 %v1925, %v2184
        %v2186 = vpop.f32.mrb[0].mxu0
        %v2187 = vadd.f32 %v1921, %v2186
        %v2188 = vpop.f32.mrb[0].mxu0
        %v2189 = vadd.f32 %v1925, %v2188
        %2190 = vmatprep.mubr.bf16.mxu0 0
        %2191 = vmatmul.mubr.bf16.gmra.mrb[0].mxu0 %v1883
        %v2192 = vpop.f32.mrb[0].mxu0
        %v2193 = vadd.f32 %v1921, %v2192
        %v2194 = vpop.f32.mrb[0].mxu0
        %v2195 = vadd.f32 %v1925, %v2194
        %v2196 = vpop.f32.mrb[0].mxu0
        %v2197 = vadd.f32 %v1921, %v2196
        %v2198 = vpop.f32.mrb[0].mxu0
        %v2199 = vadd.f32 %v1925, %v2198
        %2200 = vmatprep.mubr.bf16.mxu0 0
        %2201 = vmatmul.mubr.bf16.gmra.mrb[0].mxu0 %v1884
        %v2202 = vpop.f32.mrb[0].mxu0
        %v2203 = vadd.f32 %v1921, %v2202
        %v2204 = vpop.f32.mrb[0].mxu0
        %v2205 = vadd.f32 %v1925, %v2204
        %v2206 = vpop.f32.mrb[0].mxu0
        %v2207 = vadd.f32 %v1921, %v2206
        %v2208 = vpop.f32.mrb[0].mxu0
        %v2209 = vadd.f32 %v1925, %v2208
        %2210 = vmatprep.mubr.bf16.mxu0 0
        %2211 = vmatmul.mubr.bf16.gmra.mrb[0].mxu0 %v1885
        %v2212 = vpop.f32.mrb[0].mxu0
        %v2213 = vadd.f32 %v1921, %v2212
        %v2214 = vpop.f32.mrb[0].mxu0
        %v2215 = vadd.f32 %v1925, %v2214
        %v2216 = vpop.f32.mrb[0].mxu0
        %v2217 = vadd.f32 %v1921, %v2216
        %v2218 = vpop.f32.mrb[0].mxu0
        %v2219 = vadd.f32 %v1925, %v2218
        %2220 = vmatprep.mubr.bf16.mxu0 0
        %2221 = vmatmul.mubr.bf16.gmra.mrb[0].mxu0 %v1886
        %v2222 = vpop.f32.mrb[0].mxu0
        %v2223 = vadd.f32 %v1921, %v2222
        %v2224 = vpop.f32.mrb[0].mxu0
        %v2225 = vadd.f32 %v1925, %v2224
        %v2226 = vpop.f32.mrb[0].mxu0
        %v2227 = vadd.f32 %v1921, %v2226
        %v2228 = vpop.f32.mrb[0].mxu0
        %v2229 = vadd.f32 %v1925, %v2228
        %2230 = vmatprep.mubr.bf16.mxu0 0
        %2231 = vmatmul.mubr.bf16.gmra.mrb[0].mxu0 %v1887
        %v2232 = vpop.f32.mrb[0].mxu0
        %v2233 = vadd.f32 %v1921, %v2232
        %v2234 = vpop.f32.mrb[0].mxu0
        %v2235 = vadd.f32 %v1925, %v2234
        %v2236 = vpop.f32.mrb[0].mxu0
        %v2237 = vadd.f32 %v1921, %v2236
        %v2238 = vpop.f32.mrb[0].mxu0
        %v2239 = vadd.f32 %v1925, %v2238
        %2240 = vmatprep.mubr.bf16.mxu0 0
        %2241 = vmatmul.mubr.bf16.gmra.mrb[0].mxu0 %v1888
        %v2242 = vpop.f32.mrb[0].mxu0
        %v2243 = vadd.f32 %v1921, %v2242
        %v2244 = vpop.f32.mrb[0].mxu0
        %v2245 = vadd.f32 %v1925, %v2244
        %v2246 = vpop.f32.mrb[0].mxu0
        %v2247 = vadd.f32 %v1921, %v2246
        %v2248 = vpop.f32.mrb[0].mxu0
        %v2249 = vadd.f32 %v1925, %v2248
        %2250 = vmatprep.mubr.bf16.mxu0 0
        %2251 = vmatmul.mubr.bf16.gmra.mrb[0].mxu0 %v1889
        %v2252 = vpop.f32.mrb[0].mxu0
        %v2253 = vadd.f32 %v1921, %v2252
        %v2254 = vpop.f32.mrb[0].mxu0
        %v2255 = vadd.f32 %v1925, %v2254
        %v2256 = vpop.f32.mrb[0].mxu0
        %v2257 = vadd.f32 %v1921, %v2256
        %v2258 = vpop.f32.mrb[0].mxu0
        %v2259 = vadd.f32 %v1925, %v2258
        %2260 = vmatprep.mubr.bf16.mxu0 0
        %2261 = vmatmul.mubr.bf16.gmra.mrb[0].mxu0 %v1890
        %v2262 = vpop.f32.mrb[0].mxu0
        %v2263 = vadd.f32 %v1921, %v2262
        %v2264 = vpop.f32.mrb[0].mxu0
        %v2265 = vadd.f32 %v1925, %v2264
        %v2266 = vpop.f32.mrb[0].mxu0
        %v2267 = vadd.f32 %v1921, %v2266
        %v2268 = vpop.f32.mrb[0].mxu0
        %v2269 = vadd.f32 %v1925, %v2268
        %2270 = vmatprep.mubr.bf16.mxu0 0
        %2271 = vmatmul.mubr.bf16.gmra.mrb[0].mxu0 %v1891
        %v2272 = vpop.f32.mrb[0].mxu0
        %v2273 = vadd.f32 %v1921, %v2272
        %v2274 = vpop.f32.mrb[0].mxu0
        %v2275 = vadd.f32 %v1925, %v2274
        %v2276 = vpop.f32.mrb[0].mxu0
        %v2277 = vadd.f32 %v1921, %v2276
        %v2278 = vpop.f32.mrb[0].mxu0
        %v2279 = vadd.f32 %v1925, %v2278
        %2280 = vmatprep.mubr.bf16.mxu0 0
        %2281 = vmatmul.mubr.bf16.gmra.mrb[0].mxu0 %v1892
        %v2282 = vpop.f32.mrb[0].mxu0
        %v2283 = vadd.f32 %v1921, %v2282
        %v2284 = vpop.f32.mrb[0].mxu0
        %v2285 = vadd.f32 %v1925, %v2284
        %v2286 = vpop.f32.mrb[0].mxu0
        %v2287 = vadd.f32 %v1921, %v2286
        %v2288 = vpop.f32.mrb[0].mxu0
        %v2289 = vadd.f32 %v1925, %v2288
        %2290 = vmatprep.mubr.bf16.mxu0 0
        %2291 = vmatmul.mubr.bf16.gmra.mrb[0].mxu0 %v1893
        %v2292 = vpop.f32.mrb[0].mxu0
        %v2293 = vadd.f32 %v1921, %v2292
        %v2294 = vpop.f32.mrb[0].mxu0
        %v2295 = vadd.f32 %v1925, %v2294
        %v2296 = vpop.f32.mrb[0].mxu0
        %v2297 = vadd.f32 %v1921, %v2296
        %v2298 = vpop.f32.mrb[0].mxu0
        %v2299 = vadd.f32 %v1925, %v2298
        %2300 = vmatprep.mubr.bf16.mxu0 0
        %2301 = vmatmul.mubr.bf16.gmra.mrb[0].mxu0 %v1894
        %v2302 = vpop.f32.mrb[0].mxu0
        %v2303 = vadd.f32 %v1921, %v2302
        %v2304 = vpop.f32.mrb[0].mxu0
        %v2305 = vadd.f32 %v1925, %v2304
        %v2306 = vpop.f32.mrb[0].mxu0
        %v2307 = vadd.f32 %v1921, %v2306
        %v2308 = vpop.f32.mrb[0].mxu0
        %v2309 = vadd.f32 %v1925, %v2308
        %2310 = vmatprep.mubr.bf16.mxu0 0
        %2311 = vmatmul.mubr.bf16.gmra.mrb[0].mxu0 %v1895
        %v2312 = vpop.f32.mrb[0].mxu0
        %v2313 = vadd.f32 %v1921, %v2312
        %v2314 = vpop.f32.mrb[0].mxu0
        %v2315 = vadd.f32 %v1925, %v2314
        %v2316 = vpop.f32.mrb[0].mxu0
        %v2317 = vadd.f32 %v1921, %v2316
        %v2318 = vpop.f32.mrb[0].mxu0
        %v2319 = vadd.f32 %v1925, %v2318
        %2320 = vmatprep.mubr.bf16.mxu0 0
        %2321 = vmatmul.mubr.bf16.gmra.mrb[0].mxu0 %v1896
        %v2322 = vpop.f32.mrb[0].mxu0
        %v2323 = vadd.f32 %v1921, %v2322
        %v2324 = vpop.f32.mrb[0].mxu0
        %v2325 = vadd.f32 %v1925, %v2324
        %v2326 = vpop.f32.mrb[0].mxu0
        %v2327 = vadd.f32 %v1921, %v2326
        %v2328 = vpop.f32.mrb[0].mxu0
        %v2329 = vadd.f32 %v1925, %v2328
        %2330 = vmatprep.mubr.bf16.mxu0 0
        %2331 = vmatmul.mubr.bf16.gmra.mrb[0].mxu0 %v1897
        %v2332 = vpop.f32.mrb[0].mxu0
        %v2333 = vadd.f32 %v1921, %v2332
        %v2334 = vpop.f32.mrb[0].mxu0
        %v2335 = vadd.f32 %v1925, %v2334
        %v2336 = vpop.f32.mrb[0].mxu0
        %v2337 = vadd.f32 %v1921, %v2336
        %v2338 = vpop.f32.mrb[0].mxu0
        %v2339 = vadd.f32 %v1925, %v2338
        %2340 = vmatprep.mubr.bf16.mxu0 0
        %2341 = vmatmul.mubr.bf16.gmra.mrb[0].mxu0 %v1898
        %v2342 = vpop.f32.mrb[0].mxu0
        %v2343 = vadd.f32 %v1921, %v2342
        %v2344 = vpop.f32.mrb[0].mxu0
        %v2345 = vadd.f32 %v1925, %v2344
        %v2346 = vpop.f32.mrb[0].mxu0
        %v2347 = vadd.f32 %v1921, %v2346
        %v2348 = vpop.f32.mrb[0].mxu0
        %v2349 = vadd.f32 %v1925, %v2348
        %2350 = vmatprep.mubr.bf16.mxu0 0
        %2351 = vmatmul.mubr.bf16.gmra.mrb[0].mxu0 %v1899
        %v2352 = vpop.f32.mrb[0].mxu0
        %v2353 = vadd.f32 %v1921, %v2352
        %v2354 = vpop.f32.mrb[0].mxu0
        %v2355 = vadd.f32 %v1925, %v2354
        %v2356 = vpop.f32.mrb[0].mxu0
        %v2357 = vadd.f32 %v1921, %v2356
        %v2358 = vpop.f32.mrb[0].mxu0
        %v2359 = vadd.f32 %v1925, %v2358
        %2360 = vdwg.mxu0
        %v2361 = vmax.f32 %v2043, %v2047
        %v2362 = vmax.f32 %v2361, %v2053
        %v2363 = vmax.f32 %v2362, %v2057
        %v2364 = vrot.slane %v2363, 4
        %v2365 = vmax.f32 %v2363, %v2364
        %v2366 = vrot.slane %v2365, 2
        %v2367 = vmax.f32 %v2365, %v2366
        %v2368 = vrot.slane %v2367, 1
        %v2369 = vmax.f32 %v2367, %v2368
        %v2370 = vmax.f32 %v2045, %v2049
        %v2371 = vmax.f32 %v2370, %v2055
        %v2372 = vmax.f32 %v2371, %v2059
        %v2373 = vrot.slane %v2372, 4
        %v2374 = vmax.f32 %v2372, %v2373
        %v2375 = vrot.slane %v2374, 2
        %v2376 = vmax.f32 %v2374, %v2375
        %v2377 = vrot.slane %v2376, 1
        %v2378 = vmax.f32 %v2376, %v2377
        %v2379 = vmax.f32 %v2063, %v2067
        %v2380 = vmax.f32 %v2379, %v2073
        %v2381 = vmax.f32 %v2380, %v2077
        %v2382 = vrot.slane %v2381, 4
        %v2383 = vmax.f32 %v2381, %v2382
        %v2384 = vrot.slane %v2383, 2
        %v2385 = vmax.f32 %v2383, %v2384
        %v2386 = vrot.slane %v2385, 1
        %v2387 = vmax.f32 %v2385, %v2386
        %v2388 = vmax.f32 %v2065, %v2069
        %v2389 = vmax.f32 %v2388, %v2075
        %v2390 = vmax.f32 %v2389, %v2079
        %v2391 = vrot.slane %v2390, 4
        %v2392 = vmax.f32 %v2390, %v2391
        %v2393 = vrot.slane %v2392, 2
        %v2394 = vmax.f32 %v2392, %v2393
        %v2395 = vrot.slane %v2394, 1
        %v2396 = vmax.f32 %v2394, %v2395
        %v2397 = vmax.f32 %v2083, %v2087
        %v2398 = vmax.f32 %v2397, %v2093
        %v2399 = vmax.f32 %v2398, %v2097
        %v2400 = vrot.slane %v2399, 4
        %v2401 = vmax.f32 %v2399, %v2400
        %v2402 = vrot.slane %v2401, 2
        %v2403 = vmax.f32 %v2401, %v2402
        %v2404 = vrot.slane %v2403, 1
        %v2405 = vmax.f32 %v2403, %v2404
        %v2406 = vmax.f32 %v2085, %v2089
        %v2407 = vmax.f32 %v2406, %v2095
        %v2408 = vmax.f32 %v2407, %v2099
        %v2409 = vrot.slane %v2408, 4
        %v2410 = vmax.f32 %v2408, %v2409
        %v2411 = vrot.slane %v2410, 2
        %v2412 = vmax.f32 %v2410, %v2411
        %v2413 = vrot.slane %v2412, 1
        %v2414 = vmax.f32 %v2412, %v2413
        %v2415 = vmax.f32 %v2103, %v2107
        %v2416 = vmax.f32 %v2415, %v2113
        %v2417 = vmax.f32 %v2416, %v2117
        %v2418 = vrot.slane %v2417, 4
        %v2419 = vmax.f32 %v2417, %v2418
        %v2420 = vrot.slane %v2419, 2
        %v2421 = vmax.f32 %v2419, %v2420
        %v2422 = vrot.slane %v2421, 1
        %v2423 = vmax.f32 %v2421, %v2422
        %v2424 = vmax.f32 %v2105, %v2109
        %v2425 = vmax.f32 %v2424, %v2115
        %v2426 = vmax.f32 %v2425, %v2119
        %v2427 = vrot.slane %v2426, 4
        %v2428 = vmax.f32 %v2426, %v2427
        %v2429 = vrot.slane %v2428, 2
        %v2430 = vmax.f32 %v2428, %v2429
        %v2431 = vrot.slane %v2430, 1
        %v2432 = vmax.f32 %v2430, %v2431
        %v2433 = vmax.f32 %v2123, %v2127
        %v2434 = vmax.f32 %v2433, %v2133
        %v2435 = vmax.f32 %v2434, %v2137
        %v2436 = vrot.slane %v2435, 4
        %v2437 = vmax.f32 %v2435, %v2436
        %v2438 = vrot.slane %v2437, 2
        %v2439 = vmax.f32 %v2437, %v2438
        %v2440 = vrot.slane %v2439, 1
        %v2441 = vmax.f32 %v2439, %v2440
        %v2442 = vmax.f32 %v2125, %v2129
        %v2443 = vmax.f32 %v2442, %v2135
        %v2444 = vmax.f32 %v2443, %v2139
        %v2445 = vrot.slane %v2444, 4
        %v2446 = vmax.f32 %v2444, %v2445
        %v2447 = vrot.slane %v2446, 2
        %v2448 = vmax.f32 %v2446, %v2447
        %v2449 = vrot.slane %v2448, 1
        %v2450 = vmax.f32 %v2448, %v2449
        %v2451 = vmax.f32 %v2143, %v2147
        %v2452 = vmax.f32 %v2451, %v2153
        %v2453 = vmax.f32 %v2452, %v2157
        %v2454 = vrot.slane %v2453, 4
        %v2455 = vmax.f32 %v2453, %v2454
        %v2456 = vrot.slane %v2455, 2
        %v2457 = vmax.f32 %v2455, %v2456
        %v2458 = vrot.slane %v2457, 1
        %v2459 = vmax.f32 %v2457, %v2458
        %v2460 = vmax.f32 %v2145, %v2149
        %v2461 = vmax.f32 %v2460, %v2155
        %v2462 = vmax.f32 %v2461, %v2159
        %v2463 = vrot.slane %v2462, 4
        %v2464 = vmax.f32 %v2462, %v2463
        %v2465 = vrot.slane %v2464, 2
        %v2466 = vmax.f32 %v2464, %v2465
        %v2467 = vrot.slane %v2466, 1
        %v2468 = vmax.f32 %v2466, %v2467
        %v2469 = vmax.f32 %v2163, %v2167
        %v2470 = vmax.f32 %v2469, %v2173
        %v2471 = vmax.f32 %v2470, %v2177
        %v2472 = vrot.slane %v2471, 4
        %v2473 = vmax.f32 %v2471, %v2472
        %v2474 = vrot.slane %v2473, 2
        %v2475 = vmax.f32 %v2473, %v2474
        %v2476 = vrot.slane %v2475, 1
        %v2477 = vmax.f32 %v2475, %v2476
        %v2478 = vmax.f32 %v2165, %v2169
        %v2479 = vmax.f32 %v2478, %v2175
        %v2480 = vmax.f32 %v2479, %v2179
        %v2481 = vrot.slane %v2480, 4
        %v2482 = vmax.f32 %v2480, %v2481
        %v2483 = vrot.slane %v2482, 2
        %v2484 = vmax.f32 %v2482, %v2483
        %v2485 = vrot.slane %v2484, 1
        %v2486 = vmax.f32 %v2484, %v2485
        %v2487 = vmax.f32 %v2183, %v2187
        %v2488 = vmax.f32 %v2487, %v2193
        %v2489 = vmax.f32 %v2488, %v2197
        %v2490 = vrot.slane %v2489, 4
        %v2491 = vmax.f32 %v2489, %v2490
        %v2492 = vrot.slane %v2491, 2
        %v2493 = vmax.f32 %v2491, %v2492
        %v2494 = vrot.slane %v2493, 1
        %v2495 = vmax.f32 %v2493, %v2494
        %v2496 = vmax.f32 %v2185, %v2189
        %v2497 = vmax.f32 %v2496, %v2195
        %v2498 = vmax.f32 %v2497, %v2199
        %v2499 = vrot.slane %v2498, 4
        %v2500 = vmax.f32 %v2498, %v2499
        %v2501 = vrot.slane %v2500, 2
        %v2502 = vmax.f32 %v2500, %v2501
        %v2503 = vrot.slane %v2502, 1
        %v2504 = vmax.f32 %v2502, %v2503
        %v2505 = vmax.f32 %v2203, %v2207
        %v2506 = vmax.f32 %v2505, %v2213
        %v2507 = vmax.f32 %v2506, %v2217
        %v2508 = vrot.slane %v2507, 4
        %v2509 = vmax.f32 %v2507, %v2508
        %v2510 = vrot.slane %v2509, 2
        %v2511 = vmax.f32 %v2509, %v2510
        %v2512 = vrot.slane %v2511, 1
        %v2513 = vmax.f32 %v2511, %v2512
        %v2514 = vmax.f32 %v2205, %v2209
        %v2515 = vmax.f32 %v2514, %v2215
        %v2516 = vmax.f32 %v2515, %v2219
        %v2517 = vrot.slane %v2516, 4
        %v2518 = vmax.f32 %v2516, %v2517
        %v2519 = vrot.slane %v2518, 2
        %v2520 = vmax.f32 %v2518, %v2519
        %v2521 = vrot.slane %v2520, 1
        %v2522 = vmax.f32 %v2520, %v2521
        %v2523 = vmax.f32 %v2223, %v2227
        %v2524 = vmax.f32 %v2523, %v2233
        %v2525 = vmax.f32 %v2524, %v2237
        %v2526 = vrot.slane %v2525, 4
        %v2527 = vmax.f32 %v2525, %v2526
        %v2528 = vrot.slane %v2527, 2
        %v2529 = vmax.f32 %v2527, %v2528
        %v2530 = vrot.slane %v2529, 1
        %v2531 = vmax.f32 %v2529, %v2530
        %v2532 = vmax.f32 %v2225, %v2229
        %v2533 = vmax.f32 %v2532, %v2235
        %v2534 = vmax.f32 %v2533, %v2239
        %v2535 = vrot.slane %v2534, 4
        %v2536 = vmax.f32 %v2534, %v2535
        %v2537 = vrot.slane %v2536, 2
        %v2538 = vmax.f32 %v2536, %v2537
        %v2539 = vrot.slane %v2538, 1
        %v2540 = vmax.f32 %v2538, %v2539
        %v2541 = vmax.f32 %v2243, %v2247
        %v2542 = vmax.f32 %v2541, %v2253
        %v2543 = vmax.f32 %v2542, %v2257
        %v2544 = vrot.slane %v2543, 4
        %v2545 = vmax.f32 %v2543, %v2544
        %v2546 = vrot.slane %v2545, 2
        %v2547 = vmax.f32 %v2545, %v2546
        %v2548 = vrot.slane %v2547, 1
        %v2549 = vmax.f32 %v2547, %v2548
        %v2550 = vmax.f32 %v2245, %v2249
        %v2551 = vmax.f32 %v2550, %v2255
        %v2552 = vmax.f32 %v2551, %v2259
        %v2553 = vrot.slane %v2552, 4
        %v2554 = vmax.f32 %v2552, %v2553
        %v2555 = vrot.slane %v2554, 2
        %v2556 = vmax.f32 %v2554, %v2555
        %v2557 = vrot.slane %v2556, 1
        %v2558 = vmax.f32 %v2556, %v2557
        %v2559 = vmax.f32 %v2263, %v2267
        %v2560 = vmax.f32 %v2559, %v2273
        %v2561 = vmax.f32 %v2560, %v2277
        %v2562 = vrot.slane %v2561, 4
        %v2563 = vmax.f32 %v2561, %v2562
        %v2564 = vrot.slane %v2563, 2
        %v2565 = vmax.f32 %v2563, %v2564
        %v2566 = vrot.slane %v2565, 1
        %v2567 = vmax.f32 %v2565, %v2566
        %v2568 = vmax.f32 %v2265, %v2269
        %v2569 = vmax.f32 %v2568, %v2275
        %v2570 = vmax.f32 %v2569, %v2279
        %v2571 = vrot.slane %v2570, 4
        %v2572 = vmax.f32 %v2570, %v2571
        %v2573 = vrot.slane %v2572, 2
        %v2574 = vmax.f32 %v2572, %v2573
        %v2575 = vrot.slane %v2574, 1
        %v2576 = vmax.f32 %v2574, %v2575
        %v2577 = vmax.f32 %v2283, %v2287
        %v2578 = vmax.f32 %v2577, %v2293
        %v2579 = vmax.f32 %v2578, %v2297
        %v2580 = vrot.slane %v2579, 4
        %v2581 = vmax.f32 %v2579, %v2580
        %v2582 = vrot.slane %v2581, 2
        %v2583 = vmax.f32 %v2581, %v2582
        %v2584 = vrot.slane %v2583, 1
        %v2585 = vmax.f32 %v2583, %v2584
        %v2586 = vmax.f32 %v2285, %v2289
        %v2587 = vmax.f32 %v2586, %v2295
        %v2588 = vmax.f32 %v2587, %v2299
        %v2589 = vrot.slane %v2588, 4
        %v2590 = vmax.f32 %v2588, %v2589
        %v2591 = vrot.slane %v2590, 2
        %v2592 = vmax.f32 %v2590, %v2591
        %v2593 = vrot.slane %v2592, 1
        %v2594 = vmax.f32 %v2592, %v2593
        %v2595 = vmax.f32 %v2303, %v2307
        %v2596 = vmax.f32 %v2595, %v2313
        %v2597 = vmax.f32 %v2596, %v2317
        %v2598 = vrot.slane %v2597, 4
        %v2599 = vmax.f32 %v2597, %v2598
        %v2600 = vrot.slane %v2599, 2
        %v2601 = vmax.f32 %v2599, %v2600
        %v2602 = vrot.slane %v2601, 1
        %v2603 = vmax.f32 %v2601, %v2602
        %v2604 = vmax.f32 %v2305, %v2309
        %v2605 = vmax.f32 %v2604, %v2315
        %v2606 = vmax.f32 %v2605, %v2319
        %v2607 = vrot.slane %v2606, 4
        %v2608 = vmax.f32 %v2606, %v2607
        %v2609 = vrot.slane %v2608, 2
        %v2610 = vmax.f32 %v2608, %v2609
        %v2611 = vrot.slane %v2610, 1
        %v2612 = vmax.f32 %v2610, %v2611
        %v2613 = vmax.f32 %v2323, %v2327
        %v2614 = vmax.f32 %v2613, %v2333
        %v2615 = vmax.f32 %v2614, %v2337
        %v2616 = vrot.slane %v2615, 4
        %v2617 = vmax.f32 %v2615, %v2616
        %v2618 = vrot.slane %v2617, 2
        %v2619 = vmax.f32 %v2617, %v2618
        %v2620 = vrot.slane %v2619, 1
        %v2621 = vmax.f32 %v2619, %v2620
        %v2622 = vmax.f32 %v2325, %v2329
        %v2623 = vmax.f32 %v2622, %v2335
        %v2624 = vmax.f32 %v2623, %v2339
        %v2625 = vrot.slane %v2624, 4
        %v2626 = vmax.f32 %v2624, %v2625
        %v2627 = vrot.slane %v2626, 2
        %v2628 = vmax.f32 %v2626, %v2627
        %v2629 = vrot.slane %v2628, 1
        %v2630 = vmax.f32 %v2628, %v2629
        %v2631 = vmax.f32 %v2343, %v2347
        %v2632 = vmax.f32 %v2631, %v2353
        %v2633 = vmax.f32 %v2632, %v2357
        %v2634 = vrot.slane %v2633, 4
        %v2635 = vmax.f32 %v2633, %v2634
        %v2636 = vrot.slane %v2635, 2
        %v2637 = vmax.f32 %v2635, %v2636
        %v2638 = vrot.slane %v2637, 1
        %v2639 = vmax.f32 %v2637, %v2638
        %v2640 = vmax.f32 %v2345, %v2349
        %v2641 = vmax.f32 %v2640, %v2355
        %v2642 = vmax.f32 %v2641, %v2359
        %v2643 = vrot.slane %v2642, 4
        %v2644 = vmax.f32 %v2642, %v2643
        %v2645 = vrot.slane %v2644, 2
        %v2646 = vmax.f32 %v2644, %v2645
        %v2647 = vrot.slane %v2646, 1
        %v2648 = vmax.f32 %v2646, %v2647
        %v2649 = vpack.c.bf16 %v2369, %v2369
        %v2650 = vpack.c.bf16 %v2378, %v2378
        %v2651 = vpack.c.bf16 %v2387, %v2387
        %v2652 = vpack.c.bf16 %v2396, %v2396
        %v2653 = vpack.c.bf16 %v2405, %v2405
        %v2654 = vpack.c.bf16 %v2414, %v2414
        %v2655 = vpack.c.bf16 %v2423, %v2423
        %v2656 = vpack.c.bf16 %v2432, %v2432
        %v2657 = vpack.c.bf16 %v2441, %v2441
        %v2658 = vpack.c.bf16 %v2450, %v2450
        %v2659 = vpack.c.bf16 %v2459, %v2459
        %v2660 = vpack.c.bf16 %v2468, %v2468
        %v2661 = vpack.c.bf16 %v2477, %v2477
        %v2662 = vpack.c.bf16 %v2486, %v2486
        %v2663 = vpack.c.bf16 %v2495, %v2495
        %v2664 = vpack.c.bf16 %v2504, %v2504
        %v2665 = vpack.c.bf16 %v2513, %v2513
        %v2666 = vpack.c.bf16 %v2522, %v2522
        %v2667 = vpack.c.bf16 %v2531, %v2531
        %v2668 = vpack.c.bf16 %v2540, %v2540
        %v2669 = vpack.c.bf16 %v2549, %v2549
        %v2670 = vpack.c.bf16 %v2558, %v2558
        %v2671 = vpack.c.bf16 %v2567, %v2567
        %v2672 = vpack.c.bf16 %v2576, %v2576
        %v2673 = vpack.c.bf16 %v2585, %v2585
        %v2674 = vpack.c.bf16 %v2594, %v2594
        %v2675 = vpack.c.bf16 %v2603, %v2603
        %v2676 = vpack.c.bf16 %v2612, %v2612
        %v2677 = vpack.c.bf16 %v2621, %v2621
        %v2678 = vpack.c.bf16 %v2630, %v2630
        %v2679 = vpack.c.bf16 %v2639, %v2639
        %v2680 = vpack.c.bf16 %v2648, %v2648
        %v2681 = vld [vmem:[#allocation11] sm:$0xff]
        %v2682 = vld [vmem:[#allocation11 + $0x8] sm:$0xff]
        %v2683 = vld [vmem:[#allocation11 + $0x10] sm:$0xff]
        %v2684 = vld [vmem:[#allocation11 + $0x18] sm:$0xff]
        %v2685 = vld [vmem:[#allocation11 + $0x20] sm:$0xff]
        %v2686 = vld [vmem:[#allocation11 + $0x28] sm:$0xff]
        %v2687 = vld [vmem:[#allocation11 + $0x30] sm:$0xff]
        %v2688 = vld [vmem:[#allocation11 + $0x38] sm:$0xff]
        %v2689 = vld [vmem:[#allocation11 + $0x40] sm:$0xff]
        %v2690 = vld [vmem:[#allocation11 + $0x48] sm:$0xff]
        %v2691 = vld [vmem:[#allocation11 + $0x50] sm:$0xff]
        %v2692 = vld [vmem:[#allocation11 + $0x58] sm:$0xff]
        %v2693 = vld [vmem:[#allocation11 + $0x60] sm:$0xff]
        %v2694 = vld [vmem:[#allocation11 + $0x68] sm:$0xff]
        %v2695 = vld [vmem:[#allocation11 + $0x70] sm:$0xff]
        %v2696 = vld [vmem:[#allocation11 + $0x78] sm:$0xff]
        %v2697 = vld [vmem:[#allocation11 + $0x80] sm:$0xff]
        %v2698 = vld [vmem:[#allocation11 + $0x88] sm:$0xff]
        %v2699 = vld [vmem:[#allocation11 + $0x90] sm:$0xff]
        %v2700 = vld [vmem:[#allocation11 + $0x98] sm:$0xff]
        %v2701 = vld [vmem:[#allocation11 + $0xa0] sm:$0xff]
        %v2702 = vld [vmem:[#allocation11 + $0xa8] sm:$0xff]
        %v2703 = vld [vmem:[#allocation11 + $0xb0] sm:$0xff]
        %v2704 = vld [vmem:[#allocation11 + $0xb8] sm:$0xff]
        %v2705 = vld [vmem:[#allocation11 + $0xc0] sm:$0xff]
        %v2706 = vld [vmem:[#allocation11 + $0xc8] sm:$0xff]
        %v2707 = vld [vmem:[#allocation11 + $0xd0] sm:$0xff]
        %v2708 = vld [vmem:[#allocation11 + $0xd8] sm:$0xff]
        %v2709 = vld [vmem:[#allocation11 + $0xe0] sm:$0xff]
        %v2710 = vld [vmem:[#allocation11 + $0xe8] sm:$0xff]
        %v2711 = vld [vmem:[#allocation11 + $0xf0] sm:$0xff]
        %v2712 = vld [vmem:[#allocation11 + $0xf8] sm:$0xff]
        %v2713 = vld [vmem:[#allocation11 + $0x100] sm:$0xff]
        %v2714 = vld [vmem:[#allocation11 + $0x108] sm:$0xff]
        %v2715 = vld [vmem:[#allocation11 + $0x110] sm:$0xff]
        %v2716 = vld [vmem:[#allocation11 + $0x118] sm:$0xff]
        %v2717 = vld [vmem:[#allocation11 + $0x120] sm:$0xff]
        %v2718 = vld [vmem:[#allocation11 + $0x128] sm:$0xff]
        %v2719 = vld [vmem:[#allocation11 + $0x130] sm:$0xff]
        %v2720 = vld [vmem:[#allocation11 + $0x138] sm:$0xff]
        %v2721 = vld [vmem:[#allocation11 + $0x140] sm:$0xff]
        %v2722 = vld [vmem:[#allocation11 + $0x148] sm:$0xff]
        %v2723 = vld [vmem:[#allocation11 + $0x150] sm:$0xff]
        %v2724 = vld [vmem:[#allocation11 + $0x158] sm:$0xff]
        %v2725 = vld [vmem:[#allocation11 + $0x160] sm:$0xff]
        %v2726 = vld [vmem:[#allocation11 + $0x168] sm:$0xff]
        %v2727 = vld [vmem:[#allocation11 + $0x170] sm:$0xff]
        %v2728 = vld [vmem:[#allocation11 + $0x178] sm:$0xff]
        %v2729 = vld [vmem:[#allocation11 + $0x180] sm:$0xff]
        %v2730 = vld [vmem:[#allocation11 + $0x188] sm:$0xff]
        %v2731 = vld [vmem:[#allocation11 + $0x190] sm:$0xff]
        %v2732 = vld [vmem:[#allocation11 + $0x198] sm:$0xff]
        %v2733 = vld [vmem:[#allocation11 + $0x1a0] sm:$0xff]
        %v2734 = vld [vmem:[#allocation11 + $0x1a8] sm:$0xff]
        %v2735 = vld [vmem:[#allocation11 + $0x1b0] sm:$0xff]
        %v2736 = vld [vmem:[#allocation11 + $0x1b8] sm:$0xff]
        %v2737 = vld [vmem:[#allocation11 + $0x1c0] sm:$0xff]
        %v2738 = vld [vmem:[#allocation11 + $0x1c8] sm:$0xff]
        %v2739 = vld [vmem:[#allocation11 + $0x1d0] sm:$0xff]
        %v2740 = vld [vmem:[#allocation11 + $0x1d8] sm:$0xff]
        %v2741 = vld [vmem:[#allocation11 + $0x1e0] sm:$0xff]
        %v2742 = vld [vmem:[#allocation11 + $0x1e8] sm:$0xff]
        %v2743 = vld [vmem:[#allocation11 + $0x1f0] sm:$0xff]
        %v2744 = vld [vmem:[#allocation11 + $0x1f8] sm:$0xff]
        %v2777 = vunpack.c.l.b16 %v2649
        %v2778 = vunpack.c.l.b16 %v2650
        %v2779 = vunpack.c.l.b16 %v2651
        %v2780 = vunpack.c.l.b16 %v2652
        %v2781 = vunpack.c.l.b16 %v2653
        %v2782 = vunpack.c.l.b16 %v2654
        %v2783 = vunpack.c.l.b16 %v2655
        %v2784 = vunpack.c.l.b16 %v2656
        %v2785 = vunpack.c.l.b16 %v2657
        %v2786 = vunpack.c.l.b16 %v2658
        %v2787 = vunpack.c.l.b16 %v2659
        %v2788 = vunpack.c.l.b16 %v2660
        %v2789 = vunpack.c.l.b16 %v2661
        %v2790 = vunpack.c.l.b16 %v2662
        %v2791 = vunpack.c.l.b16 %v2663
        %v2792 = vunpack.c.l.b16 %v2664
        %v2793 = vunpack.c.l.b16 %v2665
        %v2794 = vunpack.c.l.b16 %v2666
        %v2795 = vunpack.c.l.b16 %v2667
        %v2796 = vunpack.c.l.b16 %v2668
        %v2797 = vunpack.c.l.b16 %v2669
        %v2798 = vunpack.c.l.b16 %v2670
        %v2799 = vunpack.c.l.b16 %v2671
        %v2800 = vunpack.c.l.b16 %v2672
        %v2801 = vunpack.c.l.b16 %v2673
        %v2802 = vunpack.c.l.b16 %v2674
        %v2803 = vunpack.c.l.b16 %v2675
        %v2804 = vunpack.c.l.b16 %v2676
        %v2805 = vunpack.c.l.b16 %v2677
        %v2806 = vunpack.c.l.b16 %v2678
        %v2807 = vunpack.c.l.b16 %v2679
        %v2808 = vunpack.c.l.b16 %v2680
        %vm2809 = vcmask 1041409
        %v2810 = vsel %vm2809, %v2779, %v2777
        %vm2811 = vcmask 1042434
        %v2812 = vsel %vm2811, %v2781, %v2810
        %vm2813 = vcmask 1043459
        %v2814 = vsel %vm2813, %v2783, %v2812
        %vm2815 = vcmask 1044484
        %v2816 = vsel %vm2815, %v2785, %v2814
        %vm2817 = vcmask 1045509
        %v2818 = vsel %vm2817, %v2787, %v2816
        %vm2819 = vcmask 1046534
        %v2820 = vsel %vm2819, %v2789, %v2818
        %vm2821 = vcmask 1047559
        %v2822 = vsel %vm2821, %v2791, %v2820
        %v2823 = vsel %vm2809, %v2780, %v2778
        %v2824 = vsel %vm2811, %v2782, %v2823
        %v2825 = vsel %vm2813, %v2784, %v2824
        %v2826 = vsel %vm2815, %v2786, %v2825
        %v2827 = vsel %vm2817, %v2788, %v2826
        %v2828 = vsel %vm2819, %v2790, %v2827
        %v2829 = vsel %vm2821, %v2792, %v2828
        %v2830 = vsel %vm2809, %v2795, %v2793
        %v2831 = vsel %vm2811, %v2797, %v2830
        %v2832 = vsel %vm2813, %v2799, %v2831
        %v2833 = vsel %vm2815, %v2801, %v2832
        %v2834 = vsel %vm2817, %v2803, %v2833
        %v2835 = vsel %vm2819, %v2805, %v2834
        %v2836 = vsel %vm2821, %v2807, %v2835
        %v2837 = vsel %vm2809, %v2796, %v2794
        %v2838 = vsel %vm2811, %v2798, %v2837
        %v2839 = vsel %vm2813, %v2800, %v2838
        %v2840 = vsel %vm2815, %v2802, %v2839
        %v2841 = vsel %vm2817, %v2804, %v2840
        %v2842 = vsel %vm2819, %v2806, %v2841
        %v2843 = vsel %vm2821, %v2808, %v2842
        %v2844 = vpack.c.b16 %v2836, %v2822
        %v2845 = vpack.c.b16 %v2843, %v2829
        %v2912 = vunpack.c.l.b16 %v2681
        %v2913 = vunpack.c.h.b16 %v2681
        %v2914 = vunpack.c.l.b16 %v2682
        %v2915 = vunpack.c.h.b16 %v2682
        %v2916 = vunpack.c.l.b16 %v2683
        %v2917 = vunpack.c.h.b16 %v2683
        %v2918 = vunpack.c.l.b16 %v2684
        %v2919 = vunpack.c.h.b16 %v2684
        %v2920 = vunpack.c.l.b16 %v2685
        %v2921 = vunpack.c.h.b16 %v2685
        %v2922 = vunpack.c.l.b16 %v2686
        %v2923 = vunpack.c.h.b16 %v2686
        %v2924 = vunpack.c.l.b16 %v2687
        %v2925 = vunpack.c.h.b16 %v2687
        %v2926 = vunpack.c.l.b16 %v2688
        %v2927 = vunpack.c.h.b16 %v2688
        %v2928 = vunpack.c.l.b16 %v2689
        %v2929 = vunpack.c.h.b16 %v2689
        %v2930 = vunpack.c.l.b16 %v2690
        %v2931 = vunpack.c.h.b16 %v2690
        %v2932 = vunpack.c.l.b16 %v2691
        %v2933 = vunpack.c.h.b16 %v2691
        %v2934 = vunpack.c.l.b16 %v2692
        %v2935 = vunpack.c.h.b16 %v2692
        %v2936 = vunpack.c.l.b16 %v2693
        %v2937 = vunpack.c.h.b16 %v2693
        %v2938 = vunpack.c.l.b16 %v2694
        %v2939 = vunpack.c.h.b16 %v2694
        %v2940 = vunpack.c.l.b16 %v2695
        %v2941 = vunpack.c.h.b16 %v2695
        %v2942 = vunpack.c.l.b16 %v2696
        %v2943 = vunpack.c.h.b16 %v2696
        %v2944 = vunpack.c.l.b16 %v2697
        %v2945 = vunpack.c.h.b16 %v2697
        %v2946 = vunpack.c.l.b16 %v2698
        %v2947 = vunpack.c.h.b16 %v2698
        %v2948 = vunpack.c.l.b16 %v2699
        %v2949 = vunpack.c.h.b16 %v2699
        %v2950 = vunpack.c.l.b16 %v2700
        %v2951 = vunpack.c.h.b16 %v2700
        %v2952 = vunpack.c.l.b16 %v2701
        %v2953 = vunpack.c.h.b16 %v2701
        %v2954 = vunpack.c.l.b16 %v2702
        %v2955 = vunpack.c.h.b16 %v2702
        %v2956 = vunpack.c.l.b16 %v2703
        %v2957 = vunpack.c.h.b16 %v2703
        %v2958 = vunpack.c.l.b16 %v2704
        %v2959 = vunpack.c.h.b16 %v2704
        %v2960 = vunpack.c.l.b16 %v2705
        %v2961 = vunpack.c.h.b16 %v2705
        %v2962 = vunpack.c.l.b16 %v2706
        %v2963 = vunpack.c.h.b16 %v2706
        %v2964 = vunpack.c.l.b16 %v2707
        %v2965 = vunpack.c.h.b16 %v2707
        %v2966 = vunpack.c.l.b16 %v2708
        %v2967 = vunpack.c.h.b16 %v2708
        %v2968 = vunpack.c.l.b16 %v2709
        %v2969 = vunpack.c.h.b16 %v2709
        %v2970 = vunpack.c.l.b16 %v2710
        %v2971 = vunpack.c.h.b16 %v2710
        %v2972 = vunpack.c.l.b16 %v2711
        %v2973 = vunpack.c.h.b16 %v2711
        %v2974 = vunpack.c.l.b16 %v2712
        %v2975 = vunpack.c.h.b16 %v2712
        %v2976 = vunpack.c.l.b16 %v2713
        %v2977 = vunpack.c.h.b16 %v2713
        %v2978 = vunpack.c.l.b16 %v2714
        %v2979 = vunpack.c.h.b16 %v2714
        %v2980 = vunpack.c.l.b16 %v2715
        %v2981 = vunpack.c.h.b16 %v2715
        %v2982 = vunpack.c.l.b16 %v2716
        %v2983 = vunpack.c.h.b16 %v2716
        %v2984 = vunpack.c.l.b16 %v2717
        %v2985 = vunpack.c.h.b16 %v2717
        %v2986 = vunpack.c.l.b16 %v2718
        %v2987 = vunpack.c.h.b16 %v2718
        %v2988 = vunpack.c.l.b16 %v2719
        %v2989 = vunpack.c.h.b16 %v2719
        %v2990 = vunpack.c.l.b16 %v2720
        %v2991 = vunpack.c.h.b16 %v2720
        %v2992 = vunpack.c.l.b16 %v2721
        %v2993 = vunpack.c.h.b16 %v2721
        %v2994 = vunpack.c.l.b16 %v2722
        %v2995 = vunpack.c.h.b16 %v2722
        %v2996 = vunpack.c.l.b16 %v2723
        %v2997 = vunpack.c.h.b16 %v2723
        %v2998 = vunpack.c.l.b16 %v2724
        %v2999 = vunpack.c.h.b16 %v2724
        %v3000 = vunpack.c.l.b16 %v2725
        %v3001 = vunpack.c.h.b16 %v2725
        %v3002 = vunpack.c.l.b16 %v2726
        %v3003 = vunpack.c.h.b16 %v2726
        %v3004 = vunpack.c.l.b16 %v2727
        %v3005 = vunpack.c.h.b16 %v2727
        %v3006 = vunpack.c.l.b16 %v2728
        %v3007 = vunpack.c.h.b16 %v2728
        %v3008 = vunpack.c.l.b16 %v2729
        %v3009 = vunpack.c.h.b16 %v2729
        %v3010 = vunpack.c.l.b16 %v2730
        %v3011 = vunpack.c.h.b16 %v2730
        %v3012 = vunpack.c.l.b16 %v2731
        %v3013 = vunpack.c.h.b16 %v2731
        %v3014 = vunpack.c.l.b16 %v2732
        %v3015 = vunpack.c.h.b16 %v2732
        %v3016 = vunpack.c.l.b16 %v2733
        %v3017 = vunpack.c.h.b16 %v2733
        %v3018 = vunpack.c.l.b16 %v2734
        %v3019 = vunpack.c.h.b16 %v2734
        %v3020 = vunpack.c.l.b16 %v2735
        %v3021 = vunpack.c.h.b16 %v2735
        %v3022 = vunpack.c.l.b16 %v2736
        %v3023 = vunpack.c.h.b16 %v2736
        %v3024 = vunpack.c.l.b16 %v2737
        %v3025 = vunpack.c.h.b16 %v2737
        %v3026 = vunpack.c.l.b16 %v2738
        %v3027 = vunpack.c.h.b16 %v2738
        %v3028 = vunpack.c.l.b16 %v2739
        %v3029 = vunpack.c.h.b16 %v2739
        %v3030 = vunpack.c.l.b16 %v2740
        %v3031 = vunpack.c.h.b16 %v2740
        %v3032 = vunpack.c.l.b16 %v2741
        %v3033 = vunpack.c.h.b16 %v2741
        %v3034 = vunpack.c.l.b16 %v2742
        %v3035 = vunpack.c.h.b16 %v2742
        %v3036 = vunpack.c.l.b16 %v2743
        %v3037 = vunpack.c.h.b16 %v2743
        %v3038 = vunpack.c.l.b16 %v2744
        %v3039 = vunpack.c.h.b16 %v2744
        %v3040 = vpack.c.b16 %v2916, %v2912
        %v3041 = vpack.c.b16 %v2917, %v2913
        %v3042 = vpack.c.b16 %v2918, %v2914
        %v3043 = vpack.c.b16 %v2919, %v2915
        %v3044 = vpack.c.b16 %v2924, %v2920
        %v3045 = vpack.c.b16 %v2925, %v2921
        %v3046 = vpack.c.b16 %v2926, %v2922
        %v3047 = vpack.c.b16 %v2927, %v2923
        %v3048 = vpack.c.b16 %v2932, %v2928
        %v3049 = vpack.c.b16 %v2933, %v2929
        %v3050 = vpack.c.b16 %v2934, %v2930
        %v3051 = vpack.c.b16 %v2935, %v2931
        %v3052 = vpack.c.b16 %v2940, %v2936
        %v3053 = vpack.c.b16 %v2941, %v2937
        %v3054 = vpack.c.b16 %v2942, %v2938
        %v3055 = vpack.c.b16 %v2943, %v2939
        %v3056 = vpack.c.b16 %v2948, %v2944
        %v3057 = vpack.c.b16 %v2949, %v2945
        %v3058 = vpack.c.b16 %v2950, %v2946
        %v3059 = vpack.c.b16 %v2951, %v2947
        %v3060 = vpack.c.b16 %v2956, %v2952
        %v3061 = vpack.c.b16 %v2957, %v2953
        %v3062 = vpack.c.b16 %v2958, %v2954
        %v3063 = vpack.c.b16 %v2959, %v2955
        %v3064 = vpack.c.b16 %v2964, %v2960
        %v3065 = vpack.c.b16 %v2965, %v2961
        %v3066 = vpack.c.b16 %v2966, %v2962
        %v3067 = vpack.c.b16 %v2967, %v2963
        %v3068 = vpack.c.b16 %v2972, %v2968
        %v3069 = vpack.c.b16 %v2973, %v2969
        %v3070 = vpack.c.b16 %v2974, %v2970
        %v3071 = vpack.c.b16 %v2975, %v2971
        %v3072 = vpack.c.b16 %v2980, %v2976
        %v3073 = vpack.c.b16 %v2981, %v2977
        %v3074 = vpack.c.b16 %v2982, %v2978
        %v3075 = vpack.c.b16 %v2983, %v2979
        %v3076 = vpack.c.b16 %v2988, %v2984
        %v3077 = vpack.c.b16 %v2989, %v2985
        %v3078 = vpack.c.b16 %v2990, %v2986
        %v3079 = vpack.c.b16 %v2991, %v2987
        %v3080 = vpack.c.b16 %v2996, %v2992
        %v3081 = vpack.c.b16 %v2997, %v2993
        %v3082 = vpack.c.b16 %v2998, %v2994
        %v3083 = vpack.c.b16 %v2999, %v2995
        %v3084 = vpack.c.b16 %v3004, %v3000
        %v3085 = vpack.c.b16 %v3005, %v3001
        %v3086 = vpack.c.b16 %v3006, %v3002
        %v3087 = vpack.c.b16 %v3007, %v3003
        %v3088 = vpack.c.b16 %v3012, %v3008
        %v3089 = vpack.c.b16 %v3013, %v3009
        %v3090 = vpack.c.b16 %v3014, %v3010
        %v3091 = vpack.c.b16 %v3015, %v3011
        %v3092 = vpack.c.b16 %v3020, %v3016
        %v3093 = vpack.c.b16 %v3021, %v3017
        %v3094 = vpack.c.b16 %v3022, %v3018
        %v3095 = vpack.c.b16 %v3023, %v3019
        %v3096 = vpack.c.b16 %v3028, %v3024
        %v3097 = vpack.c.b16 %v3029, %v3025
        %v3098 = vpack.c.b16 %v3030, %v3026
        %v3099 = vpack.c.b16 %v3031, %v3027
        %v3100 = vpack.c.b16 %v3036, %v3032
        %v3101 = vpack.c.b16 %v3037, %v3033
        %v3102 = vpack.c.b16 %v3038, %v3034
        %v3103 = vpack.c.b16 %v3039, %v3035
        %3168 = vmatprep.subr.bf16.mxu0 %v3041
        %3169 = vmatpush1.bf16.msra.mxu0 %v3040
        %3170 = vmatprep.subr.bf16.mxu0 %v3045
        %3171 = vmatpush1.bf16.msra.mxu0 %v3044
        %3172 = vmatprep.subr.bf16.mxu0 %v3049
        %3173 = vmatpush1.bf16.msra.mxu0 %v3048
        %3174 = vmatprep.subr.bf16.mxu0 %v3053
        %3175 = vmatpush1.bf16.msra.mxu0 %v3052
        %3176 = vmatprep.subr.bf16.mxu0 %v3057
        %3177 = vmatpush1.bf16.msra.mxu0 %v3056
        %3178 = vmatprep.subr.bf16.mxu0 %v3061
        %3179 = vmatpush1.bf16.msra.mxu0 %v3060
        %3180 = vmatprep.subr.bf16.mxu0 %v3065
        %3181 = vmatpush1.bf16.msra.mxu0 %v3064
        %3182 = vmatprep.subr.bf16.mxu0 %v3069
        %3183 = vmatpush1.bf16.msra.mxu0 %v3068
        %3184 = vmatprep.subr.bf16.mxu0 %v3073
        %3185 = vmatpush1.bf16.msra.mxu0 %v3072
        %3186 = vmatprep.subr.bf16.mxu0 %v3077
        %3187 = vmatpush1.bf16.msra.mxu0 %v3076
        %3188 = vmatprep.subr.bf16.mxu0 %v3081
        %3189 = vmatpush1.bf16.msra.mxu0 %v3080
        %3190 = vmatprep.subr.bf16.mxu0 %v3085
        %3191 = vmatpush1.bf16.msra.mxu0 %v3084
        %3192 = vmatprep.subr.bf16.mxu0 %v3089
        %3193 = vmatpush1.bf16.msra.mxu0 %v3088
        %3194 = vmatprep.subr.bf16.mxu0 %v3093
        %3195 = vmatpush1.bf16.msra.mxu0 %v3092
        %3196 = vmatprep.subr.bf16.mxu0 %v3097
        %3197 = vmatpush1.bf16.msra.mxu0 %v3096
        %3198 = vmatprep.subr.bf16.mxu0 %v3101
        %3199 = vmatpush1.bf16.msra.mxu0 %v3100
        %3200 = vmatprep.mubr.bf16.mxu0 %v2845
        %3201 = vmatmul.mubr.bf16.gmra.mrb[0].mxu0 %v2844
        %v3202 = vpop.f32.mrb[0].mxu0
        %v3203 = vadd.f32 0.0, %v3202
        %v3204 = vpop.f32.mrb[0].mxu0
        %v3205 = vadd.f32 0.0, %v3204
        %v3206 = vpop.f32.mrb[0].mxu0
        %v3207 = vadd.f32 0.0, %v3206
        %v3208 = vpop.f32.mrb[0].mxu0
        %v3209 = vadd.f32 0.0, %v3208
        %3210 = vdwg.mxu0
        %3211 = vmatprep.subr.bf16.mxu0 %v3043
        %3212 = vmatpush1.bf16.msra.mxu0 %v3042
        %3213 = vmatprep.subr.bf16.mxu0 %v3047
        %3214 = vmatpush1.bf16.msra.mxu0 %v3046
        %3215 = vmatprep.subr.bf16.mxu0 %v3051
        %3216 = vmatpush1.bf16.msra.mxu0 %v3050
        %3217 = vmatprep.subr.bf16.mxu0 %v3055
        %3218 = vmatpush1.bf16.msra.mxu0 %v3054
        %3219 = vmatprep.subr.bf16.mxu0 %v3059
        %3220 = vmatpush1.bf16.msra.mxu0 %v3058
        %3221 = vmatprep.subr.bf16.mxu0 %v3063
        %3222 = vmatpush1.bf16.msra.mxu0 %v3062
        %3223 = vmatprep.subr.bf16.mxu0 %v3067
        %3224 = vmatpush1.bf16.msra.mxu0 %v3066
        %3225 = vmatprep.subr.bf16.mxu0 %v3071
        %3226 = vmatpush1.bf16.msra.mxu0 %v3070
        %3227 = vmatprep.subr.bf16.mxu0 %v3075
        %3228 = vmatpush1.bf16.msra.mxu0 %v3074
        %3229 = vmatprep.subr.bf16.mxu0 %v3079
        %3230 = vmatpush1.bf16.msra.mxu0 %v3078
        %3231 = vmatprep.subr.bf16.mxu0 %v3083
        %3232 = vmatpush1.bf16.msra.mxu0 %v3082
        %3233 = vmatprep.subr.bf16.mxu0 %v3087
        %3234 = vmatpush1.bf16.msra.mxu0 %v3086
        %3235 = vmatprep.subr.bf16.mxu0 %v3091
        %3236 = vmatpush1.bf16.msra.mxu0 %v3090
        %3237 = vmatprep.subr.bf16.mxu0 %v3095
        %3238 = vmatpush1.bf16.msra.mxu0 %v3094
        %3239 = vmatprep.subr.bf16.mxu0 %v3099
        %3240 = vmatpush1.bf16.msra.mxu0 %v3098
        %3241 = vmatprep.subr.bf16.mxu0 %v3103
        %3242 = vmatpush1.bf16.msra.mxu0 %v3102
        %3243 = vmatprep.mubr.bf16.mxu0 %v2845
        %3244 = vmatmul.mubr.bf16.gmra.mrb[0].mxu0 %v2844
        %v3245 = vpop.f32.mrb[0].mxu0
        %v3246 = vadd.f32 0.0, %v3245
        %v3247 = vpop.f32.mrb[0].mxu0
        %v3248 = vadd.f32 0.0, %v3247
        %v3249 = vpop.f32.mrb[0].mxu0
        %v3250 = vadd.f32 0.0, %v3249
        %v3251 = vpop.f32.mrb[0].mxu0
        %v3252 = vadd.f32 0.0, %v3251
        %3253 = vdwg.mxu0
        %v3254 = vpack.c.bf16 %v2047, %v2043
        %v3255 = vpack.c.bf16 %v2049, %v2045
        %v3256 = vpack.c.bf16 %v2057, %v2053
        %v3257 = vpack.c.bf16 %v2059, %v2055
        %v3258 = vpack.c.bf16 %v2067, %v2063
        %v3259 = vpack.c.bf16 %v2069, %v2065
        %v3260 = vpack.c.bf16 %v2077, %v2073
        %v3261 = vpack.c.bf16 %v2079, %v2075
        %v3262 = vpack.c.bf16 %v2087, %v2083
        %v3263 = vpack.c.bf16 %v2089, %v2085
        %v3264 = vpack.c.bf16 %v2097, %v2093
        %v3265 = vpack.c.bf16 %v2099, %v2095
        %v3266 = vpack.c.bf16 %v2107, %v2103
        %v3267 = vpack.c.bf16 %v2109, %v2105
        %v3268 = vpack.c.bf16 %v2117, %v2113
        %v3269 = vpack.c.bf16 %v2119, %v2115
        %v3270 = vpack.c.bf16 %v2127, %v2123
        %v3271 = vpack.c.bf16 %v2129, %v2125
        %v3272 = vpack.c.bf16 %v2137, %v2133
        %v3273 = vpack.c.bf16 %v2139, %v2135
        %v3274 = vpack.c.bf16 %v2147, %v2143
        %v3275 = vpack.c.bf16 %v2149, %v2145
        %v3276 = vpack.c.bf16 %v2157, %v2153
        %v3277 = vpack.c.bf16 %v2159, %v2155
        %v3278 = vpack.c.bf16 %v2167, %v2163
        %v3279 = vpack.c.bf16 %v2169, %v2165
        %v3280 = vpack.c.bf16 %v2177, %v2173
        %v3281 = vpack.c.bf16 %v2179, %v2175
        %v3282 = vpack.c.bf16 %v2187, %v2183
        %v3283 = vpack.c.bf16 %v2189, %v2185
        %v3284 = vpack.c.bf16 %v2197, %v2193
        %v3285 = vpack.c.bf16 %v2199, %v2195
        %v3286 = vpack.c.bf16 %v2207, %v2203
        %v3287 = vpack.c.bf16 %v2209, %v2205
        %v3288 = vpack.c.bf16 %v2217, %v2213
        %v3289 = vpack.c.bf16 %v2219, %v2215
        %v3290 = vpack.c.bf16 %v2227, %v2223
        %v3291 = vpack.c.bf16 %v2229, %v2225
        %v3292 = vpack.c.bf16 %v2237, %v2233
        %v3293 = vpack.c.bf16 %v2239, %v2235
        %v3294 = vpack.c.bf16 %v2247, %v2243
        %v3295 = vpack.c.bf16 %v2249, %v2245
        %v3296 = vpack.c.bf16 %v2257, %v2253
        %v3297 = vpack.c.bf16 %v2259, %v2255
        %v3298 = vpack.c.bf16 %v2267, %v2263
        %v3299 = vpack.c.bf16 %v2269, %v2265
        %v3300 = vpack.c.bf16 %v2277, %v2273
        %v3301 = vpack.c.bf16 %v2279, %v2275
        %v3302 = vpack.c.bf16 %v2287, %v2283
        %v3303 = vpack.c.bf16 %v2289, %v2285
        %v3304 = vpack.c.bf16 %v2297, %v2293
        %v3305 = vpack.c.bf16 %v2299, %v2295
        %v3306 = vpack.c.bf16 %v2307, %v2303
        %v3307 = vpack.c.bf16 %v2309, %v2305
        %v3308 = vpack.c.bf16 %v2317, %v2313
        %v3309 = vpack.c.bf16 %v2319, %v2315
        %v3310 = vpack.c.bf16 %v2327, %v2323
        %v3311 = vpack.c.bf16 %v2329, %v2325
        %v3312 = vpack.c.bf16 %v2337, %v2333
        %v3313 = vpack.c.bf16 %v2339, %v2335
        %v3314 = vpack.c.bf16 %v2347, %v2343
        %v3315 = vpack.c.bf16 %v2349, %v2345
        %v3316 = vpack.c.bf16 %v2357, %v2353
        %v3317 = vpack.c.bf16 %v2359, %v2355
        %v3318 = vld [vmem:[#allocation13] sm:$0xff]
        %v3319 = vld [vmem:[#allocation13 + $0x8] sm:$0xff]
        %v3320 = vld [vmem:[#allocation13 + $0x10] sm:$0xff]
        %v3321 = vld [vmem:[#allocation13 + $0x18] sm:$0xff]
        %v3322 = vld [vmem:[#allocation13 + $0x20] sm:$0xff]
        %v3323 = vld [vmem:[#allocation13 + $0x28] sm:$0xff]
        %v3324 = vld [vmem:[#allocation13 + $0x30] sm:$0xff]
        %v3325 = vld [vmem:[#allocation13 + $0x38] sm:$0xff]
        %v3326 = vld [vmem:[#allocation13 + $0x40] sm:$0xff]
        %v3327 = vld [vmem:[#allocation13 + $0x48] sm:$0xff]
        %v3328 = vld [vmem:[#allocation13 + $0x50] sm:$0xff]
        %v3329 = vld [vmem:[#allocation13 + $0x58] sm:$0xff]
        %v3330 = vld [vmem:[#allocation13 + $0x60] sm:$0xff]
        %v3331 = vld [vmem:[#allocation13 + $0x68] sm:$0xff]
        %v3332 = vld [vmem:[#allocation13 + $0x70] sm:$0xff]
        %v3333 = vld [vmem:[#allocation13 + $0x78] sm:$0xff]
        %v3334 = vld [vmem:[#allocation13 + $0x80] sm:$0xff]
        %v3335 = vld [vmem:[#allocation13 + $0x88] sm:$0xff]
        %v3336 = vld [vmem:[#allocation13 + $0x90] sm:$0xff]
        %v3337 = vld [vmem:[#allocation13 + $0x98] sm:$0xff]
        %v3338 = vld [vmem:[#allocation13 + $0xa0] sm:$0xff]
        %v3339 = vld [vmem:[#allocation13 + $0xa8] sm:$0xff]
        %v3340 = vld [vmem:[#allocation13 + $0xb0] sm:$0xff]
        %v3341 = vld [vmem:[#allocation13 + $0xb8] sm:$0xff]
        %v3342 = vld [vmem:[#allocation13 + $0xc0] sm:$0xff]
        %v3343 = vld [vmem:[#allocation13 + $0xc8] sm:$0xff]
        %v3344 = vld [vmem:[#allocation13 + $0xd0] sm:$0xff]
        %v3345 = vld [vmem:[#allocation13 + $0xd8] sm:$0xff]
        %v3346 = vld [vmem:[#allocation13 + $0xe0] sm:$0xff]
        %v3347 = vld [vmem:[#allocation13 + $0xe8] sm:$0xff]
        %v3348 = vld [vmem:[#allocation13 + $0xf0] sm:$0xff]
        %v3349 = vld [vmem:[#allocation13 + $0xf8] sm:$0xff]
        %v3350 = vld [vmem:[#allocation13 + $0x100] sm:$0xff]
        %v3351 = vld [vmem:[#allocation13 + $0x108] sm:$0xff]
        %v3352 = vld [vmem:[#allocation13 + $0x110] sm:$0xff]
        %v3353 = vld [vmem:[#allocation13 + $0x118] sm:$0xff]
        %v3354 = vld [vmem:[#allocation13 + $0x120] sm:$0xff]
        %v3355 = vld [vmem:[#allocation13 + $0x128] sm:$0xff]
        %v3356 = vld [vmem:[#allocation13 + $0x130] sm:$0xff]
        %v3357 = vld [vmem:[#allocation13 + $0x138] sm:$0xff]
        %v3358 = vld [vmem:[#allocation13 + $0x140] sm:$0xff]
        %v3359 = vld [vmem:[#allocation13 + $0x148] sm:$0xff]
        %v3360 = vld [vmem:[#allocation13 + $0x150] sm:$0xff]
        %v3361 = vld [vmem:[#allocation13 + $0x158] sm:$0xff]
        %v3362 = vld [vmem:[#allocation13 + $0x160] sm:$0xff]
        %v3363 = vld [vmem:[#allocation13 + $0x168] sm:$0xff]
        %v3364 = vld [vmem:[#allocation13 + $0x170] sm:$0xff]
        %v3365 = vld [vmem:[#allocation13 + $0x178] sm:$0xff]
        %v3366 = vld [vmem:[#allocation13 + $0x180] sm:$0xff]
        %v3367 = vld [vmem:[#allocation13 + $0x188] sm:$0xff]
        %v3368 = vld [vmem:[#allocation13 + $0x190] sm:$0xff]
        %v3369 = vld [vmem:[#allocation13 + $0x198] sm:$0xff]
        %v3370 = vld [vmem:[#allocation13 + $0x1a0] sm:$0xff]
        %v3371 = vld [vmem:[#allocation13 + $0x1a8] sm:$0xff]
        %v3372 = vld [vmem:[#allocation13 + $0x1b0] sm:$0xff]
        %v3373 = vld [vmem:[#allocation13 + $0x1b8] sm:$0xff]
        %v3374 = vld [vmem:[#allocation13 + $0x1c0] sm:$0xff]
        %v3375 = vld [vmem:[#allocation13 + $0x1c8] sm:$0xff]
        %v3376 = vld [vmem:[#allocation13 + $0x1d0] sm:$0xff]
        %v3377 = vld [vmem:[#allocation13 + $0x1d8] sm:$0xff]
        %v3378 = vld [vmem:[#allocation13 + $0x1e0] sm:$0xff]
        %v3379 = vld [vmem:[#allocation13 + $0x1e8] sm:$0xff]
        %v3380 = vld [vmem:[#allocation13 + $0x1f0] sm:$0xff]
        %v3381 = vld [vmem:[#allocation13 + $0x1f8] sm:$0xff]
        %v3446 = vunpack.c.l.b16 %v3318
        %v3447 = vunpack.c.h.b16 %v3318
        %v3448 = vunpack.c.l.b16 %v3319
        %v3449 = vunpack.c.h.b16 %v3319
        %v3450 = vunpack.c.l.b16 %v3320
        %v3451 = vunpack.c.h.b16 %v3320
        %v3452 = vunpack.c.l.b16 %v3321
        %v3453 = vunpack.c.h.b16 %v3321
        %v3454 = vunpack.c.l.b16 %v3322
        %v3455 = vunpack.c.h.b16 %v3322
        %v3456 = vunpack.c.l.b16 %v3323
        %v3457 = vunpack.c.h.b16 %v3323
        %v3458 = vunpack.c.l.b16 %v3324
        %v3459 = vunpack.c.h.b16 %v3324
        %v3460 = vunpack.c.l.b16 %v3325
        %v3461 = vunpack.c.h.b16 %v3325
        %v3462 = vunpack.c.l.b16 %v3326
        %v3463 = vunpack.c.h.b16 %v3326
        %v3464 = vunpack.c.l.b16 %v3327
        %v3465 = vunpack.c.h.b16 %v3327
        %v3466 = vunpack.c.l.b16 %v3328
        %v3467 = vunpack.c.h.b16 %v3328
        %v3468 = vunpack.c.l.b16 %v3329
        %v3469 = vunpack.c.h.b16 %v3329
        %v3470 = vunpack.c.l.b16 %v3330
        %v3471 = vunpack.c.h.b16 %v3330
        %v3472 = vunpack.c.l.b16 %v3331
        %v3473 = vunpack.c.h.b16 %v3331
        %v3474 = vunpack.c.l.b16 %v3332
        %v3475 = vunpack.c.h.b16 %v3332
        %v3476 = vunpack.c.l.b16 %v3333
        %v3477 = vunpack.c.h.b16 %v3333
        %v3478 = vunpack.c.l.b16 %v3334
        %v3479 = vunpack.c.h.b16 %v3334
        %v3480 = vunpack.c.l.b16 %v3335
        %v3481 = vunpack.c.h.b16 %v3335
        %v3482 = vunpack.c.l.b16 %v3336
        %v3483 = vunpack.c.h.b16 %v3336
        %v3484 = vunpack.c.l.b16 %v3337
        %v3485 = vunpack.c.h.b16 %v3337
        %v3486 = vunpack.c.l.b16 %v3338
        %v3487 = vunpack.c.h.b16 %v3338
        %v3488 = vunpack.c.l.b16 %v3339
        %v3489 = vunpack.c.h.b16 %v3339
        %v3490 = vunpack.c.l.b16 %v3340
        %v3491 = vunpack.c.h.b16 %v3340
        %v3492 = vunpack.c.l.b16 %v3341
        %v3493 = vunpack.c.h.b16 %v3341
        %v3494 = vunpack.c.l.b16 %v3342
        %v3495 = vunpack.c.h.b16 %v3342
        %v3496 = vunpack.c.l.b16 %v3343
        %v3497 = vunpack.c.h.b16 %v3343
        %v3498 = vunpack.c.l.b16 %v3344
        %v3499 = vunpack.c.h.b16 %v3344
        %v3500 = vunpack.c.l.b16 %v3345
        %v3501 = vunpack.c.h.b16 %v3345
        %v3502 = vunpack.c.l.b16 %v3346
        %v3503 = vunpack.c.h.b16 %v3346
        %v3504 = vunpack.c.l.b16 %v3347
        %v3505 = vunpack.c.h.b16 %v3347
        %v3506 = vunpack.c.l.b16 %v3348
        %v3507 = vunpack.c.h.b16 %v3348
        %v3508 = vunpack.c.l.b16 %v3349
        %v3509 = vunpack.c.h.b16 %v3349
        %v3510 = vunpack.c.l.b16 %v3350
        %v3511 = vunpack.c.h.b16 %v3350
        %v3512 = vunpack.c.l.b16 %v3351
        %v3513 = vunpack.c.h.b16 %v3351
        %v3514 = vunpack.c.l.b16 %v3352
        %v3515 = vunpack.c.h.b16 %v3352
        %v3516 = vunpack.c.l.b16 %v3353
        %v3517 = vunpack.c.h.b16 %v3353
        %v3518 = vunpack.c.l.b16 %v3354
        %v3519 = vunpack.c.h.b16 %v3354
        %v3520 = vunpack.c.l.b16 %v3355
        %v3521 = vunpack.c.h.b16 %v3355
        %v3522 = vunpack.c.l.b16 %v3356
        %v3523 = vunpack.c.h.b16 %v3356
        %v3524 = vunpack.c.l.b16 %v3357
        %v3525 = vunpack.c.h.b16 %v3357
        %v3526 = vunpack.c.l.b16 %v3358
        %v3527 = vunpack.c.h.b16 %v3358
        %v3528 = vunpack.c.l.b16 %v3359
        %v3529 = vunpack.c.h.b16 %v3359
        %v3530 = vunpack.c.l.b16 %v3360
        %v3531 = vunpack.c.h.b16 %v3360
        %v3532 = vunpack.c.l.b16 %v3361
        %v3533 = vunpack.c.h.b16 %v3361
        %v3534 = vunpack.c.l.b16 %v3362
        %v3535 = vunpack.c.h.b16 %v3362
        %v3536 = vunpack.c.l.b16 %v3363
        %v3537 = vunpack.c.h.b16 %v3363
        %v3538 = vunpack.c.l.b16 %v3364
        %v3539 = vunpack.c.h.b16 %v3364
        %v3540 = vunpack.c.l.b16 %v3365
        %v3541 = vunpack.c.h.b16 %v3365
        %v3542 = vunpack.c.l.b16 %v3366
        %v3543 = vunpack.c.h.b16 %v3366
        %v3544 = vunpack.c.l.b16 %v3367
        %v3545 = vunpack.c.h.b16 %v3367
        %v3546 = vunpack.c.l.b16 %v3368
        %v3547 = vunpack.c.h.b16 %v3368
        %v3548 = vunpack.c.l.b16 %v3369
        %v3549 = vunpack.c.h.b16 %v3369
        %v3550 = vunpack.c.l.b16 %v3370
        %v3551 = vunpack.c.h.b16 %v3370
        %v3552 = vunpack.c.l.b16 %v3371
        %v3553 = vunpack.c.h.b16 %v3371
        %v3554 = vunpack.c.l.b16 %v3372
        %v3555 = vunpack.c.h.b16 %v3372
        %v3556 = vunpack.c.l.b16 %v3373
        %v3557 = vunpack.c.h.b16 %v3373
        %v3558 = vunpack.c.l.b16 %v3374
        %v3559 = vunpack.c.h.b16 %v3374
        %v3560 = vunpack.c.l.b16 %v3375
        %v3561 = vunpack.c.h.b16 %v3375
        %v3562 = vunpack.c.l.b16 %v3376
        %v3563 = vunpack.c.h.b16 %v3376
        %v3564 = vunpack.c.l.b16 %v3377
        %v3565 = vunpack.c.h.b16 %v3377
        %v3566 = vunpack.c.l.b16 %v3378
        %v3567 = vunpack.c.h.b16 %v3378
        %v3568 = vunpack.c.l.b16 %v3379
        %v3569 = vunpack.c.h.b16 %v3379
        %v3570 = vunpack.c.l.b16 %v3380
        %v3571 = vunpack.c.h.b16 %v3380
        %v3572 = vunpack.c.l.b16 %v3381
        %v3573 = vunpack.c.h.b16 %v3381
        %v3574 = vpack.c.b16 %v3450, %v3446
        %v3575 = vpack.c.b16 %v3451, %v3447
        %v3576 = vpack.c.b16 %v3452, %v3448
        %v3577 = vpack.c.b16 %v3453, %v3449
        %v3578 = vpack.c.b16 %v3458, %v3454
        %v3579 = vpack.c.b16 %v3459, %v3455
        %v3580 = vpack.c.b16 %v3460, %v3456
        %v3581 = vpack.c.b16 %v3461, %v3457
        %v3582 = vpack.c.b16 %v3466, %v3462
        %v3583 = vpack.c.b16 %v3467, %v3463
        %v3584 = vpack.c.b16 %v3468, %v3464
        %v3585 = vpack.c.b16 %v3469, %v3465
        %v3586 = vpack.c.b16 %v3474, %v3470
        %v3587 = vpack.c.b16 %v3475, %v3471
        %v3588 = vpack.c.b16 %v3476, %v3472
        %v3589 = vpack.c.b16 %v3477, %v3473
        %v3590 = vpack.c.b16 %v3482, %v3478
        %v3591 = vpack.c.b16 %v3483, %v3479
        %v3592 = vpack.c.b16 %v3484, %v3480
        %v3593 = vpack.c.b16 %v3485, %v3481
        %v3594 = vpack.c.b16 %v3490, %v3486
        %v3595 = vpack.c.b16 %v3491, %v3487
        %v3596 = vpack.c.b16 %v3492, %v3488
        %v3597 = vpack.c.b16 %v3493, %v3489
        %v3598 = vpack.c.b16 %v3498, %v3494
        %v3599 = vpack.c.b16 %v3499, %v3495
        %v3600 = vpack.c.b16 %v3500, %v3496
        %v3601 = vpack.c.b16 %v3501, %v3497
        %v3602 = vpack.c.b16 %v3506, %v3502
        %v3603 = vpack.c.b16 %v3507, %v3503
        %v3604 = vpack.c.b16 %v3508, %v3504
        %v3605 = vpack.c.b16 %v3509, %v3505
        %v3606 = vpack.c.b16 %v3514, %v3510
        %v3607 = vpack.c.b16 %v3515, %v3511
        %v3608 = vpack.c.b16 %v3516, %v3512
        %v3609 = vpack.c.b16 %v3517, %v3513
        %v3610 = vpack.c.b16 %v3522, %v3518
        %v3611 = vpack.c.b16 %v3523, %v3519
        %v3612 = vpack.c.b16 %v3524, %v3520
        %v3613 = vpack.c.b16 %v3525, %v3521
        %v3614 = vpack.c.b16 %v3530, %v3526
        %v3615 = vpack.c.b16 %v3531, %v3527
        %v3616 = vpack.c.b16 %v3532, %v3528
        %v3617 = vpack.c.b16 %v3533, %v3529
        %v3618 = vpack.c.b16 %v3538, %v3534
        %v3619 = vpack.c.b16 %v3539, %v3535
        %v3620 = vpack.c.b16 %v3540, %v3536
        %v3621 = vpack.c.b16 %v3541, %v3537
        %v3622 = vpack.c.b16 %v3546, %v3542
        %v3623 = vpack.c.b16 %v3547, %v3543
        %v3624 = vpack.c.b16 %v3548, %v3544
        %v3625 = vpack.c.b16 %v3549, %v3545
        %v3626 = vpack.c.b16 %v3554, %v3550
        %v3627 = vpack.c.b16 %v3555, %v3551
        %v3628 = vpack.c.b16 %v3556, %v3552
        %v3629 = vpack.c.b16 %v3557, %v3553
        %v3630 = vpack.c.b16 %v3562, %v3558
        %v3631 = vpack.c.b16 %v3563, %v3559
        %v3632 = vpack.c.b16 %v3564, %v3560
        %v3633 = vpack.c.b16 %v3565, %v3561
        %v3634 = vpack.c.b16 %v3570, %v3566
        %v3635 = vpack.c.b16 %v3571, %v3567
        %v3636 = vpack.c.b16 %v3572, %v3568
        %v3637 = vpack.c.b16 %v3573, %v3569
        %3702 = vmatprep.subr.bf16.mxu0 %v3575
        %3703 = vmatpush1.bf16.msra.mxu0 %v3574
        %3704 = vmatprep.subr.bf16.mxu0 %v3579
        %3705 = vmatpush1.bf16.msra.mxu0 %v3578
        %3706 = vmatprep.subr.bf16.mxu0 %v3583
        %3707 = vmatpush1.bf16.msra.mxu0 %v3582
        %3708 = vmatprep.subr.bf16.mxu0 %v3587
        %3709 = vmatpush1.bf16.msra.mxu0 %v3586
        %3710 = vmatprep.subr.bf16.mxu0 %v3591
        %3711 = vmatpush1.bf16.msra.mxu0 %v3590
        %3712 = vmatprep.subr.bf16.mxu0 %v3595
        %3713 = vmatpush1.bf16.msra.mxu0 %v3594
        %3714 = vmatprep.subr.bf16.mxu0 %v3599
        %3715 = vmatpush1.bf16.msra.mxu0 %v3598
        %3716 = vmatprep.subr.bf16.mxu0 %v3603
        %3717 = vmatpush1.bf16.msra.mxu0 %v3602
        %3718 = vmatprep.subr.bf16.mxu0 %v3607
        %3719 = vmatpush1.bf16.msra.mxu0 %v3606
        %3720 = vmatprep.subr.bf16.mxu0 %v3611
        %3721 = vmatpush1.bf16.msra.mxu0 %v3610
        %3722 = vmatprep.subr.bf16.mxu0 %v3615
        %3723 = vmatpush1.bf16.msra.mxu0 %v3614
        %3724 = vmatprep.subr.bf16.mxu0 %v3619
        %3725 = vmatpush1.bf16.msra.mxu0 %v3618
        %3726 = vmatprep.subr.bf16.mxu0 %v3623
        %3727 = vmatpush1.bf16.msra.mxu0 %v3622
        %3728 = vmatprep.subr.bf16.mxu0 %v3627
        %3729 = vmatpush1.bf16.msra.mxu0 %v3626
        %3730 = vmatprep.subr.bf16.mxu0 %v3631
        %3731 = vmatpush1.bf16.msra.mxu0 %v3630
        %3732 = vmatprep.subr.bf16.mxu0 %v3635
        %3733 = vmatpush1.bf16.msra.mxu0 %v3634
        %3734 = vmatprep.mubr.bf16.mxu0 %v3255
        %3735 = vmatmul.mubr.bf16.gmra.mrb[0].mxu0 %v3254
        %v3736 = vpop.f32.mrb[0].mxu0
        %v3737 = vadd.f32 0.0, %v3736
        %v3738 = vpop.f32.mrb[0].mxu0
        %v3739 = vadd.f32 0.0, %v3738
        %v3740 = vpop.f32.mrb[0].mxu0
        %v3741 = vadd.f32 0.0, %v3740
        %v3742 = vpop.f32.mrb[0].mxu0
        %v3743 = vadd.f32 0.0, %v3742
        %3744 = vmatprep.mubr.bf16.mxu0 %v3257
        %3745 = vmatmul.mubr.bf16.gmra.mrb[0].mxu0 %v3256
        %v3746 = vpop.f32.mrb[0].mxu0
        %v3747 = vadd.f32 0.0, %v3746
        %v3748 = vpop.f32.mrb[0].mxu0
        %v3749 = vadd.f32 0.0, %v3748
        %v3750 = vpop.f32.mrb[0].mxu0
        %v3751 = vadd.f32 0.0, %v3750
        %v3752 = vpop.f32.mrb[0].mxu0
        %v3753 = vadd.f32 0.0, %v3752
        %3754 = vmatprep.mubr.bf16.mxu0 %v3259
        %3755 = vmatmul.mubr.bf16.gmra.mrb[0].mxu0 %v3258
        %v3756 = vpop.f32.mrb[0].mxu0
        %v3757 = vadd.f32 0.0, %v3756
        %v3758 = vpop.f32.mrb[0].mxu0
        %v3759 = vadd.f32 0.0, %v3758
        %v3760 = vpop.f32.mrb[0].mxu0
        %v3761 = vadd.f32 0.0, %v3760
        %v3762 = vpop.f32.mrb[0].mxu0
        %v3763 = vadd.f32 0.0, %v3762
        %3764 = vmatprep.mubr.bf16.mxu0 %v3261
        %3765 = vmatmul.mubr.bf16.gmra.mrb[0].mxu0 %v3260
        %v3766 = vpop.f32.mrb[0].mxu0
        %v3767 = vadd.f32 0.0, %v3766
        %v3768 = vpop.f32.mrb[0].mxu0
        %v3769 = vadd.f32 0.0, %v3768
        %v3770 = vpop.f32.mrb[0].mxu0
        %v3771 = vadd.f32 0.0, %v3770
        %v3772 = vpop.f32.mrb[0].mxu0
        %v3773 = vadd.f32 0.0, %v3772
        %3774 = vmatprep.mubr.bf16.mxu0 %v3263
        %3775 = vmatmul.mubr.bf16.gmra.mrb[0].mxu0 %v3262
        %v3776 = vpop.f32.mrb[0].mxu0
        %v3777 = vadd.f32 0.0, %v3776
        %v3778 = vpop.f32.mrb[0].mxu0
        %v3779 = vadd.f32 0.0, %v3778
        %v3780 = vpop.f32.mrb[0].mxu0
        %v3781 = vadd.f32 0.0, %v3780
        %v3782 = vpop.f32.mrb[0].mxu0
        %v3783 = vadd.f32 0.0, %v3782
        %3784 = vmatprep.mubr.bf16.mxu0 %v3265
        %3785 = vmatmul.mubr.bf16.gmra.mrb[0].mxu0 %v3264
        %v3786 = vpop.f32.mrb[0].mxu0
        %v3787 = vadd.f32 0.0, %v3786
        %v3788 = vpop.f32.mrb[0].mxu0
        %v3789 = vadd.f32 0.0, %v3788
        %v3790 = vpop.f32.mrb[0].mxu0
        %v3791 = vadd.f32 0.0, %v3790
        %v3792 = vpop.f32.mrb[0].mxu0
        %v3793 = vadd.f32 0.0, %v3792
        %3794 = vmatprep.mubr.bf16.mxu0 %v3267
        %3795 = vmatmul.mubr.bf16.gmra.mrb[0].mxu0 %v3266
        %v3796 = vpop.f32.mrb[0].mxu0
        %v3797 = vadd.f32 0.0, %v3796
        %v3798 = vpop.f32.mrb[0].mxu0
        %v3799 = vadd.f32 0.0, %v3798
        %v3800 = vpop.f32.mrb[0].mxu0
        %v3801 = vadd.f32 0.0, %v3800
        %v3802 = vpop.f32.mrb[0].mxu0
        %v3803 = vadd.f32 0.0, %v3802
        %3804 = vmatprep.mubr.bf16.mxu0 %v3269
        %3805 = vmatmul.mubr.bf16.gmra.mrb[0].mxu0 %v3268
        %v3806 = vpop.f32.mrb[0].mxu0
        %v3807 = vadd.f32 0.0, %v3806
        %v3808 = vpop.f32.mrb[0].mxu0
        %v3809 = vadd.f32 0.0, %v3808
        %v3810 = vpop.f32.mrb[0].mxu0
        %v3811 = vadd.f32 0.0, %v3810
        %v3812 = vpop.f32.mrb[0].mxu0
        %v3813 = vadd.f32 0.0, %v3812
        %3814 = vmatprep.mubr.bf16.mxu0 %v3271
        %3815 = vmatmul.mubr.bf16.gmra.mrb[0].mxu0 %v3270
        %v3816 = vpop.f32.mrb[0].mxu0
        %v3817 = vadd.f32 0.0, %v3816
        %v3818 = vpop.f32.mrb[0].mxu0
        %v3819 = vadd.f32 0.0, %v3818
        %v3820 = vpop.f32.mrb[0].mxu0
        %v3821 = vadd.f32 0.0, %v3820
        %v3822 = vpop.f32.mrb[0].mxu0
        %v3823 = vadd.f32 0.0, %v3822
        %3824 = vmatprep.mubr.bf16.mxu0 %v3273
        %3825 = vmatmul.mubr.bf16.gmra.mrb[0].mxu0 %v3272
        %v3826 = vpop.f32.mrb[0].mxu0
        %v3827 = vadd.f32 0.0, %v3826
        %v3828 = vpop.f32.mrb[0].mxu0
        %v3829 = vadd.f32 0.0, %v3828
        %v3830 = vpop.f32.mrb[0].mxu0
        %v3831 = vadd.f32 0.0, %v3830
        %v3832 = vpop.f32.mrb[0].mxu0
        %v3833 = vadd.f32 0.0, %v3832
        %3834 = vmatprep.mubr.bf16.mxu0 %v3275
        %3835 = vmatmul.mubr.bf16.gmra.mrb[0].mxu0 %v3274
        %v3836 = vpop.f32.mrb[0].mxu0
        %v3837 = vadd.f32 0.0, %v3836
        %v3838 = vpop.f32.mrb[0].mxu0
        %v3839 = vadd.f32 0.0, %v3838
        %v3840 = vpop.f32.mrb[0].mxu0
        %v3841 = vadd.f32 0.0, %v3840
        %v3842 = vpop.f32.mrb[0].mxu0
        %v3843 = vadd.f32 0.0, %v3842
        %3844 = vmatprep.mubr.bf16.mxu0 %v3277
        %3845 = vmatmul.mubr.bf16.gmra.mrb[0].mxu0 %v3276
        %v3846 = vpop.f32.mrb[0].mxu0
        %v3847 = vadd.f32 0.0, %v3846
        %v3848 = vpop.f32.mrb[0].mxu0
        %v3849 = vadd.f32 0.0, %v3848
        %v3850 = vpop.f32.mrb[0].mxu0
        %v3851 = vadd.f32 0.0, %v3850
        %v3852 = vpop.f32.mrb[0].mxu0
        %v3853 = vadd.f32 0.0, %v3852
        %3854 = vmatprep.mubr.bf16.mxu0 %v3279
        %3855 = vmatmul.mubr.bf16.gmra.mrb[0].mxu0 %v3278
        %v3856 = vpop.f32.mrb[0].mxu0
        %v3857 = vadd.f32 0.0, %v3856
        %v3858 = vpop.f32.mrb[0].mxu0
        %v3859 = vadd.f32 0.0, %v3858
        %v3860 = vpop.f32.mrb[0].mxu0
        %v3861 = vadd.f32 0.0, %v3860
        %v3862 = vpop.f32.mrb[0].mxu0
        %v3863 = vadd.f32 0.0, %v3862
        %3864 = vmatprep.mubr.bf16.mxu0 %v3281
        %3865 = vmatmul.mubr.bf16.gmra.mrb[0].mxu0 %v3280
        %v3866 = vpop.f32.mrb[0].mxu0
        %v3867 = vadd.f32 0.0, %v3866
        %v3868 = vpop.f32.mrb[0].mxu0
        %v3869 = vadd.f32 0.0, %v3868
        %v3870 = vpop.f32.mrb[0].mxu0
        %v3871 = vadd.f32 0.0, %v3870
        %v3872 = vpop.f32.mrb[0].mxu0
        %v3873 = vadd.f32 0.0, %v3872
        %3874 = vmatprep.mubr.bf16.mxu0 %v3283
        %3875 = vmatmul.mubr.bf16.gmra.mrb[0].mxu0 %v3282
        %v3876 = vpop.f32.mrb[0].mxu0
        %v3877 = vadd.f32 0.0, %v3876
        %v3878 = vpop.f32.mrb[0].mxu0
        %v3879 = vadd.f32 0.0, %v3878
        %v3880 = vpop.f32.mrb[0].mxu0
        %v3881 = vadd.f32 0.0, %v3880
        %v3882 = vpop.f32.mrb[0].mxu0
        %v3883 = vadd.f32 0.0, %v3882
        %3884 = vmatprep.mubr.bf16.mxu0 %v3285
        %3885 = vmatmul.mubr.bf16.gmra.mrb[0].mxu0 %v3284
        %v3886 = vpop.f32.mrb[0].mxu0
        %v3887 = vadd.f32 0.0, %v3886
        %v3888 = vpop.f32.mrb[0].mxu0
        %v3889 = vadd.f32 0.0, %v3888
        %v3890 = vpop.f32.mrb[0].mxu0
        %v3891 = vadd.f32 0.0, %v3890
        %v3892 = vpop.f32.mrb[0].mxu0
        %v3893 = vadd.f32 0.0, %v3892
        %3894 = vmatprep.mubr.bf16.mxu0 %v3287
        %3895 = vmatmul.mubr.bf16.gmra.mrb[0].mxu0 %v3286
        %v3896 = vpop.f32.mrb[0].mxu0
        %v3897 = vadd.f32 0.0, %v3896
        %v3898 = vpop.f32.mrb[0].mxu0
        %v3899 = vadd.f32 0.0, %v3898
        %v3900 = vpop.f32.mrb[0].mxu0
        %v3901 = vadd.f32 0.0, %v3900
        %v3902 = vpop.f32.mrb[0].mxu0
        %v3903 = vadd.f32 0.0, %v3902
        %3904 = vmatprep.mubr.bf16.mxu0 %v3289
        %3905 = vmatmul.mubr.bf16.gmra.mrb[0].mxu0 %v3288
        %v3906 = vpop.f32.mrb[0].mxu0
        %v3907 = vadd.f32 0.0, %v3906
        %v3908 = vpop.f32.mrb[0].mxu0
        %v3909 = vadd.f32 0.0, %v3908
        %v3910 = vpop.f32.mrb[0].mxu0
        %v3911 = vadd.f32 0.0, %v3910
        %v3912 = vpop.f32.mrb[0].mxu0
        %v3913 = vadd.f32 0.0, %v3912
        %3914 = vmatprep.mubr.bf16.mxu0 %v3291
        %3915 = vmatmul.mubr.bf16.gmra.mrb[0].mxu0 %v3290
        %v3916 = vpop.f32.mrb[0].mxu0
        %v3917 = vadd.f32 0.0, %v3916
        %v3918 = vpop.f32.mrb[0].mxu0
        %v3919 = vadd.f32 0.0, %v3918
        %v3920 = vpop.f32.mrb[0].mxu0
        %v3921 = vadd.f32 0.0, %v3920
        %v3922 = vpop.f32.mrb[0].mxu0
        %v3923 = vadd.f32 0.0, %v3922
        %3924 = vmatprep.mubr.bf16.mxu0 %v3293
        %3925 = vmatmul.mubr.bf16.gmra.mrb[0].mxu0 %v3292
        %v3926 = vpop.f32.mrb[0].mxu0
        %v3927 = vadd.f32 0.0, %v3926
        %v3928 = vpop.f32.mrb[0].mxu0
        %v3929 = vadd.f32 0.0, %v3928
        %v3930 = vpop.f32.mrb[0].mxu0
        %v3931 = vadd.f32 0.0, %v3930
        %v3932 = vpop.f32.mrb[0].mxu0
        %v3933 = vadd.f32 0.0, %v3932
        %3934 = vmatprep.mubr.bf16.mxu0 %v3295
        %3935 = vmatmul.mubr.bf16.gmra.mrb[0].mxu0 %v3294
        %v3936 = vpop.f32.mrb[0].mxu0
        %v3937 = vadd.f32 0.0, %v3936
        %v3938 = vpop.f32.mrb[0].mxu0
        %v3939 = vadd.f32 0.0, %v3938
        %v3940 = vpop.f32.mrb[0].mxu0
        %v3941 = vadd.f32 0.0, %v3940
        %v3942 = vpop.f32.mrb[0].mxu0
        %v3943 = vadd.f32 0.0, %v3942
        %3944 = vmatprep.mubr.bf16.mxu0 %v3297
        %3945 = vmatmul.mubr.bf16.gmra.mrb[0].mxu0 %v3296
        %v3946 = vpop.f32.mrb[0].mxu0
        %v3947 = vadd.f32 0.0, %v3946
        %v3948 = vpop.f32.mrb[0].mxu0
        %v3949 = vadd.f32 0.0, %v3948
        %v3950 = vpop.f32.mrb[0].mxu0
        %v3951 = vadd.f32 0.0, %v3950
        %v3952 = vpop.f32.mrb[0].mxu0
        %v3953 = vadd.f32 0.0, %v3952
        %3954 = vmatprep.mubr.bf16.mxu0 %v3299
        %3955 = vmatmul.mubr.bf16.gmra.mrb[0].mxu0 %v3298
        %v3956 = vpop.f32.mrb[0].mxu0
        %v3957 = vadd.f32 0.0, %v3956
        %v3958 = vpop.f32.mrb[0].mxu0
        %v3959 = vadd.f32 0.0, %v3958
        %v3960 = vpop.f32.mrb[0].mxu0
        %v3961 = vadd.f32 0.0, %v3960
        %v3962 = vpop.f32.mrb[0].mxu0
        %v3963 = vadd.f32 0.0, %v3962
        %3964 = vmatprep.mubr.bf16.mxu0 %v3301
        %3965 = vmatmul.mubr.bf16.gmra.mrb[0].mxu0 %v3300
        %v3966 = vpop.f32.mrb[0].mxu0
        %v3967 = vadd.f32 0.0, %v3966
        %v3968 = vpop.f32.mrb[0].mxu0
        %v3969 = vadd.f32 0.0, %v3968
        %v3970 = vpop.f32.mrb[0].mxu0
        %v3971 = vadd.f32 0.0, %v3970
        %v3972 = vpop.f32.mrb[0].mxu0
        %v3973 = vadd.f32 0.0, %v3972
        %3974 = vmatprep.mubr.bf16.mxu0 %v3303
        %3975 = vmatmul.mubr.bf16.gmra.mrb[0].mxu0 %v3302
        %v3976 = vpop.f32.mrb[0].mxu0
        %v3977 = vadd.f32 0.0, %v3976
        %v3978 = vpop.f32.mrb[0].mxu0
        %v3979 = vadd.f32 0.0, %v3978
        %v3980 = vpop.f32.mrb[0].mxu0
        %v3981 = vadd.f32 0.0, %v3980
        %v3982 = vpop.f32.mrb[0].mxu0
        %v3983 = vadd.f32 0.0, %v3982
        %3984 = vmatprep.mubr.bf16.mxu0 %v3305
        %3985 = vmatmul.mubr.bf16.gmra.mrb[0].mxu0 %v3304
        %v3986 = vpop.f32.mrb[0].mxu0
        %v3987 = vadd.f32 0.0, %v3986
        %v3988 = vpop.f32.mrb[0].mxu0
        %v3989 = vadd.f32 0.0, %v3988
        %v3990 = vpop.f32.mrb[0].mxu0
        %v3991 = vadd.f32 0.0, %v3990
        %v3992 = vpop.f32.mrb[0].mxu0
        %v3993 = vadd.f32 0.0, %v3992
        %3994 = vmatprep.mubr.bf16.mxu0 %v3307
        %3995 = vmatmul.mubr.bf16.gmra.mrb[0].mxu0 %v3306
        %v3996 = vpop.f32.mrb[0].mxu0
        %v3997 = vadd.f32 0.0, %v3996
        %v3998 = vpop.f32.mrb[0].mxu0
        %v3999 = vadd.f32 0.0, %v3998
        %v4000 = vpop.f32.mrb[0].mxu0
        %v4001 = vadd.f32 0.0, %v4000
        %v4002 = vpop.f32.mrb[0].mxu0
        %v4003 = vadd.f32 0.0, %v4002
        %4004 = vmatprep.mubr.bf16.mxu0 %v3309
        %4005 = vmatmul.mubr.bf16.gmra.mrb[0].mxu0 %v3308
        %v4006 = vpop.f32.mrb[0].mxu0
        %v4007 = vadd.f32 0.0, %v4006
        %v4008 = vpop.f32.mrb[0].mxu0
        %v4009 = vadd.f32 0.0, %v4008
        %v4010 = vpop.f32.mrb[0].mxu0
        %v4011 = vadd.f32 0.0, %v4010
        %v4012 = vpop.f32.mrb[0].mxu0
        %v4013 = vadd.f32 0.0, %v4012
        %4014 = vmatprep.mubr.bf16.mxu0 %v3311
        %4015 = vmatmul.mubr.bf16.gmra.mrb[0].mxu0 %v3310
        %v4016 = vpop.f32.mrb[0].mxu0
        %v4017 = vadd.f32 0.0, %v4016
        %v4018 = vpop.f32.mrb[0].mxu0
        %v4019 = vadd.f32 0.0, %v4018
        %v4020 = vpop.f32.mrb[0].mxu0
        %v4021 = vadd.f32 0.0, %v4020
        %v4022 = vpop.f32.mrb[0].mxu0
        %v4023 = vadd.f32 0.0, %v4022
        %4024 = vmatprep.mubr.bf16.mxu0 %v3313
        %4025 = vmatmul.mubr.bf16.gmra.mrb[0].mxu0 %v3312
        %v4026 = vpop.f32.mrb[0].mxu0
        %v4027 = vadd.f32 0.0, %v4026
        %v4028 = vpop.f32.mrb[0].mxu0
        %v4029 = vadd.f32 0.0, %v4028
        %v4030 = vpop.f32.mrb[0].mxu0
        %v4031 = vadd.f32 0.0, %v4030
        %v4032 = vpop.f32.mrb[0].mxu0
        %v4033 = vadd.f32 0.0, %v4032
        %4034 = vmatprep.mubr.bf16.mxu0 %v3315
        %4035 = vmatmul.mubr.bf16.gmra.mrb[0].mxu0 %v3314
        %v4036 = vpop.f32.mrb[0].mxu0
        %v4037 = vadd.f32 0.0, %v4036
        %v4038 = vpop.f32.mrb[0].mxu0
        %v4039 = vadd.f32 0.0, %v4038
        %v4040 = vpop.f32.mrb[0].mxu0
        %v4041 = vadd.f32 0.0, %v4040
        %v4042 = vpop.f32.mrb[0].mxu0
        %v4043 = vadd.f32 0.0, %v4042
        %4044 = vmatprep.mubr.bf16.mxu0 %v3317
        %4045 = vmatmul.mubr.bf16.gmra.mrb[0].mxu0 %v3316
        %v4046 = vpop.f32.mrb[0].mxu0
        %v4047 = vadd.f32 0.0, %v4046
        %v4048 = vpop.f32.mrb[0].mxu0
        %v4049 = vadd.f32 0.0, %v4048
        %v4050 = vpop.f32.mrb[0].mxu0
        %v4051 = vadd.f32 0.0, %v4050
        %v4052 = vpop.f32.mrb[0].mxu0
        %v4053 = vadd.f32 0.0, %v4052
        %4054 = vdwg.mxu0
        %4055 = vmatprep.subr.bf16.mxu0 %v3577
        %4056 = vmatpush1.bf16.msra.mxu0 %v3576
        %4057 = vmatprep.subr.bf16.mxu0 %v3581
        %4058 = vmatpush1.bf16.msra.mxu0 %v3580
        %4059 = vmatprep.subr.bf16.mxu0 %v3585
        %4060 = vmatpush1.bf16.msra.mxu0 %v3584
        %4061 = vmatprep.subr.bf16.mxu0 %v3589
        %4062 = vmatpush1.bf16.msra.mxu0 %v3588
        %4063 = vmatprep.subr.bf16.mxu0 %v3593
        %4064 = vmatpush1.bf16.msra.mxu0 %v3592
        %4065 = vmatprep.subr.bf16.mxu0 %v3597
        %4066 = vmatpush1.bf16.msra.mxu0 %v3596
        %4067 = vmatprep.subr.bf16.mxu0 %v3601
        %4068 = vmatpush1.bf16.msra.mxu0 %v3600
        %4069 = vmatprep.subr.bf16.mxu0 %v3605
        %4070 = vmatpush1.bf16.msra.mxu0 %v3604
        %4071 = vmatprep.subr.bf16.mxu0 %v3609
        %4072 = vmatpush1.bf16.msra.mxu0 %v3608
        %4073 = vmatprep.subr.bf16.mxu0 %v3613
        %4074 = vmatpush1.bf16.msra.mxu0 %v3612
        %4075 = vmatprep.subr.bf16.mxu0 %v3617
        %4076 = vmatpush1.bf16.msra.mxu0 %v3616
        %4077 = vmatprep.subr.bf16.mxu0 %v3621
        %4078 = vmatpush1.bf16.msra.mxu0 %v3620
        %4079 = vmatprep.subr.bf16.mxu0 %v3625
        %4080 = vmatpush1.bf16.msra.mxu0 %v3624
        %4081 = vmatprep.subr.bf16.mxu0 %v3629
        %4082 = vmatpush1.bf16.msra.mxu0 %v3628
        %4083 = vmatprep.subr.bf16.mxu0 %v3633
        %4084 = vmatpush1.bf16.msra.mxu0 %v3632
        %4085 = vmatprep.subr.bf16.mxu0 %v3637
        %4086 = vmatpush1.bf16.msra.mxu0 %v3636
        %4087 = vmatprep.mubr.bf16.mxu0 %v3255
        %4088 = vmatmul.mubr.bf16.gmra.mrb[0].mxu0 %v3254
        %v4089 = vpop.f32.mrb[0].mxu0
        %v4090 = vadd.f32 0.0, %v4089
        %v4091 = vpop.f32.mrb[0].mxu0
        %v4092 = vadd.f32 0.0, %v4091
        %v4093 = vpop.f32.mrb[0].mxu0
        %v4094 = vadd.f32 0.0, %v4093
        %v4095 = vpop.f32.mrb[0].mxu0
        %v4096 = vadd.f32 0.0, %v4095
        %4097 = vmatprep.mubr.bf16.mxu0 %v3257
        %4098 = vmatmul.mubr.bf16.gmra.mrb[0].mxu0 %v3256
        %v4099 = vpop.f32.mrb[0].mxu0
        %v4100 = vadd.f32 0.0, %v4099
        %v4101 = vpop.f32.mrb[0].mxu0
        %v4102 = vadd.f32 0.0, %v4101
        %v4103 = vpop.f32.mrb[0].mxu0
        %v4104 = vadd.f32 0.0, %v4103
        %v4105 = vpop.f32.mrb[0].mxu0
        %v4106 = vadd.f32 0.0, %v4105
        %4107 = vmatprep.mubr.bf16.mxu0 %v3259
        %4108 = vmatmul.mubr.bf16.gmra.mrb[0].mxu0 %v3258
        %v4109 = vpop.f32.mrb[0].mxu0
        %v4110 = vadd.f32 0.0, %v4109
        %v4111 = vpop.f32.mrb[0].mxu0
        %v4112 = vadd.f32 0.0, %v4111
        %v4113 = vpop.f32.mrb[0].mxu0
        %v4114 = vadd.f32 0.0, %v4113
        %v4115 = vpop.f32.mrb[0].mxu0
        %v4116 = vadd.f32 0.0, %v4115
        %4117 = vmatprep.mubr.bf16.mxu0 %v3261
        %4118 = vmatmul.mubr.bf16.gmra.mrb[0].mxu0 %v3260
        %v4119 = vpop.f32.mrb[0].mxu0
        %v4120 = vadd.f32 0.0, %v4119
        %v4121 = vpop.f32.mrb[0].mxu0
        %v4122 = vadd.f32 0.0, %v4121
        %v4123 = vpop.f32.mrb[0].mxu0
        %v4124 = vadd.f32 0.0, %v4123
        %v4125 = vpop.f32.mrb[0].mxu0
        %v4126 = vadd.f32 0.0, %v4125
        %4127 = vmatprep.mubr.bf16.mxu0 %v3263
        %4128 = vmatmul.mubr.bf16.gmra.mrb[0].mxu0 %v3262
        %v4129 = vpop.f32.mrb[0].mxu0
        %v4130 = vadd.f32 0.0, %v4129
        %v4131 = vpop.f32.mrb[0].mxu0
        %v4132 = vadd.f32 0.0, %v4131
        %v4133 = vpop.f32.mrb[0].mxu0
        %v4134 = vadd.f32 0.0, %v4133
        %v4135 = vpop.f32.mrb[0].mxu0
        %v4136 = vadd.f32 0.0, %v4135
        %4137 = vmatprep.mubr.bf16.mxu0 %v3265
        %4138 = vmatmul.mubr.bf16.gmra.mrb[0].mxu0 %v3264
        %v4139 = vpop.f32.mrb[0].mxu0
        %v4140 = vadd.f32 0.0, %v4139
        %v4141 = vpop.f32.mrb[0].mxu0
        %v4142 = vadd.f32 0.0, %v4141
        %v4143 = vpop.f32.mrb[0].mxu0
        %v4144 = vadd.f32 0.0, %v4143
        %v4145 = vpop.f32.mrb[0].mxu0
        %v4146 = vadd.f32 0.0, %v4145
        %4147 = vmatprep.mubr.bf16.mxu0 %v3267
        %4148 = vmatmul.mubr.bf16.gmra.mrb[0].mxu0 %v3266
        %v4149 = vpop.f32.mrb[0].mxu0
        %v4150 = vadd.f32 0.0, %v4149
        %v4151 = vpop.f32.mrb[0].mxu0
        %v4152 = vadd.f32 0.0, %v4151
        %v4153 = vpop.f32.mrb[0].mxu0
        %v4154 = vadd.f32 0.0, %v4153
        %v4155 = vpop.f32.mrb[0].mxu0
        %v4156 = vadd.f32 0.0, %v4155
        %4157 = vmatprep.mubr.bf16.mxu0 %v3269
        %4158 = vmatmul.mubr.bf16.gmra.mrb[0].mxu0 %v3268
        %v4159 = vpop.f32.mrb[0].mxu0
        %v4160 = vadd.f32 0.0, %v4159
        %v4161 = vpop.f32.mrb[0].mxu0
        %v4162 = vadd.f32 0.0, %v4161
        %v4163 = vpop.f32.mrb[0].mxu0
        %v4164 = vadd.f32 0.0, %v4163
        %v4165 = vpop.f32.mrb[0].mxu0
        %v4166 = vadd.f32 0.0, %v4165
        %4167 = vmatprep.mubr.bf16.mxu0 %v3271
        %4168 = vmatmul.mubr.bf16.gmra.mrb[0].mxu0 %v3270
        %v4169 = vpop.f32.mrb[0].mxu0
        %v4170 = vadd.f32 0.0, %v4169
        %v4171 = vpop.f32.mrb[0].mxu0
        %v4172 = vadd.f32 0.0, %v4171
        %v4173 = vpop.f32.mrb[0].mxu0
        %v4174 = vadd.f32 0.0, %v4173
        %v4175 = vpop.f32.mrb[0].mxu0
        %v4176 = vadd.f32 0.0, %v4175
        %4177 = vmatprep.mubr.bf16.mxu0 %v3273
        %4178 = vmatmul.mubr.bf16.gmra.mrb[0].mxu0 %v3272
        %v4179 = vpop.f32.mrb[0].mxu0
        %v4180 = vadd.f32 0.0, %v4179
        %v4181 = vpop.f32.mrb[0].mxu0
        %v4182 = vadd.f32 0.0, %v4181
        %v4183 = vpop.f32.mrb[0].mxu0
        %v4184 = vadd.f32 0.0, %v4183
        %v4185 = vpop.f32.mrb[0].mxu0
        %v4186 = vadd.f32 0.0, %v4185
        %4187 = vmatprep.mubr.bf16.mxu0 %v3275
        %4188 = vmatmul.mubr.bf16.gmra.mrb[0].mxu0 %v3274
        %v4189 = vpop.f32.mrb[0].mxu0
        %v4190 = vadd.f32 0.0, %v4189
        %v4191 = vpop.f32.mrb[0].mxu0
        %v4192 = vadd.f32 0.0, %v4191
        %v4193 = vpop.f32.mrb[0].mxu0
        %v4194 = vadd.f32 0.0, %v4193
        %v4195 = vpop.f32.mrb[0].mxu0
        %v4196 = vadd.f32 0.0, %v4195
        %4197 = vmatprep.mubr.bf16.mxu0 %v3277
        %4198 = vmatmul.mubr.bf16.gmra.mrb[0].mxu0 %v3276
        %v4199 = vpop.f32.mrb[0].mxu0
        %v4200 = vadd.f32 0.0, %v4199
        %v4201 = vpop.f32.mrb[0].mxu0
        %v4202 = vadd.f32 0.0, %v4201
        %v4203 = vpop.f32.mrb[0].mxu0
        %v4204 = vadd.f32 0.0, %v4203
        %v4205 = vpop.f32.mrb[0].mxu0
        %v4206 = vadd.f32 0.0, %v4205
        %4207 = vmatprep.mubr.bf16.mxu0 %v3279
        %4208 = vmatmul.mubr.bf16.gmra.mrb[0].mxu0 %v3278
        %v4209 = vpop.f32.mrb[0].mxu0
        %v4210 = vadd.f32 0.0, %v4209
        %v4211 = vpop.f32.mrb[0].mxu0
        %v4212 = vadd.f32 0.0, %v4211
        %v4213 = vpop.f32.mrb[0].mxu0
        %v4214 = vadd.f32 0.0, %v4213
        %v4215 = vpop.f32.mrb[0].mxu0
        %v4216 = vadd.f32 0.0, %v4215
        %4217 = vmatprep.mubr.bf16.mxu0 %v3281
        %4218 = vmatmul.mubr.bf16.gmra.mrb[0].mxu0 %v3280
        %v4219 = vpop.f32.mrb[0].mxu0
        %v4220 = vadd.f32 0.0, %v4219
        %v4221 = vpop.f32.mrb[0].mxu0
        %v4222 = vadd.f32 0.0, %v4221
        %v4223 = vpop.f32.mrb[0].mxu0
        %v4224 = vadd.f32 0.0, %v4223
        %v4225 = vpop.f32.mrb[0].mxu0
        %v4226 = vadd.f32 0.0, %v4225
        %4227 = vmatprep.mubr.bf16.mxu0 %v3283
        %4228 = vmatmul.mubr.bf16.gmra.mrb[0].mxu0 %v3282
        %v4229 = vpop.f32.mrb[0].mxu0
        %v4230 = vadd.f32 0.0, %v4229
        %v4231 = vpop.f32.mrb[0].mxu0
        %v4232 = vadd.f32 0.0, %v4231
        %v4233 = vpop.f32.mrb[0].mxu0
        %v4234 = vadd.f32 0.0, %v4233
        %v4235 = vpop.f32.mrb[0].mxu0
        %v4236 = vadd.f32 0.0, %v4235
        %4237 = vmatprep.mubr.bf16.mxu0 %v3285
        %4238 = vmatmul.mubr.bf16.gmra.mrb[0].mxu0 %v3284
        %v4239 = vpop.f32.mrb[0].mxu0
        %v4240 = vadd.f32 0.0, %v4239
        %v4241 = vpop.f32.mrb[0].mxu0
        %v4242 = vadd.f32 0.0, %v4241
        %v4243 = vpop.f32.mrb[0].mxu0
        %v4244 = vadd.f32 0.0, %v4243
        %v4245 = vpop.f32.mrb[0].mxu0
        %v4246 = vadd.f32 0.0, %v4245
        %4247 = vmatprep.mubr.bf16.mxu0 %v3287
        %4248 = vmatmul.mubr.bf16.gmra.mrb[0].mxu0 %v3286
        %v4249 = vpop.f32.mrb[0].mxu0
        %v4250 = vadd.f32 0.0, %v4249
        %v4251 = vpop.f32.mrb[0].mxu0
        %v4252 = vadd.f32 0.0, %v4251
        %v4253 = vpop.f32.mrb[0].mxu0
        %v4254 = vadd.f32 0.0, %v4253
        %v4255 = vpop.f32.mrb[0].mxu0
        %v4256 = vadd.f32 0.0, %v4255
        %4257 = vmatprep.mubr.bf16.mxu0 %v3289
        %4258 = vmatmul.mubr.bf16.gmra.mrb[0].mxu0 %v3288
        %v4259 = vpop.f32.mrb[0].mxu0
        %v4260 = vadd.f32 0.0, %v4259
        %v4261 = vpop.f32.mrb[0].mxu0
        %v4262 = vadd.f32 0.0, %v4261
        %v4263 = vpop.f32.mrb[0].mxu0
        %v4264 = vadd.f32 0.0, %v4263
        %v4265 = vpop.f32.mrb[0].mxu0
        %v4266 = vadd.f32 0.0, %v4265
        %4267 = vmatprep.mubr.bf16.mxu0 %v3291
        %4268 = vmatmul.mubr.bf16.gmra.mrb[0].mxu0 %v3290
        %v4269 = vpop.f32.mrb[0].mxu0
        %v4270 = vadd.f32 0.0, %v4269
        %v4271 = vpop.f32.mrb[0].mxu0
        %v4272 = vadd.f32 0.0, %v4271
        %v4273 = vpop.f32.mrb[0].mxu0
        %v4274 = vadd.f32 0.0, %v4273
        %v4275 = vpop.f32.mrb[0].mxu0
        %v4276 = vadd.f32 0.0, %v4275
        %4277 = vmatprep.mubr.bf16.mxu0 %v3293
        %4278 = vmatmul.mubr.bf16.gmra.mrb[0].mxu0 %v3292
        %v4279 = vpop.f32.mrb[0].mxu0
        %v4280 = vadd.f32 0.0, %v4279
        %v4281 = vpop.f32.mrb[0].mxu0
        %v4282 = vadd.f32 0.0, %v4281
        %v4283 = vpop.f32.mrb[0].mxu0
        %v4284 = vadd.f32 0.0, %v4283
        %v4285 = vpop.f32.mrb[0].mxu0
        %v4286 = vadd.f32 0.0, %v4285
        %4287 = vmatprep.mubr.bf16.mxu0 %v3295
        %4288 = vmatmul.mubr.bf16.gmra.mrb[0].mxu0 %v3294
        %v4289 = vpop.f32.mrb[0].mxu0
        %v4290 = vadd.f32 0.0, %v4289
        %v4291 = vpop.f32.mrb[0].mxu0
        %v4292 = vadd.f32 0.0, %v4291
        %v4293 = vpop.f32.mrb[0].mxu0
        %v4294 = vadd.f32 0.0, %v4293
        %v4295 = vpop.f32.mrb[0].mxu0
        %v4296 = vadd.f32 0.0, %v4295
        %4297 = vmatprep.mubr.bf16.mxu0 %v3297
        %4298 = vmatmul.mubr.bf16.gmra.mrb[0].mxu0 %v3296
        %v4299 = vpop.f32.mrb[0].mxu0
        %v4300 = vadd.f32 0.0, %v4299
        %v4301 = vpop.f32.mrb[0].mxu0
        %v4302 = vadd.f32 0.0, %v4301
        %v4303 = vpop.f32.mrb[0].mxu0
        %v4304 = vadd.f32 0.0, %v4303
        %v4305 = vpop.f32.mrb[0].mxu0
        %v4306 = vadd.f32 0.0, %v4305
        %4307 = vmatprep.mubr.bf16.mxu0 %v3299
        %4308 = vmatmul.mubr.bf16.gmra.mrb[0].mxu0 %v3298
        %v4309 = vpop.f32.mrb[0].mxu0
        %v4310 = vadd.f32 0.0, %v4309
        %v4311 = vpop.f32.mrb[0].mxu0
        %v4312 = vadd.f32 0.0, %v4311
        %v4313 = vpop.f32.mrb[0].mxu0
        %v4314 = vadd.f32 0.0, %v4313
        %v4315 = vpop.f32.mrb[0].mxu0
        %v4316 = vadd.f32 0.0, %v4315
        %4317 = vmatprep.mubr.bf16.mxu0 %v3301
        %4318 = vmatmul.mubr.bf16.gmra.mrb[0].mxu0 %v3300
        %v4319 = vpop.f32.mrb[0].mxu0
        %v4320 = vadd.f32 0.0, %v4319
        %v4321 = vpop.f32.mrb[0].mxu0
        %v4322 = vadd.f32 0.0, %v4321
        %v4323 = vpop.f32.mrb[0].mxu0
        %v4324 = vadd.f32 0.0, %v4323
        %v4325 = vpop.f32.mrb[0].mxu0
        %v4326 = vadd.f32 0.0, %v4325
        %4327 = vmatprep.mubr.bf16.mxu0 %v3303
        %4328 = vmatmul.mubr.bf16.gmra.mrb[0].mxu0 %v3302
        %v4329 = vpop.f32.mrb[0].mxu0
        %v4330 = vadd.f32 0.0, %v4329
        %v4331 = vpop.f32.mrb[0].mxu0
        %v4332 = vadd.f32 0.0, %v4331
        %v4333 = vpop.f32.mrb[0].mxu0
        %v4334 = vadd.f32 0.0, %v4333
        %v4335 = vpop.f32.mrb[0].mxu0
        %v4336 = vadd.f32 0.0, %v4335
        %4337 = vmatprep.mubr.bf16.mxu0 %v3305
        %4338 = vmatmul.mubr.bf16.gmra.mrb[0].mxu0 %v3304
        %v4339 = vpop.f32.mrb[0].mxu0
        %v4340 = vadd.f32 0.0, %v4339
        %v4341 = vpop.f32.mrb[0].mxu0
        %v4342 = vadd.f32 0.0, %v4341
        %v4343 = vpop.f32.mrb[0].mxu0
        %v4344 = vadd.f32 0.0, %v4343
        %v4345 = vpop.f32.mrb[0].mxu0
        %v4346 = vadd.f32 0.0, %v4345
        %4347 = vmatprep.mubr.bf16.mxu0 %v3307
        %4348 = vmatmul.mubr.bf16.gmra.mrb[0].mxu0 %v3306
        %v4349 = vpop.f32.mrb[0].mxu0
        %v4350 = vadd.f32 0.0, %v4349
        %v4351 = vpop.f32.mrb[0].mxu0
        %v4352 = vadd.f32 0.0, %v4351
        %v4353 = vpop.f32.mrb[0].mxu0
        %v4354 = vadd.f32 0.0, %v4353
        %v4355 = vpop.f32.mrb[0].mxu0
        %v4356 = vadd.f32 0.0, %v4355
        %4357 = vmatprep.mubr.bf16.mxu0 %v3309
        %4358 = vmatmul.mubr.bf16.gmra.mrb[0].mxu0 %v3308
        %v4359 = vpop.f32.mrb[0].mxu0
        %v4360 = vadd.f32 0.0, %v4359
        %v4361 = vpop.f32.mrb[0].mxu0
        %v4362 = vadd.f32 0.0, %v4361
        %v4363 = vpop.f32.mrb[0].mxu0
        %v4364 = vadd.f32 0.0, %v4363
        %v4365 = vpop.f32.mrb[0].mxu0
        %v4366 = vadd.f32 0.0, %v4365
        %4367 = vmatprep.mubr.bf16.mxu0 %v3311
        %4368 = vmatmul.mubr.bf16.gmra.mrb[0].mxu0 %v3310
        %v4369 = vpop.f32.mrb[0].mxu0
        %v4370 = vadd.f32 0.0, %v4369
        %v4371 = vpop.f32.mrb[0].mxu0
        %v4372 = vadd.f32 0.0, %v4371
        %v4373 = vpop.f32.mrb[0].mxu0
        %v4374 = vadd.f32 0.0, %v4373
        %v4375 = vpop.f32.mrb[0].mxu0
        %v4376 = vadd.f32 0.0, %v4375
        %4377 = vmatprep.mubr.bf16.mxu0 %v3313
        %4378 = vmatmul.mubr.bf16.gmra.mrb[0].mxu0 %v3312
        %v4379 = vpop.f32.mrb[0].mxu0
        %v4380 = vadd.f32 0.0, %v4379
        %v4381 = vpop.f32.mrb[0].mxu0
        %v4382 = vadd.f32 0.0, %v4381
        %v4383 = vpop.f32.mrb[0].mxu0
        %v4384 = vadd.f32 0.0, %v4383
        %v4385 = vpop.f32.mrb[0].mxu0
        %v4386 = vadd.f32 0.0, %v4385
        %4387 = vmatprep.mubr.bf16.mxu0 %v3315
        %4388 = vmatmul.mubr.bf16.gmra.mrb[0].mxu0 %v3314
        %v4389 = vpop.f32.mrb[0].mxu0
        %v4390 = vadd.f32 0.0, %v4389
        %v4391 = vpop.f32.mrb[0].mxu0
        %v4392 = vadd.f32 0.0, %v4391
        %v4393 = vpop.f32.mrb[0].mxu0
        %v4394 = vadd.f32 0.0, %v4393
        %v4395 = vpop.f32.mrb[0].mxu0
        %v4396 = vadd.f32 0.0, %v4395
        %4397 = vmatprep.mubr.bf16.mxu0 %v3317
        %4398 = vmatmul.mubr.bf16.gmra.mrb[0].mxu0 %v3316
        %v4399 = vpop.f32.mrb[0].mxu0
        %v4400 = vadd.f32 0.0, %v4399
        %v4401 = vpop.f32.mrb[0].mxu0
        %v4402 = vadd.f32 0.0, %v4401
        %v4403 = vpop.f32.mrb[0].mxu0
        %v4404 = vadd.f32 0.0, %v4403
        %v4405 = vpop.f32.mrb[0].mxu0
        %v4406 = vadd.f32 0.0, %v4405
        %4407 = vdwg.mxu0
        %v4416 = vcombine.low %v3203, %v3205
        %v4417 = vcombine.high %v3203, %v3205
        %v4418 = vcombine.low %v3246, %v3248
        %v4419 = vcombine.high %v3246, %v3248
        %v4421 = vunpack.c.l.s4 1966171168
        %v4422 = vunpack.c.0.s8 %v4421
        %v4423 = vlaneseq
        %v4424 = vshrl.u32 %v4423, 7
        %v4425 = vsub.s32 %v4422, %v4424
        %v4426 = vrot.slane %v4416, %v4425
        %v4428 = vunpack.c.l.s4 1966171168
        %v4429 = vunpack.c.0.s8 %v4428
        %v4430 = vlaneseq
        %v4431 = vshrl.u32 %v4430, 7
        %v4432 = vsub.s32 %v4429, %v4431
        %v4433 = vrot.slane %v4417, %v4432
        %v4435 = vunpack.c.l.s4 1966171168
        %v4436 = vunpack.c.0.s8 %v4435
        %v4437 = vlaneseq
        %v4438 = vshrl.u32 %v4437, 7
        %v4439 = vsub.s32 %v4436, %v4438
        %v4440 = vrot.slane %v4418, %v4439
        %v4442 = vunpack.c.l.s4 1966171168
        %v4443 = vunpack.c.0.s8 %v4442
        %v4444 = vlaneseq
        %v4445 = vshrl.u32 %v4444, 7
        %v4446 = vsub.s32 %v4443, %v4445
        %v4447 = vrot.slane %v4419, %v4446
        %v4448 = vcombine.low %v4426, %v4440
        %v4449 = vcombine.high %v4426, %v4440
        %v4450 = vcombine.low %v4433, %v4447
        %v4451 = vcombine.high %v4433, %v4447
        %v4453 = vunpack.c.l.s4 1966171168
        %v4454 = vunpack.c.0.s8 %v4453
        %v4455 = vlaneseq
        %v4456 = vshrl.u32 %v4455, 7
        %v4457 = vsub.s32 %v4454, %v4456
        %v4458 = vrot.slane %v4448, %v4457
        %v4460 = vunpack.c.l.s4 1966171168
        %v4461 = vunpack.c.0.s8 %v4460
        %v4462 = vlaneseq
        %v4463 = vshrl.u32 %v4462, 7
        %v4464 = vsub.s32 %v4461, %v4463
        %v4465 = vrot.slane %v4450, %v4464
        %v4467 = vunpack.c.l.s4 1966171168
        %v4468 = vunpack.c.0.s8 %v4467
        %v4469 = vlaneseq
        %v4470 = vshrl.u32 %v4469, 7
        %v4471 = vsub.s32 %v4468, %v4470
        %v4472 = vrot.slane %v4449, %v4471
        %v4474 = vunpack.c.l.s4 1966171168
        %v4475 = vunpack.c.0.s8 %v4474
        %v4476 = vlaneseq
        %v4477 = vshrl.u32 %v4476, 7
        %v4478 = vsub.s32 %v4475, %v4477
        %v4479 = vrot.slane %v4451, %v4478
        %v4480 = vcombine.high %v4458, %v4458
        %v4481 = vcombine.high %v4465, %v4465
        %v4482 = vcombine.high %v4472, %v4472
        %v4483 = vcombine.high %v4479, %v4479
        %v4484 = vcombine.low %v3207, %v3209
        %v4485 = vcombine.high %v3207, %v3209
        %v4486 = vcombine.low %v3250, %v3252
        %v4487 = vcombine.high %v3250, %v3252
        %v4489 = vunpack.c.l.s4 1966171168
        %v4490 = vunpack.c.0.s8 %v4489
        %v4491 = vlaneseq
        %v4492 = vshrl.u32 %v4491, 7
        %v4493 = vsub.s32 %v4490, %v4492
        %v4494 = vrot.slane %v4484, %v4493
        %v4496 = vunpack.c.l.s4 1966171168
        %v4497 = vunpack.c.0.s8 %v4496
        %v4498 = vlaneseq
        %v4499 = vshrl.u32 %v4498, 7
        %v4500 = vsub.s32 %v4497, %v4499
        %v4501 = vrot.slane %v4485, %v4500
        %v4503 = vunpack.c.l.s4 1966171168
        %v4504 = vunpack.c.0.s8 %v4503
        %v4505 = vlaneseq
        %v4506 = vshrl.u32 %v4505, 7
        %v4507 = vsub.s32 %v4504, %v4506
        %v4508 = vrot.slane %v4486, %v4507
        %v4510 = vunpack.c.l.s4 1966171168
        %v4511 = vunpack.c.0.s8 %v4510
        %v4512 = vlaneseq
        %v4513 = vshrl.u32 %v4512, 7
        %v4514 = vsub.s32 %v4511, %v4513
        %v4515 = vrot.slane %v4487, %v4514
        %v4516 = vcombine.low %v4494, %v4508
        %v4517 = vcombine.high %v4494, %v4508
        %v4518 = vcombine.low %v4501, %v4515
        %v4519 = vcombine.high %v4501, %v4515
        %v4521 = vunpack.c.l.s4 1966171168
        %v4522 = vunpack.c.0.s8 %v4521
        %v4523 = vlaneseq
        %v4524 = vshrl.u32 %v4523, 7
        %v4525 = vsub.s32 %v4522, %v4524
        %v4526 = vrot.slane %v4516, %v4525
        %v4528 = vunpack.c.l.s4 1966171168
        %v4529 = vunpack.c.0.s8 %v4528
        %v4530 = vlaneseq
        %v4531 = vshrl.u32 %v4530, 7
        %v4532 = vsub.s32 %v4529, %v4531
        %v4533 = vrot.slane %v4518, %v4532
        %v4535 = vunpack.c.l.s4 1966171168
        %v4536 = vunpack.c.0.s8 %v4535
        %v4537 = vlaneseq
        %v4538 = vshrl.u32 %v4537, 7
        %v4539 = vsub.s32 %v4536, %v4538
        %v4540 = vrot.slane %v4517, %v4539
        %v4542 = vunpack.c.l.s4 1966171168
        %v4543 = vunpack.c.0.s8 %v4542
        %v4544 = vlaneseq
        %v4545 = vshrl.u32 %v4544, 7
        %v4546 = vsub.s32 %v4543, %v4545
        %v4547 = vrot.slane %v4519, %v4546
        %v4548 = vcombine.high %v4526, %v4526
        %v4549 = vcombine.high %v4533, %v4533
        %v4550 = vcombine.high %v4540, %v4540
        %v4551 = vcombine.high %v4547, %v4547
        %v4552 = vlaneseq
        %v4553 = vshrl.u32 %v4552, 7
        %v4554 = vsub.s32 0, %v4553
        %v4555 = vrot.slane %v4458, %v4554
        %v4556 = vlaneseq
        %v4557 = vshrl.u32 %v4556, 7
        %v4558 = vsub.s32 1, %v4557
        %v4559 = vrot.slane %v4458, %v4558
        %v4560 = vlaneseq
        %v4561 = vshrl.u32 %v4560, 7
        %v4562 = vsub.s32 2, %v4561
        %v4563 = vrot.slane %v4458, %v4562
        %v4564 = vlaneseq
        %v4565 = vshrl.u32 %v4564, 7
        %v4566 = vsub.s32 3, %v4565
        %v4567 = vrot.slane %v4458, %v4566
        %v4568 = vlaneseq
        %v4569 = vshrl.u32 %v4568, 7
        %v4570 = vsub.s32 0, %v4569
        %v4571 = vrot.slane %v4472, %v4570
        %v4572 = vlaneseq
        %v4573 = vshrl.u32 %v4572, 7
        %v4574 = vsub.s32 1, %v4573
        %v4575 = vrot.slane %v4472, %v4574
        %v4576 = vlaneseq
        %v4577 = vshrl.u32 %v4576, 7
        %v4578 = vsub.s32 2, %v4577
        %v4579 = vrot.slane %v4472, %v4578
        %v4580 = vlaneseq
        %v4581 = vshrl.u32 %v4580, 7
        %v4582 = vsub.s32 3, %v4581
        %v4583 = vrot.slane %v4472, %v4582
        %v4584 = vlaneseq
        %v4585 = vshrl.u32 %v4584, 7
        %v4586 = vsub.s32 0, %v4585
        %v4587 = vrot.slane %v4480, %v4586
        %v4588 = vlaneseq
        %v4589 = vshrl.u32 %v4588, 7
        %v4590 = vsub.s32 1, %v4589
        %v4591 = vrot.slane %v4480, %v4590
        %v4592 = vlaneseq
        %v4593 = vshrl.u32 %v4592, 7
        %v4594 = vsub.s32 2, %v4593
        %v4595 = vrot.slane %v4480, %v4594
        %v4596 = vlaneseq
        %v4597 = vshrl.u32 %v4596, 7
        %v4598 = vsub.s32 3, %v4597
        %v4599 = vrot.slane %v4480, %v4598
        %v4600 = vlaneseq
        %v4601 = vshrl.u32 %v4600, 7
        %v4602 = vsub.s32 0, %v4601
        %v4603 = vrot.slane %v4482, %v4602
        %v4604 = vlaneseq
        %v4605 = vshrl.u32 %v4604, 7
        %v4606 = vsub.s32 1, %v4605
        %v4607 = vrot.slane %v4482, %v4606
        %v4608 = vlaneseq
        %v4609 = vshrl.u32 %v4608, 7
        %v4610 = vsub.s32 2, %v4609
        %v4611 = vrot.slane %v4482, %v4610
        %v4612 = vlaneseq
        %v4613 = vshrl.u32 %v4612, 7
        %v4614 = vsub.s32 3, %v4613
        %v4615 = vrot.slane %v4482, %v4614
        %v4616 = vlaneseq
        %v4617 = vshrl.u32 %v4616, 7
        %v4618 = vsub.s32 0, %v4617
        %v4619 = vrot.slane %v4465, %v4618
        %v4620 = vlaneseq
        %v4621 = vshrl.u32 %v4620, 7
        %v4622 = vsub.s32 1, %v4621
        %v4623 = vrot.slane %v4465, %v4622
        %v4624 = vlaneseq
        %v4625 = vshrl.u32 %v4624, 7
        %v4626 = vsub.s32 2, %v4625
        %v4627 = vrot.slane %v4465, %v4626
        %v4628 = vlaneseq
        %v4629 = vshrl.u32 %v4628, 7
        %v4630 = vsub.s32 3, %v4629
        %v4631 = vrot.slane %v4465, %v4630
        %v4632 = vlaneseq
        %v4633 = vshrl.u32 %v4632, 7
        %v4634 = vsub.s32 0, %v4633
        %v4635 = vrot.slane %v4479, %v4634
        %v4636 = vlaneseq
        %v4637 = vshrl.u32 %v4636, 7
        %v4638 = vsub.s32 1, %v4637
        %v4639 = vrot.slane %v4479, %v4638
        %v4640 = vlaneseq
        %v4641 = vshrl.u32 %v4640, 7
        %v4642 = vsub.s32 2, %v4641
        %v4643 = vrot.slane %v4479, %v4642
        %v4644 = vlaneseq
        %v4645 = vshrl.u32 %v4644, 7
        %v4646 = vsub.s32 3, %v4645
        %v4647 = vrot.slane %v4479, %v4646
        %v4648 = vlaneseq
        %v4649 = vshrl.u32 %v4648, 7
        %v4650 = vsub.s32 0, %v4649
        %v4651 = vrot.slane %v4481, %v4650
        %v4652 = vlaneseq
        %v4653 = vshrl.u32 %v4652, 7
        %v4654 = vsub.s32 1, %v4653
        %v4655 = vrot.slane %v4481, %v4654
        %v4656 = vlaneseq
        %v4657 = vshrl.u32 %v4656, 7
        %v4658 = vsub.s32 2, %v4657
        %v4659 = vrot.slane %v4481, %v4658
        %v4660 = vlaneseq
        %v4661 = vshrl.u32 %v4660, 7
        %v4662 = vsub.s32 3, %v4661
        %v4663 = vrot.slane %v4481, %v4662
        %v4664 = vlaneseq
        %v4665 = vshrl.u32 %v4664, 7
        %v4666 = vsub.s32 0, %v4665
        %v4667 = vrot.slane %v4483, %v4666
        %v4668 = vlaneseq
        %v4669 = vshrl.u32 %v4668, 7
        %v4670 = vsub.s32 1, %v4669
        %v4671 = vrot.slane %v4483, %v4670
        %v4672 = vlaneseq
        %v4673 = vshrl.u32 %v4672, 7
        %v4674 = vsub.s32 2, %v4673
        %v4675 = vrot.slane %v4483, %v4674
        %v4676 = vlaneseq
        %v4677 = vshrl.u32 %v4676, 7
        %v4678 = vsub.s32 3, %v4677
        %v4679 = vrot.slane %v4483, %v4678
        %v4680 = vlaneseq
        %v4681 = vshrl.u32 %v4680, 7
        %v4682 = vsub.s32 0, %v4681
        %v4683 = vrot.slane %v4526, %v4682
        %v4684 = vlaneseq
        %v4685 = vshrl.u32 %v4684, 7
        %v4686 = vsub.s32 1, %v4685
        %v4687 = vrot.slane %v4526, %v4686
        %v4688 = vlaneseq
        %v4689 = vshrl.u32 %v4688, 7
        %v4690 = vsub.s32 2, %v4689
        %v4691 = vrot.slane %v4526, %v4690
        %v4692 = vlaneseq
        %v4693 = vshrl.u32 %v4692, 7
        %v4694 = vsub.s32 3, %v4693
        %v4695 = vrot.slane %v4526, %v4694
        %v4696 = vlaneseq
        %v4697 = vshrl.u32 %v4696, 7
        %v4698 = vsub.s32 0, %v4697
        %v4699 = vrot.slane %v4540, %v4698
        %v4700 = vlaneseq
        %v4701 = vshrl.u32 %v4700, 7
        %v4702 = vsub.s32 1, %v4701
        %v4703 = vrot.slane %v4540, %v4702
        %v4704 = vlaneseq
        %v4705 = vshrl.u32 %v4704, 7
        %v4706 = vsub.s32 2, %v4705
        %v4707 = vrot.slane %v4540, %v4706
        %v4708 = vlaneseq
        %v4709 = vshrl.u32 %v4708, 7
        %v4710 = vsub.s32 3, %v4709
        %v4711 = vrot.slane %v4540, %v4710
        %v4712 = vlaneseq
        %v4713 = vshrl.u32 %v4712, 7
        %v4714 = vsub.s32 0, %v4713
        %v4715 = vrot.slane %v4548, %v4714
        %v4716 = vlaneseq
        %v4717 = vshrl.u32 %v4716, 7
        %v4718 = vsub.s32 1, %v4717
        %v4719 = vrot.slane %v4548, %v4718
        %v4720 = vlaneseq
        %v4721 = vshrl.u32 %v4720, 7
        %v4722 = vsub.s32 2, %v4721
        %v4723 = vrot.slane %v4548, %v4722
        %v4724 = vlaneseq
        %v4725 = vshrl.u32 %v4724, 7
        %v4726 = vsub.s32 3, %v4725
        %v4727 = vrot.slane %v4548, %v4726
        %v4728 = vlaneseq
        %v4729 = vshrl.u32 %v4728, 7
        %v4730 = vsub.s32 0, %v4729
        %v4731 = vrot.slane %v4550, %v4730
        %v4732 = vlaneseq
        %v4733 = vshrl.u32 %v4732, 7
        %v4734 = vsub.s32 1, %v4733
        %v4735 = vrot.slane %v4550, %v4734
        %v4736 = vlaneseq
        %v4737 = vshrl.u32 %v4736, 7
        %v4738 = vsub.s32 2, %v4737
        %v4739 = vrot.slane %v4550, %v4738
        %v4740 = vlaneseq
        %v4741 = vshrl.u32 %v4740, 7
        %v4742 = vsub.s32 3, %v4741
        %v4743 = vrot.slane %v4550, %v4742
        %v4744 = vlaneseq
        %v4745 = vshrl.u32 %v4744, 7
        %v4746 = vsub.s32 0, %v4745
        %v4747 = vrot.slane %v4533, %v4746
        %v4748 = vlaneseq
        %v4749 = vshrl.u32 %v4748, 7
        %v4750 = vsub.s32 1, %v4749
        %v4751 = vrot.slane %v4533, %v4750
        %v4752 = vlaneseq
        %v4753 = vshrl.u32 %v4752, 7
        %v4754 = vsub.s32 2, %v4753
        %v4755 = vrot.slane %v4533, %v4754
        %v4756 = vlaneseq
        %v4757 = vshrl.u32 %v4756, 7
        %v4758 = vsub.s32 3, %v4757
        %v4759 = vrot.slane %v4533, %v4758
        %v4760 = vlaneseq
        %v4761 = vshrl.u32 %v4760, 7
        %v4762 = vsub.s32 0, %v4761
        %v4763 = vrot.slane %v4547, %v4762
        %v4764 = vlaneseq
        %v4765 = vshrl.u32 %v4764, 7
        %v4766 = vsub.s32 1, %v4765
        %v4767 = vrot.slane %v4547, %v4766
        %v4768 = vlaneseq
        %v4769 = vshrl.u32 %v4768, 7
        %v4770 = vsub.s32 2, %v4769
        %v4771 = vrot.slane %v4547, %v4770
        %v4772 = vlaneseq
        %v4773 = vshrl.u32 %v4772, 7
        %v4774 = vsub.s32 3, %v4773
        %v4775 = vrot.slane %v4547, %v4774
        %v4776 = vlaneseq
        %v4777 = vshrl.u32 %v4776, 7
        %v4778 = vsub.s32 0, %v4777
        %v4779 = vrot.slane %v4549, %v4778
        %v4780 = vlaneseq
        %v4781 = vshrl.u32 %v4780, 7
        %v4782 = vsub.s32 1, %v4781
        %v4783 = vrot.slane %v4549, %v4782
        %v4784 = vlaneseq
        %v4785 = vshrl.u32 %v4784, 7
        %v4786 = vsub.s32 2, %v4785
        %v4787 = vrot.slane %v4549, %v4786
        %v4788 = vlaneseq
        %v4789 = vshrl.u32 %v4788, 7
        %v4790 = vsub.s32 3, %v4789
        %v4791 = vrot.slane %v4549, %v4790
        %v4792 = vlaneseq
        %v4793 = vshrl.u32 %v4792, 7
        %v4794 = vsub.s32 0, %v4793
        %v4795 = vrot.slane %v4551, %v4794
        %v4796 = vlaneseq
        %v4797 = vshrl.u32 %v4796, 7
        %v4798 = vsub.s32 1, %v4797
        %v4799 = vrot.slane %v4551, %v4798
        %v4800 = vlaneseq
        %v4801 = vshrl.u32 %v4800, 7
        %v4802 = vsub.s32 2, %v4801
        %v4803 = vrot.slane %v4551, %v4802
        %v4804 = vlaneseq
        %v4805 = vshrl.u32 %v4804, 7
        %v4806 = vsub.s32 3, %v4805
        %v4807 = vrot.slane %v4551, %v4806
        %v4872 = vadd.f32 %v3737, %v4555
        %v4873 = vadd.f32 %v3739, %v4559
        %v4874 = vadd.f32 %v4090, %v4563
        %v4875 = vadd.f32 %v4092, %v4567
        %v4876 = vadd.f32 %v3741, %v4555
        %v4877 = vadd.f32 %v3743, %v4559
        %v4878 = vadd.f32 %v4094, %v4563
        %v4879 = vadd.f32 %v4096, %v4567
        %v4880 = vadd.f32 %v3747, %v4555
        %v4881 = vadd.f32 %v3749, %v4559
        %v4882 = vadd.f32 %v4100, %v4563
        %v4883 = vadd.f32 %v4102, %v4567
        %v4884 = vadd.f32 %v3751, %v4555
        %v4885 = vadd.f32 %v3753, %v4559
        %v4886 = vadd.f32 %v4104, %v4563
        %v4887 = vadd.f32 %v4106, %v4567
        %v4888 = vadd.f32 %v3757, %v4571
        %v4889 = vadd.f32 %v3759, %v4575
        %v4890 = vadd.f32 %v4110, %v4579
        %v4891 = vadd.f32 %v4112, %v4583
        %v4892 = vadd.f32 %v3761, %v4571
        %v4893 = vadd.f32 %v3763, %v4575
        %v4894 = vadd.f32 %v4114, %v4579
        %v4895 = vadd.f32 %v4116, %v4583
        %v4896 = vadd.f32 %v3767, %v4571
        %v4897 = vadd.f32 %v3769, %v4575
        %v4898 = vadd.f32 %v4120, %v4579
        %v4899 = vadd.f32 %v4122, %v4583
        %v4900 = vadd.f32 %v3771, %v4571
        %v4901 = vadd.f32 %v3773, %v4575
        %v4902 = vadd.f32 %v4124, %v4579
        %v4903 = vadd.f32 %v4126, %v4583
        %v4904 = vadd.f32 %v3777, %v4587
        %v4905 = vadd.f32 %v3779, %v4591
        %v4906 = vadd.f32 %v4130, %v4595
        %v4907 = vadd.f32 %v4132, %v4599
        %v4908 = vadd.f32 %v3781, %v4587
        %v4909 = vadd.f32 %v3783, %v4591
        %v4910 = vadd.f32 %v4134, %v4595
        %v4911 = vadd.f32 %v4136, %v4599
        %v4912 = vadd.f32 %v3787, %v4587
        %v4913 = vadd.f32 %v3789, %v4591
        %v4914 = vadd.f32 %v4140, %v4595
        %v4915 = vadd.f32 %v4142, %v4599
        %v4916 = vadd.f32 %v3791, %v4587
        %v4917 = vadd.f32 %v3793, %v4591
        %v4918 = vadd.f32 %v4144, %v4595
        %v4919 = vadd.f32 %v4146, %v4599
        %v4920 = vadd.f32 %v3797, %v4603
        %v4921 = vadd.f32 %v3799, %v4607
        %v4922 = vadd.f32 %v4150, %v4611
        %v4923 = vadd.f32 %v4152, %v4615
        %v4924 = vadd.f32 %v3801, %v4603
        %v4925 = vadd.f32 %v3803, %v4607
        %v4926 = vadd.f32 %v4154, %v4611
        %v4927 = vadd.f32 %v4156, %v4615
        %v4928 = vadd.f32 %v3807, %v4603
        %v4929 = vadd.f32 %v3809, %v4607
        %v4930 = vadd.f32 %v4160, %v4611
        %v4931 = vadd.f32 %v4162, %v4615
        %v4932 = vadd.f32 %v3811, %v4603
        %v4933 = vadd.f32 %v3813, %v4607
        %v4934 = vadd.f32 %v4164, %v4611
        %v4935 = vadd.f32 %v4166, %v4615
        %v4936 = vadd.f32 %v3817, %v4619
        %v4937 = vadd.f32 %v3819, %v4623
        %v4938 = vadd.f32 %v4170, %v4627
        %v4939 = vadd.f32 %v4172, %v4631
        %v4940 = vadd.f32 %v3821, %v4619
        %v4941 = vadd.f32 %v3823, %v4623
        %v4942 = vadd.f32 %v4174, %v4627
        %v4943 = vadd.f32 %v4176, %v4631
        %v4944 = vadd.f32 %v3827, %v4619
        %v4945 = vadd.f32 %v3829, %v4623
        %v4946 = vadd.f32 %v4180, %v4627
        %v4947 = vadd.f32 %v4182, %v4631
        %v4948 = vadd.f32 %v3831, %v4619
        %v4949 = vadd.f32 %v3833, %v4623
        %v4950 = vadd.f32 %v4184, %v4627
        %v4951 = vadd.f32 %v4186, %v4631
        %v4952 = vadd.f32 %v3837, %v4635
        %v4953 = vadd.f32 %v3839, %v4639
        %v4954 = vadd.f32 %v4190, %v4643
        %v4955 = vadd.f32 %v4192, %v4647
        %v4956 = vadd.f32 %v3841, %v4635
        %v4957 = vadd.f32 %v3843, %v4639
        %v4958 = vadd.f32 %v4194, %v4643
        %v4959 = vadd.f32 %v4196, %v4647
        %v4960 = vadd.f32 %v3847, %v4635
        %v4961 = vadd.f32 %v3849, %v4639
        %v4962 = vadd.f32 %v4200, %v4643
        %v4963 = vadd.f32 %v4202, %v4647
        %v4964 = vadd.f32 %v3851, %v4635
        %v4965 = vadd.f32 %v3853, %v4639
        %v4966 = vadd.f32 %v4204, %v4643
        %v4967 = vadd.f32 %v4206, %v4647
        %v4968 = vadd.f32 %v3857, %v4651
        %v4969 = vadd.f32 %v3859, %v4655
        %v4970 = vadd.f32 %v4210, %v4659
        %v4971 = vadd.f32 %v4212, %v4663
        %v4972 = vadd.f32 %v3861, %v4651
        %v4973 = vadd.f32 %v3863, %v4655
        %v4974 = vadd.f32 %v4214, %v4659
        %v4975 = vadd.f32 %v4216, %v4663
        %v4976 = vadd.f32 %v3867, %v4651
        %v4977 = vadd.f32 %v3869, %v4655
        %v4978 = vadd.f32 %v4220, %v4659
        %v4979 = vadd.f32 %v4222, %v4663
        %v4980 = vadd.f32 %v3871, %v4651
        %v4981 = vadd.f32 %v3873, %v4655
        %v4982 = vadd.f32 %v4224, %v4659
        %v4983 = vadd.f32 %v4226, %v4663
        %v4984 = vadd.f32 %v3877, %v4667
        %v4985 = vadd.f32 %v3879, %v4671
        %v4986 = vadd.f32 %v4230, %v4675
        %v4987 = vadd.f32 %v4232, %v4679
        %v4988 = vadd.f32 %v3881, %v4667
        %v4989 = vadd.f32 %v3883, %v4671
        %v4990 = vadd.f32 %v4234, %v4675
        %v4991 = vadd.f32 %v4236, %v4679
        %v4992 = vadd.f32 %v3887, %v4667
        %v4993 = vadd.f32 %v3889, %v4671
        %v4994 = vadd.f32 %v4240, %v4675
        %v4995 = vadd.f32 %v4242, %v4679
        %v4996 = vadd.f32 %v3891, %v4667
        %v4997 = vadd.f32 %v3893, %v4671
        %v4998 = vadd.f32 %v4244, %v4675
        %v4999 = vadd.f32 %v4246, %v4679
        %v5000 = vadd.f32 %v3897, %v4683
        %v5001 = vadd.f32 %v3899, %v4687
        %v5002 = vadd.f32 %v4250, %v4691
        %v5003 = vadd.f32 %v4252, %v4695
        %v5004 = vadd.f32 %v3901, %v4683
        %v5005 = vadd.f32 %v3903, %v4687
        %v5006 = vadd.f32 %v4254, %v4691
        %v5007 = vadd.f32 %v4256, %v4695
        %v5008 = vadd.f32 %v3907, %v4683
        %v5009 = vadd.f32 %v3909, %v4687
        %v5010 = vadd.f32 %v4260, %v4691
        %v5011 = vadd.f32 %v4262, %v4695
        %v5012 = vadd.f32 %v3911, %v4683
        %v5013 = vadd.f32 %v3913, %v4687
        %v5014 = vadd.f32 %v4264, %v4691
        %v5015 = vadd.f32 %v4266, %v4695
        %v5016 = vadd.f32 %v3917, %v4699
        %v5017 = vadd.f32 %v3919, %v4703
        %v5018 = vadd.f32 %v4270, %v4707
        %v5019 = vadd.f32 %v4272, %v4711
        %v5020 = vadd.f32 %v3921, %v4699
        %v5021 = vadd.f32 %v3923, %v4703
        %v5022 = vadd.f32 %v4274, %v4707
        %v5023 = vadd.f32 %v4276, %v4711
        %v5024 = vadd.f32 %v3927, %v4699
        %v5025 = vadd.f32 %v3929, %v4703
        %v5026 = vadd.f32 %v4280, %v4707
        %v5027 = vadd.f32 %v4282, %v4711
        %v5028 = vadd.f32 %v3931, %v4699
        %v5029 = vadd.f32 %v3933, %v4703
        %v5030 = vadd.f32 %v4284, %v4707
        %v5031 = vadd.f32 %v4286, %v4711
        %v5032 = vadd.f32 %v3937, %v4715
        %v5033 = vadd.f32 %v3939, %v4719
        %v5034 = vadd.f32 %v4290, %v4723
        %v5035 = vadd.f32 %v4292, %v4727
        %v5036 = vadd.f32 %v3941, %v4715
        %v5037 = vadd.f32 %v3943, %v4719
        %v5038 = vadd.f32 %v4294, %v4723
        %v5039 = vadd.f32 %v4296, %v4727
        %v5040 = vadd.f32 %v3947, %v4715
        %v5041 = vadd.f32 %v3949, %v4719
        %v5042 = vadd.f32 %v4300, %v4723
        %v5043 = vadd.f32 %v4302, %v4727
        %v5044 = vadd.f32 %v3951, %v4715
        %v5045 = vadd.f32 %v3953, %v4719
        %v5046 = vadd.f32 %v4304, %v4723
        %v5047 = vadd.f32 %v4306, %v4727
        %v5048 = vadd.f32 %v3957, %v4731
        %v5049 = vadd.f32 %v3959, %v4735
        %v5050 = vadd.f32 %v4310, %v4739
        %v5051 = vadd.f32 %v4312, %v4743
        %v5052 = vadd.f32 %v3961, %v4731
        %v5053 = vadd.f32 %v3963, %v4735
        %v5054 = vadd.f32 %v4314, %v4739
        %v5055 = vadd.f32 %v4316, %v4743
        %v5056 = vadd.f32 %v3967, %v4731
        %v5057 = vadd.f32 %v3969, %v4735
        %v5058 = vadd.f32 %v4320, %v4739
        %v5059 = vadd.f32 %v4322, %v4743
        %v5060 = vadd.f32 %v3971, %v4731
        %v5061 = vadd.f32 %v3973, %v4735
        %v5062 = vadd.f32 %v4324, %v4739
        %v5063 = vadd.f32 %v4326, %v4743
        %v5064 = vadd.f32 %v3977, %v4747
        %v5065 = vadd.f32 %v3979, %v4751
        %v5066 = vadd.f32 %v4330, %v4755
        %v5067 = vadd.f32 %v4332, %v4759
        %v5068 = vadd.f32 %v3981, %v4747
        %v5069 = vadd.f32 %v3983, %v4751
        %v5070 = vadd.f32 %v4334, %v4755
        %v5071 = vadd.f32 %v4336, %v4759
        %v5072 = vadd.f32 %v3987, %v4747
        %v5073 = vadd.f32 %v3989, %v4751
        %v5074 = vadd.f32 %v4340, %v4755
        %v5075 = vadd.f32 %v4342, %v4759
        %v5076 = vadd.f32 %v3991, %v4747
        %v5077 = vadd.f32 %v3993, %v4751
        %v5078 = vadd.f32 %v4344, %v4755
        %v5079 = vadd.f32 %v4346, %v4759
        %v5080 = vadd.f32 %v3997, %v4763
        %v5081 = vadd.f32 %v3999, %v4767
        %v5082 = vadd.f32 %v4350, %v4771
        %v5083 = vadd.f32 %v4352, %v4775
        %v5084 = vadd.f32 %v4001, %v4763
        %v5085 = vadd.f32 %v4003, %v4767
        %v5086 = vadd.f32 %v4354, %v4771
        %v5087 = vadd.f32 %v4356, %v4775
        %v5088 = vadd.f32 %v4007, %v4763
        %v5089 = vadd.f32 %v4009, %v4767
        %v5090 = vadd.f32 %v4360, %v4771
        %v5091 = vadd.f32 %v4362, %v4775
        %v5092 = vadd.f32 %v4011, %v4763
        %v5093 = vadd.f32 %v4013, %v4767
        %v5094 = vadd.f32 %v4364, %v4771
        %v5095 = vadd.f32 %v4366, %v4775
        %v5096 = vadd.f32 %v4017, %v4779
        %v5097 = vadd.f32 %v4019, %v4783
        %v5098 = vadd.f32 %v4370, %v4787
        %v5099 = vadd.f32 %v4372, %v4791
        %v5100 = vadd.f32 %v4021, %v4779
        %v5101 = vadd.f32 %v4023, %v4783
        %v5102 = vadd.f32 %v4374, %v4787
        %v5103 = vadd.f32 %v4376, %v4791
        %v5104 = vadd.f32 %v4027, %v4779
        %v5105 = vadd.f32 %v4029, %v4783
        %v5106 = vadd.f32 %v4380, %v4787
        %v5107 = vadd.f32 %v4382, %v4791
        %v5108 = vadd.f32 %v4031, %v4779
        %v5109 = vadd.f32 %v4033, %v4783
        %v5110 = vadd.f32 %v4384, %v4787
        %v5111 = vadd.f32 %v4386, %v4791
        %v5112 = vadd.f32 %v4037, %v4795
        %v5113 = vadd.f32 %v4039, %v4799
        %v5114 = vadd.f32 %v4390, %v4803
        %v5115 = vadd.f32 %v4392, %v4807
        %v5116 = vadd.f32 %v4041, %v4795
        %v5117 = vadd.f32 %v4043, %v4799
        %v5118 = vadd.f32 %v4394, %v4803
        %v5119 = vadd.f32 %v4396, %v4807
        %v5120 = vadd.f32 %v4047, %v4795
        %v5121 = vadd.f32 %v4049, %v4799
        %v5122 = vadd.f32 %v4400, %v4803
        %v5123 = vadd.f32 %v4402, %v4807
        %v5124 = vadd.f32 %v4051, %v4795
        %v5125 = vadd.f32 %v4053, %v4799
        %v5126 = vadd.f32 %v4404, %v4803
        %v5127 = vadd.f32 %v4406, %v4807
        %v5128 = vld [vmem:[#allocation14] sm:$0xf]
        %v5130 = vlaneseq
        %v5131 = vshrl.u32 %v5130, 7
        %v5132 = vsub.s32 0, %v5131
        %v5133 = vrot.slane %v5128, %v5132
        %v5134 = vlaneseq
        %v5135 = vshrl.u32 %v5134, 7
        %v5136 = vsub.s32 1, %v5135
        %v5137 = vrot.slane %v5128, %v5136
        %v5138 = vlaneseq
        %v5139 = vshrl.u32 %v5138, 7
        %v5140 = vsub.s32 2, %v5139
        %v5141 = vrot.slane %v5128, %v5140
        %v5142 = vlaneseq
        %v5143 = vshrl.u32 %v5142, 7
        %v5144 = vsub.s32 3, %v5143
        %v5145 = vrot.slane %v5128, %v5144
        %v5150 = vadd.f32 %v4872, %v5133
        %v5151 = vadd.f32 %v4873, %v5137
        %v5152 = vadd.f32 %v4874, %v5141
        %v5153 = vadd.f32 %v4875, %v5145
        %v5154 = vadd.f32 %v4876, %v5133
        %v5155 = vadd.f32 %v4877, %v5137
        %v5156 = vadd.f32 %v4878, %v5141
        %v5157 = vadd.f32 %v4879, %v5145
        %v5158 = vadd.f32 %v4880, %v5133
        %v5159 = vadd.f32 %v4881, %v5137
        %v5160 = vadd.f32 %v4882, %v5141
        %v5161 = vadd.f32 %v4883, %v5145
        %v5162 = vadd.f32 %v4884, %v5133
        %v5163 = vadd.f32 %v4885, %v5137
        %v5164 = vadd.f32 %v4886, %v5141
        %v5165 = vadd.f32 %v4887, %v5145
        %v5166 = vadd.f32 %v4888, %v5133
        %v5167 = vadd.f32 %v4889, %v5137
        %v5168 = vadd.f32 %v4890, %v5141
        %v5169 = vadd.f32 %v4891, %v5145
        %v5170 = vadd.f32 %v4892, %v5133
        %v5171 = vadd.f32 %v4893, %v5137
        %v5172 = vadd.f32 %v4894, %v5141
        %v5173 = vadd.f32 %v4895, %v5145
        %v5174 = vadd.f32 %v4896, %v5133
        %v5175 = vadd.f32 %v4897, %v5137
        %v5176 = vadd.f32 %v4898, %v5141
        %v5177 = vadd.f32 %v4899, %v5145
        %v5178 = vadd.f32 %v4900, %v5133
        %v5179 = vadd.f32 %v4901, %v5137
        %v5180 = vadd.f32 %v4902, %v5141
        %v5181 = vadd.f32 %v4903, %v5145
        %v5182 = vadd.f32 %v4904, %v5133
        %v5183 = vadd.f32 %v4905, %v5137
        %v5184 = vadd.f32 %v4906, %v5141
        %v5185 = vadd.f32 %v4907, %v5145
        %v5186 = vadd.f32 %v4908, %v5133
        %v5187 = vadd.f32 %v4909, %v5137
        %v5188 = vadd.f32 %v4910, %v5141
        %v5189 = vadd.f32 %v4911, %v5145
        %v5190 = vadd.f32 %v4912, %v5133
        %v5191 = vadd.f32 %v4913, %v5137
        %v5192 = vadd.f32 %v4914, %v5141
        %v5193 = vadd.f32 %v4915, %v5145
        %v5194 = vadd.f32 %v4916, %v5133
        %v5195 = vadd.f32 %v4917, %v5137
        %v5196 = vadd.f32 %v4918, %v5141
        %v5197 = vadd.f32 %v4919, %v5145
        %v5198 = vadd.f32 %v4920, %v5133
        %v5199 = vadd.f32 %v4921, %v5137
        %v5200 = vadd.f32 %v4922, %v5141
        %v5201 = vadd.f32 %v4923, %v5145
        %v5202 = vadd.f32 %v4924, %v5133
        %v5203 = vadd.f32 %v4925, %v5137
        %v5204 = vadd.f32 %v4926, %v5141
        %v5205 = vadd.f32 %v4927, %v5145
        %v5206 = vadd.f32 %v4928, %v5133
        %v5207 = vadd.f32 %v4929, %v5137
        %v5208 = vadd.f32 %v4930, %v5141
        %v5209 = vadd.f32 %v4931, %v5145
        %v5210 = vadd.f32 %v4932, %v5133
        %v5211 = vadd.f32 %v4933, %v5137
        %v5212 = vadd.f32 %v4934, %v5141
        %v5213 = vadd.f32 %v4935, %v5145
        %v5214 = vadd.f32 %v4936, %v5133
        %v5215 = vadd.f32 %v4937, %v5137
        %v5216 = vadd.f32 %v4938, %v5141
        %v5217 = vadd.f32 %v4939, %v5145
        %v5218 = vadd.f32 %v4940, %v5133
        %v5219 = vadd.f32 %v4941, %v5137
        %v5220 = vadd.f32 %v4942, %v5141
        %v5221 = vadd.f32 %v4943, %v5145
        %v5222 = vadd.f32 %v4944, %v5133
        %v5223 = vadd.f32 %v4945, %v5137
        %v5224 = vadd.f32 %v4946, %v5141
        %v5225 = vadd.f32 %v4947, %v5145
        %v5226 = vadd.f32 %v4948, %v5133
        %v5227 = vadd.f32 %v4949, %v5137
        %v5228 = vadd.f32 %v4950, %v5141
        %v5229 = vadd.f32 %v4951, %v5145
        %v5230 = vadd.f32 %v4952, %v5133
        %v5231 = vadd.f32 %v4953, %v5137
        %v5232 = vadd.f32 %v4954, %v5141
        %v5233 = vadd.f32 %v4955, %v5145
        %v5234 = vadd.f32 %v4956, %v5133
        %v5235 = vadd.f32 %v4957, %v5137
        %v5236 = vadd.f32 %v4958, %v5141
        %v5237 = vadd.f32 %v4959, %v5145
        %v5238 = vadd.f32 %v4960, %v5133
        %v5239 = vadd.f32 %v4961, %v5137
        %v5240 = vadd.f32 %v4962, %v5141
        %v5241 = vadd.f32 %v4963, %v5145
        %v5242 = vadd.f32 %v4964, %v5133
        %v5243 = vadd.f32 %v4965, %v5137
        %v5244 = vadd.f32 %v4966, %v5141
        %v5245 = vadd.f32 %v4967, %v5145
        %v5246 = vadd.f32 %v4968, %v5133
        %v5247 = vadd.f32 %v4969, %v5137
        %v5248 = vadd.f32 %v4970, %v5141
        %v5249 = vadd.f32 %v4971, %v5145
        %v5250 = vadd.f32 %v4972, %v5133
        %v5251 = vadd.f32 %v4973, %v5137
        %v5252 = vadd.f32 %v4974, %v5141
        %v5253 = vadd.f32 %v4975, %v5145
        %v5254 = vadd.f32 %v4976, %v5133
        %v5255 = vadd.f32 %v4977, %v5137
        %v5256 = vadd.f32 %v4978, %v5141
        %v5257 = vadd.f32 %v4979, %v5145
        %v5258 = vadd.f32 %v4980, %v5133
        %v5259 = vadd.f32 %v4981, %v5137
        %v5260 = vadd.f32 %v4982, %v5141
        %v5261 = vadd.f32 %v4983, %v5145
        %v5262 = vadd.f32 %v4984, %v5133
        %v5263 = vadd.f32 %v4985, %v5137
        %v5264 = vadd.f32 %v4986, %v5141
        %v5265 = vadd.f32 %v4987, %v5145
        %v5266 = vadd.f32 %v4988, %v5133
        %v5267 = vadd.f32 %v4989, %v5137
        %v5268 = vadd.f32 %v4990, %v5141
        %v5269 = vadd.f32 %v4991, %v5145
        %v5270 = vadd.f32 %v4992, %v5133
        %v5271 = vadd.f32 %v4993, %v5137
        %v5272 = vadd.f32 %v4994, %v5141
        %v5273 = vadd.f32 %v4995, %v5145
        %v5274 = vadd.f32 %v4996, %v5133
        %v5275 = vadd.f32 %v4997, %v5137
        %v5276 = vadd.f32 %v4998, %v5141
        %v5277 = vadd.f32 %v4999, %v5145
        %v5278 = vadd.f32 %v5000, %v5133
        %v5279 = vadd.f32 %v5001, %v5137
        %v5280 = vadd.f32 %v5002, %v5141
        %v5281 = vadd.f32 %v5003, %v5145
        %v5282 = vadd.f32 %v5004, %v5133
        %v5283 = vadd.f32 %v5005, %v5137
        %v5284 = vadd.f32 %v5006, %v5141
        %v5285 = vadd.f32 %v5007, %v5145
        %v5286 = vadd.f32 %v5008, %v5133
        %v5287 = vadd.f32 %v5009, %v5137
        %v5288 = vadd.f32 %v5010, %v5141
        %v5289 = vadd.f32 %v5011, %v5145
        %v5290 = vadd.f32 %v5012, %v5133
        %v5291 = vadd.f32 %v5013, %v5137
        %v5292 = vadd.f32 %v5014, %v5141
        %v5293 = vadd.f32 %v5015, %v5145
        %v5294 = vadd.f32 %v5016, %v5133
        %v5295 = vadd.f32 %v5017, %v5137
        %v5296 = vadd.f32 %v5018, %v5141
        %v5297 = vadd.f32 %v5019, %v5145
        %v5298 = vadd.f32 %v5020, %v5133
        %v5299 = vadd.f32 %v5021, %v5137
        %v5300 = vadd.f32 %v5022, %v5141
        %v5301 = vadd.f32 %v5023, %v5145
        %v5302 = vadd.f32 %v5024, %v5133
        %v5303 = vadd.f32 %v5025, %v5137
        %v5304 = vadd.f32 %v5026, %v5141
        %v5305 = vadd.f32 %v5027, %v5145
        %v5306 = vadd.f32 %v5028, %v5133
        %v5307 = vadd.f32 %v5029, %v5137
        %v5308 = vadd.f32 %v5030, %v5141
        %v5309 = vadd.f32 %v5031, %v5145
        %v5310 = vadd.f32 %v5032, %v5133
        %v5311 = vadd.f32 %v5033, %v5137
        %v5312 = vadd.f32 %v5034, %v5141
        %v5313 = vadd.f32 %v5035, %v5145
        %v5314 = vadd.f32 %v5036, %v5133
        %v5315 = vadd.f32 %v5037, %v5137
        %v5316 = vadd.f32 %v5038, %v5141
        %v5317 = vadd.f32 %v5039, %v5145
        %v5318 = vadd.f32 %v5040, %v5133
        %v5319 = vadd.f32 %v5041, %v5137
        %v5320 = vadd.f32 %v5042, %v5141
        %v5321 = vadd.f32 %v5043, %v5145
        %v5322 = vadd.f32 %v5044, %v5133
        %v5323 = vadd.f32 %v5045, %v5137
        %v5324 = vadd.f32 %v5046, %v5141
        %v5325 = vadd.f32 %v5047, %v5145
        %v5326 = vadd.f32 %v5048, %v5133
        %v5327 = vadd.f32 %v5049, %v5137
        %v5328 = vadd.f32 %v5050, %v5141
        %v5329 = vadd.f32 %v5051, %v5145
        %v5330 = vadd.f32 %v5052, %v5133
        %v5331 = vadd.f32 %v5053, %v5137
        %v5332 = vadd.f32 %v5054, %v5141
        %v5333 = vadd.f32 %v5055, %v5145
        %v5334 = vadd.f32 %v5056, %v5133
        %v5335 = vadd.f32 %v5057, %v5137
        %v5336 = vadd.f32 %v5058, %v5141
        %v5337 = vadd.f32 %v5059, %v5145
        %v5338 = vadd.f32 %v5060, %v5133
        %v5339 = vadd.f32 %v5061, %v5137
        %v5340 = vadd.f32 %v5062, %v5141
        %v5341 = vadd.f32 %v5063, %v5145
        %v5342 = vadd.f32 %v5064, %v5133
        %v5343 = vadd.f32 %v5065, %v5137
        %v5344 = vadd.f32 %v5066, %v5141
        %v5345 = vadd.f32 %v5067, %v5145
        %v5346 = vadd.f32 %v5068, %v5133
        %v5347 = vadd.f32 %v5069, %v5137
        %v5348 = vadd.f32 %v5070, %v5141
        %v5349 = vadd.f32 %v5071, %v5145
        %v5350 = vadd.f32 %v5072, %v5133
        %v5351 = vadd.f32 %v5073, %v5137
        %v5352 = vadd.f32 %v5074, %v5141
        %v5353 = vadd.f32 %v5075, %v5145
        %v5354 = vadd.f32 %v5076, %v5133
        %v5355 = vadd.f32 %v5077, %v5137
        %v5356 = vadd.f32 %v5078, %v5141
        %v5357 = vadd.f32 %v5079, %v5145
        %v5358 = vadd.f32 %v5080, %v5133
        %v5359 = vadd.f32 %v5081, %v5137
        %v5360 = vadd.f32 %v5082, %v5141
        %v5361 = vadd.f32 %v5083, %v5145
        %v5362 = vadd.f32 %v5084, %v5133
        %v5363 = vadd.f32 %v5085, %v5137
        %v5364 = vadd.f32 %v5086, %v5141
        %v5365 = vadd.f32 %v5087, %v5145
        %v5366 = vadd.f32 %v5088, %v5133
        %v5367 = vadd.f32 %v5089, %v5137
        %v5368 = vadd.f32 %v5090, %v5141
        %v5369 = vadd.f32 %v5091, %v5145
        %v5370 = vadd.f32 %v5092, %v5133
        %v5371 = vadd.f32 %v5093, %v5137
        %v5372 = vadd.f32 %v5094, %v5141
        %v5373 = vadd.f32 %v5095, %v5145
        %v5374 = vadd.f32 %v5096, %v5133
        %v5375 = vadd.f32 %v5097, %v5137
        %v5376 = vadd.f32 %v5098, %v5141
        %v5377 = vadd.f32 %v5099, %v5145
        %v5378 = vadd.f32 %v5100, %v5133
        %v5379 = vadd.f32 %v5101, %v5137
        %v5380 = vadd.f32 %v5102, %v5141
        %v5381 = vadd.f32 %v5103, %v5145
        %v5382 = vadd.f32 %v5104, %v5133
        %v5383 = vadd.f32 %v5105, %v5137
        %v5384 = vadd.f32 %v5106, %v5141
        %v5385 = vadd.f32 %v5107, %v5145
        %v5386 = vadd.f32 %v5108, %v5133
        %v5387 = vadd.f32 %v5109, %v5137
        %v5388 = vadd.f32 %v5110, %v5141
        %v5389 = vadd.f32 %v5111, %v5145
        %v5390 = vadd.f32 %v5112, %v5133
        %v5391 = vadd.f32 %v5113, %v5137
        %v5392 = vadd.f32 %v5114, %v5141
        %v5393 = vadd.f32 %v5115, %v5145
        %v5394 = vadd.f32 %v5116, %v5133
        %v5395 = vadd.f32 %v5117, %v5137
        %v5396 = vadd.f32 %v5118, %v5141
        %v5397 = vadd.f32 %v5119, %v5145
        %v5398 = vadd.f32 %v5120, %v5133
        %v5399 = vadd.f32 %v5121, %v5137
        %v5400 = vadd.f32 %v5122, %v5141
        %v5401 = vadd.f32 %v5123, %v5145
        %v5402 = vadd.f32 %v5124, %v5133
        %v5403 = vadd.f32 %v5125, %v5137
        %v5404 = vadd.f32 %v5126, %v5141
        %v5405 = vadd.f32 %v5127, %v5145
        %v5406 = vmax.f32 %v5150, 0.0
        %v5407 = vmax.f32 %v5151, 0.0
        %v5408 = vmax.f32 %v5152, 0.0
        %v5409 = vmax.f32 %v5153, 0.0
        %v5410 = vmax.f32 %v5154, 0.0
        %v5411 = vmax.f32 %v5155, 0.0
        %v5412 = vmax.f32 %v5156, 0.0
        %v5413 = vmax.f32 %v5157, 0.0
        %v5414 = vmax.f32 %v5158, 0.0
        %v5415 = vmax.f32 %v5159, 0.0
        %v5416 = vmax.f32 %v5160, 0.0
        %v5417 = vmax.f32 %v5161, 0.0
        %v5418 = vmax.f32 %v5162, 0.0
        %v5419 = vmax.f32 %v5163, 0.0
        %v5420 = vmax.f32 %v5164, 0.0
        %v5421 = vmax.f32 %v5165, 0.0
        %v5422 = vmax.f32 %v5166, 0.0
        %v5423 = vmax.f32 %v5167, 0.0
        %v5424 = vmax.f32 %v5168, 0.0
        %v5425 = vmax.f32 %v5169, 0.0
        %v5426 = vmax.f32 %v5170, 0.0
        %v5427 = vmax.f32 %v5171, 0.0
        %v5428 = vmax.f32 %v5172, 0.0
        %v5429 = vmax.f32 %v5173, 0.0
        %v5430 = vmax.f32 %v5174, 0.0
        %v5431 = vmax.f32 %v5175, 0.0
        %v5432 = vmax.f32 %v5176, 0.0
        %v5433 = vmax.f32 %v5177, 0.0
        %v5434 = vmax.f32 %v5178, 0.0
        %v5435 = vmax.f32 %v5179, 0.0
        %v5436 = vmax.f32 %v5180, 0.0
        %v5437 = vmax.f32 %v5181, 0.0
        %v5438 = vmax.f32 %v5182, 0.0
        %v5439 = vmax.f32 %v5183, 0.0
        %v5440 = vmax.f32 %v5184, 0.0
        %v5441 = vmax.f32 %v5185, 0.0
        %v5442 = vmax.f32 %v5186, 0.0
        %v5443 = vmax.f32 %v5187, 0.0
        %v5444 = vmax.f32 %v5188, 0.0
        %v5445 = vmax.f32 %v5189, 0.0
        %v5446 = vmax.f32 %v5190, 0.0
        %v5447 = vmax.f32 %v5191, 0.0
        %v5448 = vmax.f32 %v5192, 0.0
        %v5449 = vmax.f32 %v5193, 0.0
        %v5450 = vmax.f32 %v5194, 0.0
        %v5451 = vmax.f32 %v5195, 0.0
        %v5452 = vmax.f32 %v5196, 0.0
        %v5453 = vmax.f32 %v5197, 0.0
        %v5454 = vmax.f32 %v5198, 0.0
        %v5455 = vmax.f32 %v5199, 0.0
        %v5456 = vmax.f32 %v5200, 0.0
        %v5457 = vmax.f32 %v5201, 0.0
        %v5458 = vmax.f32 %v5202, 0.0
        %v5459 = vmax.f32 %v5203, 0.0
        %v5460 = vmax.f32 %v5204, 0.0
        %v5461 = vmax.f32 %v5205, 0.0
        %v5462 = vmax.f32 %v5206, 0.0
        %v5463 = vmax.f32 %v5207, 0.0
        %v5464 = vmax.f32 %v5208, 0.0
        %v5465 = vmax.f32 %v5209, 0.0
        %v5466 = vmax.f32 %v5210, 0.0
        %v5467 = vmax.f32 %v5211, 0.0
        %v5468 = vmax.f32 %v5212, 0.0
        %v5469 = vmax.f32 %v5213, 0.0
        %v5470 = vmax.f32 %v5214, 0.0
        %v5471 = vmax.f32 %v5215, 0.0
        %v5472 = vmax.f32 %v5216, 0.0
        %v5473 = vmax.f32 %v5217, 0.0
        %v5474 = vmax.f32 %v5218, 0.0
        %v5475 = vmax.f32 %v5219, 0.0
        %v5476 = vmax.f32 %v5220, 0.0
        %v5477 = vmax.f32 %v5221, 0.0
        %v5478 = vmax.f32 %v5222, 0.0
        %v5479 = vmax.f32 %v5223, 0.0
        %v5480 = vmax.f32 %v5224, 0.0
        %v5481 = vmax.f32 %v5225, 0.0
        %v5482 = vmax.f32 %v5226, 0.0
        %v5483 = vmax.f32 %v5227, 0.0
        %v5484 = vmax.f32 %v5228, 0.0
        %v5485 = vmax.f32 %v5229, 0.0
        %v5486 = vmax.f32 %v5230, 0.0
        %v5487 = vmax.f32 %v5231, 0.0
        %v5488 = vmax.f32 %v5232, 0.0
        %v5489 = vmax.f32 %v5233, 0.0
        %v5490 = vmax.f32 %v5234, 0.0
        %v5491 = vmax.f32 %v5235, 0.0
        %v5492 = vmax.f32 %v5236, 0.0
        %v5493 = vmax.f32 %v5237, 0.0
        %v5494 = vmax.f32 %v5238, 0.0
        %v5495 = vmax.f32 %v5239, 0.0
        %v5496 = vmax.f32 %v5240, 0.0
        %v5497 = vmax.f32 %v5241, 0.0
        %v5498 = vmax.f32 %v5242, 0.0
        %v5499 = vmax.f32 %v5243, 0.0
        %v5500 = vmax.f32 %v5244, 0.0
        %v5501 = vmax.f32 %v5245, 0.0
        %v5502 = vmax.f32 %v5246, 0.0
        %v5503 = vmax.f32 %v5247, 0.0
        %v5504 = vmax.f32 %v5248, 0.0
        %v5505 = vmax.f32 %v5249, 0.0
        %v5506 = vmax.f32 %v5250, 0.0
        %v5507 = vmax.f32 %v5251, 0.0
        %v5508 = vmax.f32 %v5252, 0.0
        %v5509 = vmax.f32 %v5253, 0.0
        %v5510 = vmax.f32 %v5254, 0.0
        %v5511 = vmax.f32 %v5255, 0.0
        %v5512 = vmax.f32 %v5256, 0.0
        %v5513 = vmax.f32 %v5257, 0.0
        %v5514 = vmax.f32 %v5258, 0.0
        %v5515 = vmax.f32 %v5259, 0.0
        %v5516 = vmax.f32 %v5260, 0.0
        %v5517 = vmax.f32 %v5261, 0.0
        %v5518 = vmax.f32 %v5262, 0.0
        %v5519 = vmax.f32 %v5263, 0.0
        %v5520 = vmax.f32 %v5264, 0.0
        %v5521 = vmax.f32 %v5265, 0.0
        %v5522 = vmax.f32 %v5266, 0.0
        %v5523 = vmax.f32 %v5267, 0.0
        %v5524 = vmax.f32 %v5268, 0.0
        %v5525 = vmax.f32 %v5269, 0.0
        %v5526 = vmax.f32 %v5270, 0.0
        %v5527 = vmax.f32 %v5271, 0.0
        %v5528 = vmax.f32 %v5272, 0.0
        %v5529 = vmax.f32 %v5273, 0.0
        %v5530 = vmax.f32 %v5274, 0.0
        %v5531 = vmax.f32 %v5275, 0.0
        %v5532 = vmax.f32 %v5276, 0.0
        %v5533 = vmax.f32 %v5277, 0.0
        %v5534 = vmax.f32 %v5278, 0.0
        %v5535 = vmax.f32 %v5279, 0.0
        %v5536 = vmax.f32 %v5280, 0.0
        %v5537 = vmax.f32 %v5281, 0.0
        %v5538 = vmax.f32 %v5282, 0.0
        %v5539 = vmax.f32 %v5283, 0.0
        %v5540 = vmax.f32 %v5284, 0.0
        %v5541 = vmax.f32 %v5285, 0.0
        %v5542 = vmax.f32 %v5286, 0.0
        %v5543 = vmax.f32 %v5287, 0.0
        %v5544 = vmax.f32 %v5288, 0.0
        %v5545 = vmax.f32 %v5289, 0.0
        %v5546 = vmax.f32 %v5290, 0.0
        %v5547 = vmax.f32 %v5291, 0.0
        %v5548 = vmax.f32 %v5292, 0.0
        %v5549 = vmax.f32 %v5293, 0.0
        %v5550 = vmax.f32 %v5294, 0.0
        %v5551 = vmax.f32 %v5295, 0.0
        %v5552 = vmax.f32 %v5296, 0.0
        %v5553 = vmax.f32 %v5297, 0.0
        %v5554 = vmax.f32 %v5298, 0.0
        %v5555 = vmax.f32 %v5299, 0.0
        %v5556 = vmax.f32 %v5300, 0.0
        %v5557 = vmax.f32 %v5301, 0.0
        %v5558 = vmax.f32 %v5302, 0.0
        %v5559 = vmax.f32 %v5303, 0.0
        %v5560 = vmax.f32 %v5304, 0.0
        %v5561 = vmax.f32 %v5305, 0.0
        %v5562 = vmax.f32 %v5306, 0.0
        %v5563 = vmax.f32 %v5307, 0.0
        %v5564 = vmax.f32 %v5308, 0.0
        %v5565 = vmax.f32 %v5309, 0.0
        %v5566 = vmax.f32 %v5310, 0.0
        %v5567 = vmax.f32 %v5311, 0.0
        %v5568 = vmax.f32 %v5312, 0.0
        %v5569 = vmax.f32 %v5313, 0.0
        %v5570 = vmax.f32 %v5314, 0.0
        %v5571 = vmax.f32 %v5315, 0.0
        %v5572 = vmax.f32 %v5316, 0.0
        %v5573 = vmax.f32 %v5317, 0.0
        %v5574 = vmax.f32 %v5318, 0.0
        %v5575 = vmax.f32 %v5319, 0.0
        %v5576 = vmax.f32 %v5320, 0.0
        %v5577 = vmax.f32 %v5321, 0.0
        %v5578 = vmax.f32 %v5322, 0.0
        %v5579 = vmax.f32 %v5323, 0.0
        %v5580 = vmax.f32 %v5324, 0.0
        %v5581 = vmax.f32 %v5325, 0.0
        %v5582 = vmax.f32 %v5326, 0.0
        %v5583 = vmax.f32 %v5327, 0.0
        %v5584 = vmax.f32 %v5328, 0.0
        %v5585 = vmax.f32 %v5329, 0.0
        %v5586 = vmax.f32 %v5330, 0.0
        %v5587 = vmax.f32 %v5331, 0.0
        %v5588 = vmax.f32 %v5332, 0.0
        %v5589 = vmax.f32 %v5333, 0.0
        %v5590 = vmax.f32 %v5334, 0.0
        %v5591 = vmax.f32 %v5335, 0.0
        %v5592 = vmax.f32 %v5336, 0.0
        %v5593 = vmax.f32 %v5337, 0.0
        %v5594 = vmax.f32 %v5338, 0.0
        %v5595 = vmax.f32 %v5339, 0.0
        %v5596 = vmax.f32 %v5340, 0.0
        %v5597 = vmax.f32 %v5341, 0.0
        %v5598 = vmax.f32 %v5342, 0.0
        %v5599 = vmax.f32 %v5343, 0.0
        %v5600 = vmax.f32 %v5344, 0.0
        %v5601 = vmax.f32 %v5345, 0.0
        %v5602 = vmax.f32 %v5346, 0.0
        %v5603 = vmax.f32 %v5347, 0.0
        %v5604 = vmax.f32 %v5348, 0.0
        %v5605 = vmax.f32 %v5349, 0.0
        %v5606 = vmax.f32 %v5350, 0.0
        %v5607 = vmax.f32 %v5351, 0.0
        %v5608 = vmax.f32 %v5352, 0.0
        %v5609 = vmax.f32 %v5353, 0.0
        %v5610 = vmax.f32 %v5354, 0.0
        %v5611 = vmax.f32 %v5355, 0.0
        %v5612 = vmax.f32 %v5356, 0.0
        %v5613 = vmax.f32 %v5357, 0.0
        %v5614 = vmax.f32 %v5358, 0.0
        %v5615 = vmax.f32 %v5359, 0.0
        %v5616 = vmax.f32 %v5360, 0.0
        %v5617 = vmax.f32 %v5361, 0.0
        %v5618 = vmax.f32 %v5362, 0.0
        %v5619 = vmax.f32 %v5363, 0.0
        %v5620 = vmax.f32 %v5364, 0.0
        %v5621 = vmax.f32 %v5365, 0.0
        %v5622 = vmax.f32 %v5366, 0.0
        %v5623 = vmax.f32 %v5367, 0.0
        %v5624 = vmax.f32 %v5368, 0.0
        %v5625 = vmax.f32 %v5369, 0.0
        %v5626 = vmax.f32 %v5370, 0.0
        %v5627 = vmax.f32 %v5371, 0.0
        %v5628 = vmax.f32 %v5372, 0.0
        %v5629 = vmax.f32 %v5373, 0.0
        %v5630 = vmax.f32 %v5374, 0.0
        %v5631 = vmax.f32 %v5375, 0.0
        %v5632 = vmax.f32 %v5376, 0.0
        %v5633 = vmax.f32 %v5377, 0.0
        %v5634 = vmax.f32 %v5378, 0.0
        %v5635 = vmax.f32 %v5379, 0.0
        %v5636 = vmax.f32 %v5380, 0.0
        %v5637 = vmax.f32 %v5381, 0.0
        %v5638 = vmax.f32 %v5382, 0.0
        %v5639 = vmax.f32 %v5383, 0.0
        %v5640 = vmax.f32 %v5384, 0.0
        %v5641 = vmax.f32 %v5385, 0.0
        %v5642 = vmax.f32 %v5386, 0.0
        %v5643 = vmax.f32 %v5387, 0.0
        %v5644 = vmax.f32 %v5388, 0.0
        %v5645 = vmax.f32 %v5389, 0.0
        %v5646 = vmax.f32 %v5390, 0.0
        %v5647 = vmax.f32 %v5391, 0.0
        %v5648 = vmax.f32 %v5392, 0.0
        %v5649 = vmax.f32 %v5393, 0.0
        %v5650 = vmax.f32 %v5394, 0.0
        %v5651 = vmax.f32 %v5395, 0.0
        %v5652 = vmax.f32 %v5396, 0.0
        %v5653 = vmax.f32 %v5397, 0.0
        %v5654 = vmax.f32 %v5398, 0.0
        %v5655 = vmax.f32 %v5399, 0.0
        %v5656 = vmax.f32 %v5400, 0.0
        %v5657 = vmax.f32 %v5401, 0.0
        %v5658 = vmax.f32 %v5402, 0.0
        %v5659 = vmax.f32 %v5403, 0.0
        %v5660 = vmax.f32 %v5404, 0.0
        %v5661 = vmax.f32 %v5405, 0.0
        %v5662 = vpack.c.bf16 %v5410, %v5406
        %v5663 = vpack.c.bf16 %v5411, %v5407
        %v5664 = vpack.c.bf16 %v5412, %v5408
        %v5665 = vpack.c.bf16 %v5413, %v5409
        %v5666 = vpack.c.bf16 %v5418, %v5414
        %v5667 = vpack.c.bf16 %v5419, %v5415
        %v5668 = vpack.c.bf16 %v5420, %v5416
        %v5669 = vpack.c.bf16 %v5421, %v5417
        %v5670 = vpack.c.bf16 %v5426, %v5422
        %v5671 = vpack.c.bf16 %v5427, %v5423
        %v5672 = vpack.c.bf16 %v5428, %v5424
        %v5673 = vpack.c.bf16 %v5429, %v5425
        %v5674 = vpack.c.bf16 %v5434, %v5430
        %v5675 = vpack.c.bf16 %v5435, %v5431
        %v5676 = vpack.c.bf16 %v5436, %v5432
        %v5677 = vpack.c.bf16 %v5437, %v5433
        %v5678 = vpack.c.bf16 %v5442, %v5438
        %v5679 = vpack.c.bf16 %v5443, %v5439
        %v5680 = vpack.c.bf16 %v5444, %v5440
        %v5681 = vpack.c.bf16 %v5445, %v5441
        %v5682 = vpack.c.bf16 %v5450, %v5446
        %v5683 = vpack.c.bf16 %v5451, %v5447
        %v5684 = vpack.c.bf16 %v5452, %v5448
        %v5685 = vpack.c.bf16 %v5453, %v5449
        %v5686 = vpack.c.bf16 %v5458, %v5454
        %v5687 = vpack.c.bf16 %v5459, %v5455
        %v5688 = vpack.c.bf16 %v5460, %v5456
        %v5689 = vpack.c.bf16 %v5461, %v5457
        %v5690 = vpack.c.bf16 %v5466, %v5462
        %v5691 = vpack.c.bf16 %v5467, %v5463
        %v5692 = vpack.c.bf16 %v5468, %v5464
        %v5693 = vpack.c.bf16 %v5469, %v5465
        %v5694 = vpack.c.bf16 %v5474, %v5470
        %v5695 = vpack.c.bf16 %v5475, %v5471
        %v5696 = vpack.c.bf16 %v5476, %v5472
        %v5697 = vpack.c.bf16 %v5477, %v5473
        %v5698 = vpack.c.bf16 %v5482, %v5478
        %v5699 = vpack.c.bf16 %v5483, %v5479
        %v5700 = vpack.c.bf16 %v5484, %v5480
        %v5701 = vpack.c.bf16 %v5485, %v5481
        %v5702 = vpack.c.bf16 %v5490, %v5486
        %v5703 = vpack.c.bf16 %v5491, %v5487
        %v5704 = vpack.c.bf16 %v5492, %v5488
        %v5705 = vpack.c.bf16 %v5493, %v5489
        %v5706 = vpack.c.bf16 %v5498, %v5494
        %v5707 = vpack.c.bf16 %v5499, %v5495
        %v5708 = vpack.c.bf16 %v5500, %v5496
        %v5709 = vpack.c.bf16 %v5501, %v5497
        %v5710 = vpack.c.bf16 %v5506, %v5502
        %v5711 = vpack.c.bf16 %v5507, %v5503
        %v5712 = vpack.c.bf16 %v5508, %v5504
        %v5713 = vpack.c.bf16 %v5509, %v5505
        %v5714 = vpack.c.bf16 %v5514, %v5510
        %v5715 = vpack.c.bf16 %v5515, %v5511
        %v5716 = vpack.c.bf16 %v5516, %v5512
        %v5717 = vpack.c.bf16 %v5517, %v5513
        %v5718 = vpack.c.bf16 %v5522, %v5518
        %v5719 = vpack.c.bf16 %v5523, %v5519
        %v5720 = vpack.c.bf16 %v5524, %v5520
        %v5721 = vpack.c.bf16 %v5525, %v5521
        %v5722 = vpack.c.bf16 %v5530, %v5526
        %v5723 = vpack.c.bf16 %v5531, %v5527
        %v5724 = vpack.c.bf16 %v5532, %v5528
        %v5725 = vpack.c.bf16 %v5533, %v5529
        %v5726 = vpack.c.bf16 %v5538, %v5534
        %v5727 = vpack.c.bf16 %v5539, %v5535
        %v5728 = vpack.c.bf16 %v5540, %v5536
        %v5729 = vpack.c.bf16 %v5541, %v5537
        %v5730 = vpack.c.bf16 %v5546, %v5542
        %v5731 = vpack.c.bf16 %v5547, %v5543
        %v5732 = vpack.c.bf16 %v5548, %v5544
        %v5733 = vpack.c.bf16 %v5549, %v5545
        %v5734 = vpack.c.bf16 %v5554, %v5550
        %v5735 = vpack.c.bf16 %v5555, %v5551
        %v5736 = vpack.c.bf16 %v5556, %v5552
        %v5737 = vpack.c.bf16 %v5557, %v5553
        %v5738 = vpack.c.bf16 %v5562, %v5558
        %v5739 = vpack.c.bf16 %v5563, %v5559
        %v5740 = vpack.c.bf16 %v5564, %v5560
        %v5741 = vpack.c.bf16 %v5565, %v5561
        %v5742 = vpack.c.bf16 %v5570, %v5566
        %v5743 = vpack.c.bf16 %v5571, %v5567
        %v5744 = vpack.c.bf16 %v5572, %v5568
        %v5745 = vpack.c.bf16 %v5573, %v5569
        %v5746 = vpack.c.bf16 %v5578, %v5574
        %v5747 = vpack.c.bf16 %v5579, %v5575
        %v5748 = vpack.c.bf16 %v5580, %v5576
        %v5749 = vpack.c.bf16 %v5581, %v5577
        %v5750 = vpack.c.bf16 %v5586, %v5582
        %v5751 = vpack.c.bf16 %v5587, %v5583
        %v5752 = vpack.c.bf16 %v5588, %v5584
        %v5753 = vpack.c.bf16 %v5589, %v5585
        %v5754 = vpack.c.bf16 %v5594, %v5590
        %v5755 = vpack.c.bf16 %v5595, %v5591
        %v5756 = vpack.c.bf16 %v5596, %v5592
        %v5757 = vpack.c.bf16 %v5597, %v5593
        %v5758 = vpack.c.bf16 %v5602, %v5598
        %v5759 = vpack.c.bf16 %v5603, %v5599
        %v5760 = vpack.c.bf16 %v5604, %v5600
        %v5761 = vpack.c.bf16 %v5605, %v5601
        %v5762 = vpack.c.bf16 %v5610, %v5606
        %v5763 = vpack.c.bf16 %v5611, %v5607
        %v5764 = vpack.c.bf16 %v5612, %v5608
        %v5765 = vpack.c.bf16 %v5613, %v5609
        %v5766 = vpack.c.bf16 %v5618, %v5614
        %v5767 = vpack.c.bf16 %v5619, %v5615
        %v5768 = vpack.c.bf16 %v5620, %v5616
        %v5769 = vpack.c.bf16 %v5621, %v5617
        %v5770 = vpack.c.bf16 %v5626, %v5622
        %v5771 = vpack.c.bf16 %v5627, %v5623
        %v5772 = vpack.c.bf16 %v5628, %v5624
        %v5773 = vpack.c.bf16 %v5629, %v5625
        %v5774 = vpack.c.bf16 %v5634, %v5630
        %v5775 = vpack.c.bf16 %v5635, %v5631
        %v5776 = vpack.c.bf16 %v5636, %v5632
        %v5777 = vpack.c.bf16 %v5637, %v5633
        %v5778 = vpack.c.bf16 %v5642, %v5638
        %v5779 = vpack.c.bf16 %v5643, %v5639
        %v5780 = vpack.c.bf16 %v5644, %v5640
        %v5781 = vpack.c.bf16 %v5645, %v5641
        %v5782 = vpack.c.bf16 %v5650, %v5646
        %v5783 = vpack.c.bf16 %v5651, %v5647
        %v5784 = vpack.c.bf16 %v5652, %v5648
        %v5785 = vpack.c.bf16 %v5653, %v5649
        %v5786 = vpack.c.bf16 %v5658, %v5654
        %v5787 = vpack.c.bf16 %v5659, %v5655
        %v5788 = vpack.c.bf16 %v5660, %v5656
        %v5789 = vpack.c.bf16 %v5661, %v5657
        %v5790 = vld [vmem:[#allocation16] sm:$0xf]
        %v5791 = vld [vmem:[#allocation16 + $0x4] sm:$0xf]
        %v5792 = vld [vmem:[#allocation16 + $0x8] sm:$0xf]
        %v5793 = vld [vmem:[#allocation16 + $0xc] sm:$0xf]
        %v5794 = vld [vmem:[#allocation16 + $0x10] sm:$0xf]
        %v5795 = vld [vmem:[#allocation16 + $0x14] sm:$0xf]
        %v5796 = vld [vmem:[#allocation16 + $0x18] sm:$0xf]
        %v5797 = vld [vmem:[#allocation16 + $0x1c] sm:$0xf]
        %v5798 = vld [vmem:[#allocation16 + $0x20] sm:$0xf]
        %v5799 = vld [vmem:[#allocation16 + $0x24] sm:$0xf]
        %v5800 = vld [vmem:[#allocation16 + $0x28] sm:$0xf]
        %v5801 = vld [vmem:[#allocation16 + $0x2c] sm:$0xf]
        %v5802 = vld [vmem:[#allocation16 + $0x30] sm:$0xf]
        %v5803 = vld [vmem:[#allocation16 + $0x34] sm:$0xf]
        %v5804 = vld [vmem:[#allocation16 + $0x38] sm:$0xf]
        %v5805 = vld [vmem:[#allocation16 + $0x3c] sm:$0xf]
        %v5806 = vld [vmem:[#allocation16 + $0x40] sm:$0xf]
        %v5807 = vld [vmem:[#allocation16 + $0x44] sm:$0xf]
        %v5808 = vld [vmem:[#allocation16 + $0x48] sm:$0xf]
        %v5809 = vld [vmem:[#allocation16 + $0x4c] sm:$0xf]
        %v5810 = vld [vmem:[#allocation16 + $0x50] sm:$0xf]
        %v5811 = vld [vmem:[#allocation16 + $0x54] sm:$0xf]
        %v5812 = vld [vmem:[#allocation16 + $0x58] sm:$0xf]
        %v5813 = vld [vmem:[#allocation16 + $0x5c] sm:$0xf]
        %v5814 = vld [vmem:[#allocation16 + $0x60] sm:$0xf]
        %v5815 = vld [vmem:[#allocation16 + $0x64] sm:$0xf]
        %v5816 = vld [vmem:[#allocation16 + $0x68] sm:$0xf]
        %v5817 = vld [vmem:[#allocation16 + $0x6c] sm:$0xf]
        %v5818 = vld [vmem:[#allocation16 + $0x70] sm:$0xf]
        %v5819 = vld [vmem:[#allocation16 + $0x74] sm:$0xf]
        %v5820 = vld [vmem:[#allocation16 + $0x78] sm:$0xf]
        %v5821 = vld [vmem:[#allocation16 + $0x7c] sm:$0xf]
        %v5822 = vld [vmem:[#allocation16 + $0x80] sm:$0xf]
        %v5823 = vld [vmem:[#allocation16 + $0x84] sm:$0xf]
        %v5824 = vld [vmem:[#allocation16 + $0x88] sm:$0xf]
        %v5825 = vld [vmem:[#allocation16 + $0x8c] sm:$0xf]
        %v5826 = vld [vmem:[#allocation16 + $0x90] sm:$0xf]
        %v5827 = vld [vmem:[#allocation16 + $0x94] sm:$0xf]
        %v5828 = vld [vmem:[#allocation16 + $0x98] sm:$0xf]
        %v5829 = vld [vmem:[#allocation16 + $0x9c] sm:$0xf]
        %v5830 = vld [vmem:[#allocation16 + $0xa0] sm:$0xf]
        %v5831 = vld [vmem:[#allocation16 + $0xa4] sm:$0xf]
        %v5832 = vld [vmem:[#allocation16 + $0xa8] sm:$0xf]
        %v5833 = vld [vmem:[#allocation16 + $0xac] sm:$0xf]
        %v5834 = vld [vmem:[#allocation16 + $0xb0] sm:$0xf]
        %v5835 = vld [vmem:[#allocation16 + $0xb4] sm:$0xf]
        %v5836 = vld [vmem:[#allocation16 + $0xb8] sm:$0xf]
        %v5837 = vld [vmem:[#allocation16 + $0xbc] sm:$0xf]
        %v5838 = vld [vmem:[#allocation16 + $0xc0] sm:$0xf]
        %v5839 = vld [vmem:[#allocation16 + $0xc4] sm:$0xf]
        %v5840 = vld [vmem:[#allocation16 + $0xc8] sm:$0xf]
        %v5841 = vld [vmem:[#allocation16 + $0xcc] sm:$0xf]
        %v5842 = vld [vmem:[#allocation16 + $0xd0] sm:$0xf]
        %v5843 = vld [vmem:[#allocation16 + $0xd4] sm:$0xf]
        %v5844 = vld [vmem:[#allocation16 + $0xd8] sm:$0xf]
        %v5845 = vld [vmem:[#allocation16 + $0xdc] sm:$0xf]
        %v5846 = vld [vmem:[#allocation16 + $0xe0] sm:$0xf]
        %v5847 = vld [vmem:[#allocation16 + $0xe4] sm:$0xf]
        %v5848 = vld [vmem:[#allocation16 + $0xe8] sm:$0xf]
        %v5849 = vld [vmem:[#allocation16 + $0xec] sm:$0xf]
        %v5850 = vld [vmem:[#allocation16 + $0xf0] sm:$0xf]
        %v5851 = vld [vmem:[#allocation16 + $0xf4] sm:$0xf]
        %v5852 = vld [vmem:[#allocation16 + $0xf8] sm:$0xf]
        %v5853 = vld [vmem:[#allocation16 + $0xfc] sm:$0xf]
        %v5854 = vld [vmem:[#allocation17] sm:$0x1]
        %v5856 = vlaneseq
        %v5857 = vshrl.u32 %v5856, 7
        %v5858 = vsub.s32 0, %v5857
        %v5859 = vrot.slane %v5854, %v5858
        %v5925 = vunpack.c.l.b16 %v5790
        %v5926 = vunpack.c.l.b16 %v5791
        %v5927 = vunpack.c.l.b16 %v5792
        %v5928 = vunpack.c.l.b16 %v5793
        %v5929 = vunpack.c.l.b16 %v5794
        %v5930 = vunpack.c.l.b16 %v5795
        %v5931 = vunpack.c.l.b16 %v5796
        %v5932 = vunpack.c.l.b16 %v5797
        %v5933 = vunpack.c.l.b16 %v5798
        %v5934 = vunpack.c.l.b16 %v5799
        %v5935 = vunpack.c.l.b16 %v5800
        %v5936 = vunpack.c.l.b16 %v5801
        %v5937 = vunpack.c.l.b16 %v5802
        %v5938 = vunpack.c.l.b16 %v5803
        %v5939 = vunpack.c.l.b16 %v5804
        %v5940 = vunpack.c.l.b16 %v5805
        %v5941 = vunpack.c.l.b16 %v5806
        %v5942 = vunpack.c.l.b16 %v5807
        %v5943 = vunpack.c.l.b16 %v5808
        %v5944 = vunpack.c.l.b16 %v5809
        %v5945 = vunpack.c.l.b16 %v5810
        %v5946 = vunpack.c.l.b16 %v5811
        %v5947 = vunpack.c.l.b16 %v5812
        %v5948 = vunpack.c.l.b16 %v5813
        %v5949 = vunpack.c.l.b16 %v5814
        %v5950 = vunpack.c.l.b16 %v5815
        %v5951 = vunpack.c.l.b16 %v5816
        %v5952 = vunpack.c.l.b16 %v5817
        %v5953 = vunpack.c.l.b16 %v5818
        %v5954 = vunpack.c.l.b16 %v5819
        %v5955 = vunpack.c.l.b16 %v5820
        %v5956 = vunpack.c.l.b16 %v5821
        %v5957 = vunpack.c.l.b16 %v5822
        %v5958 = vunpack.c.l.b16 %v5823
        %v5959 = vunpack.c.l.b16 %v5824
        %v5960 = vunpack.c.l.b16 %v5825
        %v5961 = vunpack.c.l.b16 %v5826
        %v5962 = vunpack.c.l.b16 %v5827
        %v5963 = vunpack.c.l.b16 %v5828
        %v5964 = vunpack.c.l.b16 %v5829
        %v5965 = vunpack.c.l.b16 %v5830
        %v5966 = vunpack.c.l.b16 %v5831
        %v5967 = vunpack.c.l.b16 %v5832
        %v5968 = vunpack.c.l.b16 %v5833
        %v5969 = vunpack.c.l.b16 %v5834
        %v5970 = vunpack.c.l.b16 %v5835
        %v5971 = vunpack.c.l.b16 %v5836
        %v5972 = vunpack.c.l.b16 %v5837
        %v5973 = vunpack.c.l.b16 %v5838
        %v5974 = vunpack.c.l.b16 %v5839
        %v5975 = vunpack.c.l.b16 %v5840
        %v5976 = vunpack.c.l.b16 %v5841
        %v5977 = vunpack.c.l.b16 %v5842
        %v5978 = vunpack.c.l.b16 %v5843
        %v5979 = vunpack.c.l.b16 %v5844
        %v5980 = vunpack.c.l.b16 %v5845
        %v5981 = vunpack.c.l.b16 %v5846
        %v5982 = vunpack.c.l.b16 %v5847
        %v5983 = vunpack.c.l.b16 %v5848
        %v5984 = vunpack.c.l.b16 %v5849
        %v5985 = vunpack.c.l.b16 %v5850
        %v5986 = vunpack.c.l.b16 %v5851
        %v5987 = vunpack.c.l.b16 %v5852
        %v5988 = vunpack.c.l.b16 %v5853
        %v5989 = vpack.c.b16 %v5926, %v5925
        %v5990 = vpack.c.b16 %v5928, %v5927
        %v5991 = vpack.c.b16 %v5930, %v5929
        %v5992 = vpack.c.b16 %v5932, %v5931
        %v5993 = vpack.c.b16 %v5934, %v5933
        %v5994 = vpack.c.b16 %v5936, %v5935
        %v5995 = vpack.c.b16 %v5938, %v5937
        %v5996 = vpack.c.b16 %v5940, %v5939
        %v5997 = vpack.c.b16 %v5942, %v5941
        %v5998 = vpack.c.b16 %v5944, %v5943
        %v5999 = vpack.c.b16 %v5946, %v5945
        %v6000 = vpack.c.b16 %v5948, %v5947
        %v6001 = vpack.c.b16 %v5950, %v5949
        %v6002 = vpack.c.b16 %v5952, %v5951
        %v6003 = vpack.c.b16 %v5954, %v5953
        %v6004 = vpack.c.b16 %v5956, %v5955
        %v6005 = vpack.c.b16 %v5958, %v5957
        %v6006 = vpack.c.b16 %v5960, %v5959
        %v6007 = vpack.c.b16 %v5962, %v5961
        %v6008 = vpack.c.b16 %v5964, %v5963
        %v6009 = vpack.c.b16 %v5966, %v5965
        %v6010 = vpack.c.b16 %v5968, %v5967
        %v6011 = vpack.c.b16 %v5970, %v5969
        %v6012 = vpack.c.b16 %v5972, %v5971
        %v6013 = vpack.c.b16 %v5974, %v5973
        %v6014 = vpack.c.b16 %v5976, %v5975
        %v6015 = vpack.c.b16 %v5978, %v5977
        %v6016 = vpack.c.b16 %v5980, %v5979
        %v6017 = vpack.c.b16 %v5982, %v5981
        %v6018 = vpack.c.b16 %v5984, %v5983
        %v6019 = vpack.c.b16 %v5986, %v5985
        %v6020 = vpack.c.b16 %v5988, %v5987
        %6053 = vmatprep.subr.bf16.mxu0 0
        %6054 = vmatpush1.bf16.msra.mxu0 %v5989
        %6055 = vmatprep.subr.bf16.mxu0 0
        %6056 = vmatpush1.bf16.msra.mxu0 %v5990
        %6057 = vmatprep.subr.bf16.mxu0 0
        %6058 = vmatpush1.bf16.msra.mxu0 %v5991
        %6059 = vmatprep.subr.bf16.mxu0 0
        %6060 = vmatpush1.bf16.msra.mxu0 %v5992
        %6061 = vmatprep.subr.bf16.mxu0 0
        %6062 = vmatpush1.bf16.msra.mxu0 %v5993
        %6063 = vmatprep.subr.bf16.mxu0 0
        %6064 = vmatpush1.bf16.msra.mxu0 %v5994
        %6065 = vmatprep.subr.bf16.mxu0 0
        %6066 = vmatpush1.bf16.msra.mxu0 %v5995
        %6067 = vmatprep.subr.bf16.mxu0 0
        %6068 = vmatpush1.bf16.msra.mxu0 %v5996
        %6069 = vmatprep.subr.bf16.mxu0 0
        %6070 = vmatpush1.bf16.msra.mxu0 %v5997
        %6071 = vmatprep.subr.bf16.mxu0 0
        %6072 = vmatpush1.bf16.msra.mxu0 %v5998
        %6073 = vmatprep.subr.bf16.mxu0 0
        %6074 = vmatpush1.bf16.msra.mxu0 %v5999
        %6075 = vmatprep.subr.bf16.mxu0 0
        %6076 = vmatpush1.bf16.msra.mxu0 %v6000
        %6077 = vmatprep.subr.bf16.mxu0 0
        %6078 = vmatpush1.bf16.msra.mxu0 %v6001
        %6079 = vmatprep.subr.bf16.mxu0 0
        %6080 = vmatpush1.bf16.msra.mxu0 %v6002
        %6081 = vmatprep.subr.bf16.mxu0 0
        %6082 = vmatpush1.bf16.msra.mxu0 %v6003
        %6083 = vmatprep.subr.bf16.mxu0 0
        %6084 = vmatpush1.bf16.msra.mxu0 %v6004
        %6085 = vmatprep.mubr.bf16.mxu0 %v5663
        %6086 = vmatmul.mubr.bf16.gmra.mrb[0].mxu0 %v5662
        %v6087 = vpop.f32.mrb[0].mxu0
        %v6088 = vadd.f32 %v5859, %v6087
        %v6089 = vpop.f32.mrb[0].mxu0
        %v6090 = vpop.f32.mrb[0].mxu0
        %v6091 = vadd.f32 %v5859, %v6090
        %v6092 = vpop.f32.mrb[0].mxu0
        %6093 = vmatprep.mubr.bf16.mxu0 %v5667
        %6094 = vmatmul.mubr.bf16.gmra.mrb[0].mxu0 %v5666
        %v6095 = vpop.f32.mrb[0].mxu0
        %v6096 = vadd.f32 %v5859, %v6095
        %v6097 = vpop.f32.mrb[0].mxu0
        %v6098 = vpop.f32.mrb[0].mxu0
        %v6099 = vadd.f32 %v5859, %v6098
        %v6100 = vpop.f32.mrb[0].mxu0
        %6101 = vmatprep.mubr.bf16.mxu0 %v5671
        %6102 = vmatmul.mubr.bf16.gmra.mrb[0].mxu0 %v5670
        %v6103 = vpop.f32.mrb[0].mxu0
        %v6104 = vadd.f32 %v5859, %v6103
        %v6105 = vpop.f32.mrb[0].mxu0
        %v6106 = vpop.f32.mrb[0].mxu0
        %v6107 = vadd.f32 %v5859, %v6106
        %v6108 = vpop.f32.mrb[0].mxu0
        %6109 = vmatprep.mubr.bf16.mxu0 %v5675
        %6110 = vmatmul.mubr.bf16.gmra.mrb[0].mxu0 %v5674
        %v6111 = vpop.f32.mrb[0].mxu0
        %v6112 = vadd.f32 %v5859, %v6111
        %v6113 = vpop.f32.mrb[0].mxu0
        %v6114 = vpop.f32.mrb[0].mxu0
        %v6115 = vadd.f32 %v5859, %v6114
        %v6116 = vpop.f32.mrb[0].mxu0
        %6117 = vmatprep.mubr.bf16.mxu0 %v5679
        %6118 = vmatmul.mubr.bf16.gmra.mrb[0].mxu0 %v5678
        %v6119 = vpop.f32.mrb[0].mxu0
        %v6120 = vadd.f32 %v5859, %v6119
        %v6121 = vpop.f32.mrb[0].mxu0
        %v6122 = vpop.f32.mrb[0].mxu0
        %v6123 = vadd.f32 %v5859, %v6122
        %v6124 = vpop.f32.mrb[0].mxu0
        %6125 = vmatprep.mubr.bf16.mxu0 %v5683
        %6126 = vmatmul.mubr.bf16.gmra.mrb[0].mxu0 %v5682
        %v6127 = vpop.f32.mrb[0].mxu0
        %v6128 = vadd.f32 %v5859, %v6127
        %v6129 = vpop.f32.mrb[0].mxu0
        %v6130 = vpop.f32.mrb[0].mxu0
        %v6131 = vadd.f32 %v5859, %v6130
        %v6132 = vpop.f32.mrb[0].mxu0
        %6133 = vmatprep.mubr.bf16.mxu0 %v5687
        %6134 = vmatmul.mubr.bf16.gmra.mrb[0].mxu0 %v5686
        %v6135 = vpop.f32.mrb[0].mxu0
        %v6136 = vadd.f32 %v5859, %v6135
        %v6137 = vpop.f32.mrb[0].mxu0
        %v6138 = vpop.f32.mrb[0].mxu0
        %v6139 = vadd.f32 %v5859, %v6138
        %v6140 = vpop.f32.mrb[0].mxu0
        %6141 = vmatprep.mubr.bf16.mxu0 %v5691
        %6142 = vmatmul.mubr.bf16.gmra.mrb[0].mxu0 %v5690
        %v6143 = vpop.f32.mrb[0].mxu0
        %v6144 = vadd.f32 %v5859, %v6143
        %v6145 = vpop.f32.mrb[0].mxu0
        %v6146 = vpop.f32.mrb[0].mxu0
        %v6147 = vadd.f32 %v5859, %v6146
        %v6148 = vpop.f32.mrb[0].mxu0
        %6149 = vmatprep.mubr.bf16.mxu0 %v5695
        %6150 = vmatmul.mubr.bf16.gmra.mrb[0].mxu0 %v5694
        %v6151 = vpop.f32.mrb[0].mxu0
        %v6152 = vadd.f32 %v5859, %v6151
        %v6153 = vpop.f32.mrb[0].mxu0
        %v6154 = vpop.f32.mrb[0].mxu0
        %v6155 = vadd.f32 %v5859, %v6154
        %v6156 = vpop.f32.mrb[0].mxu0
        %6157 = vmatprep.mubr.bf16.mxu0 %v5699
        %6158 = vmatmul.mubr.bf16.gmra.mrb[0].mxu0 %v5698
        %v6159 = vpop.f32.mrb[0].mxu0
        %v6160 = vadd.f32 %v5859, %v6159
        %v6161 = vpop.f32.mrb[0].mxu0
        %v6162 = vpop.f32.mrb[0].mxu0
        %v6163 = vadd.f32 %v5859, %v6162
        %v6164 = vpop.f32.mrb[0].mxu0
        %6165 = vmatprep.mubr.bf16.mxu0 %v5703
        %6166 = vmatmul.mubr.bf16.gmra.mrb[0].mxu0 %v5702
        %v6167 = vpop.f32.mrb[0].mxu0
        %v6168 = vadd.f32 %v5859, %v6167
        %v6169 = vpop.f32.mrb[0].mxu0
        %v6170 = vpop.f32.mrb[0].mxu0
        %v6171 = vadd.f32 %v5859, %v6170
        %v6172 = vpop.f32.mrb[0].mxu0
        %6173 = vmatprep.mubr.bf16.mxu0 %v5707
        %6174 = vmatmul.mubr.bf16.gmra.mrb[0].mxu0 %v5706
        %v6175 = vpop.f32.mrb[0].mxu0
        %v6176 = vadd.f32 %v5859, %v6175
        %v6177 = vpop.f32.mrb[0].mxu0
        %v6178 = vpop.f32.mrb[0].mxu0
        %v6179 = vadd.f32 %v5859, %v6178
        %v6180 = vpop.f32.mrb[0].mxu0
        %6181 = vmatprep.mubr.bf16.mxu0 %v5711
        %6182 = vmatmul.mubr.bf16.gmra.mrb[0].mxu0 %v5710
        %v6183 = vpop.f32.mrb[0].mxu0
        %v6184 = vadd.f32 %v5859, %v6183
        %v6185 = vpop.f32.mrb[0].mxu0
        %v6186 = vpop.f32.mrb[0].mxu0
        %v6187 = vadd.f32 %v5859, %v6186
        %v6188 = vpop.f32.mrb[0].mxu0
        %6189 = vmatprep.mubr.bf16.mxu0 %v5715
        %6190 = vmatmul.mubr.bf16.gmra.mrb[0].mxu0 %v5714
        %v6191 = vpop.f32.mrb[0].mxu0
        %v6192 = vadd.f32 %v5859, %v6191
        %v6193 = vpop.f32.mrb[0].mxu0
        %v6194 = vpop.f32.mrb[0].mxu0
        %v6195 = vadd.f32 %v5859, %v6194
        %v6196 = vpop.f32.mrb[0].mxu0
        %6197 = vmatprep.mubr.bf16.mxu0 %v5719
        %6198 = vmatmul.mubr.bf16.gmra.mrb[0].mxu0 %v5718
        %v6199 = vpop.f32.mrb[0].mxu0
        %v6200 = vadd.f32 %v5859, %v6199
        %v6201 = vpop.f32.mrb[0].mxu0
        %v6202 = vpop.f32.mrb[0].mxu0
        %v6203 = vadd.f32 %v5859, %v6202
        %v6204 = vpop.f32.mrb[0].mxu0
        %6205 = vmatprep.mubr.bf16.mxu0 %v5723
        %6206 = vmatmul.mubr.bf16.gmra.mrb[0].mxu0 %v5722
        %v6207 = vpop.f32.mrb[0].mxu0
        %v6208 = vadd.f32 %v5859, %v6207
        %v6209 = vpop.f32.mrb[0].mxu0
        %v6210 = vpop.f32.mrb[0].mxu0
        %v6211 = vadd.f32 %v5859, %v6210
        %v6212 = vpop.f32.mrb[0].mxu0
        %6213 = vmatprep.mubr.bf16.mxu0 %v5727
        %6214 = vmatmul.mubr.bf16.gmra.mrb[0].mxu0 %v5726
        %v6215 = vpop.f32.mrb[0].mxu0
        %v6216 = vadd.f32 %v5859, %v6215
        %v6217 = vpop.f32.mrb[0].mxu0
        %v6218 = vpop.f32.mrb[0].mxu0
        %v6219 = vadd.f32 %v5859, %v6218
        %v6220 = vpop.f32.mrb[0].mxu0
        %6221 = vmatprep.mubr.bf16.mxu0 %v5731
        %6222 = vmatmul.mubr.bf16.gmra.mrb[0].mxu0 %v5730
        %v6223 = vpop.f32.mrb[0].mxu0
        %v6224 = vadd.f32 %v5859, %v6223
        %v6225 = vpop.f32.mrb[0].mxu0
        %v6226 = vpop.f32.mrb[0].mxu0
        %v6227 = vadd.f32 %v5859, %v6226
        %v6228 = vpop.f32.mrb[0].mxu0
        %6229 = vmatprep.mubr.bf16.mxu0 %v5735
        %6230 = vmatmul.mubr.bf16.gmra.mrb[0].mxu0 %v5734
        %v6231 = vpop.f32.mrb[0].mxu0
        %v6232 = vadd.f32 %v5859, %v6231
        %v6233 = vpop.f32.mrb[0].mxu0
        %v6234 = vpop.f32.mrb[0].mxu0
        %v6235 = vadd.f32 %v5859, %v6234
        %v6236 = vpop.f32.mrb[0].mxu0
        %6237 = vmatprep.mubr.bf16.mxu0 %v5739
        %6238 = vmatmul.mubr.bf16.gmra.mrb[0].mxu0 %v5738
        %v6239 = vpop.f32.mrb[0].mxu0
        %v6240 = vadd.f32 %v5859, %v6239
        %v6241 = vpop.f32.mrb[0].mxu0
        %v6242 = vpop.f32.mrb[0].mxu0
        %v6243 = vadd.f32 %v5859, %v6242
        %v6244 = vpop.f32.mrb[0].mxu0
        %6245 = vmatprep.mubr.bf16.mxu0 %v5743
        %6246 = vmatmul.mubr.bf16.gmra.mrb[0].mxu0 %v5742
        %v6247 = vpop.f32.mrb[0].mxu0
        %v6248 = vadd.f32 %v5859, %v6247
        %v6249 = vpop.f32.mrb[0].mxu0
        %v6250 = vpop.f32.mrb[0].mxu0
        %v6251 = vadd.f32 %v5859, %v6250
        %v6252 = vpop.f32.mrb[0].mxu0
        %6253 = vmatprep.mubr.bf16.mxu0 %v5747
        %6254 = vmatmul.mubr.bf16.gmra.mrb[0].mxu0 %v5746
        %v6255 = vpop.f32.mrb[0].mxu0
        %v6256 = vadd.f32 %v5859, %v6255
        %v6257 = vpop.f32.mrb[0].mxu0
        %v6258 = vpop.f32.mrb[0].mxu0
        %v6259 = vadd.f32 %v5859, %v6258
        %v6260 = vpop.f32.mrb[0].mxu0
        %6261 = vmatprep.mubr.bf16.mxu0 %v5751
        %6262 = vmatmul.mubr.bf16.gmra.mrb[0].mxu0 %v5750
        %v6263 = vpop.f32.mrb[0].mxu0
        %v6264 = vadd.f32 %v5859, %v6263
        %v6265 = vpop.f32.mrb[0].mxu0
        %v6266 = vpop.f32.mrb[0].mxu0
        %v6267 = vadd.f32 %v5859, %v6266
        %v6268 = vpop.f32.mrb[0].mxu0
        %6269 = vmatprep.mubr.bf16.mxu0 %v5755
        %6270 = vmatmul.mubr.bf16.gmra.mrb[0].mxu0 %v5754
        %v6271 = vpop.f32.mrb[0].mxu0
        %v6272 = vadd.f32 %v5859, %v6271
        %v6273 = vpop.f32.mrb[0].mxu0
        %v6274 = vpop.f32.mrb[0].mxu0
        %v6275 = vadd.f32 %v5859, %v6274
        %v6276 = vpop.f32.mrb[0].mxu0
        %6277 = vmatprep.mubr.bf16.mxu0 %v5759
        %6278 = vmatmul.mubr.bf16.gmra.mrb[0].mxu0 %v5758
        %v6279 = vpop.f32.mrb[0].mxu0
        %v6280 = vadd.f32 %v5859, %v6279
        %v6281 = vpop.f32.mrb[0].mxu0
        %v6282 = vpop.f32.mrb[0].mxu0
        %v6283 = vadd.f32 %v5859, %v6282
        %v6284 = vpop.f32.mrb[0].mxu0
        %6285 = vmatprep.mubr.bf16.mxu0 %v5763
        %6286 = vmatmul.mubr.bf16.gmra.mrb[0].mxu0 %v5762
        %v6287 = vpop.f32.mrb[0].mxu0
        %v6288 = vadd.f32 %v5859, %v6287
        %v6289 = vpop.f32.mrb[0].mxu0
        %v6290 = vpop.f32.mrb[0].mxu0
        %v6291 = vadd.f32 %v5859, %v6290
        %v6292 = vpop.f32.mrb[0].mxu0
        %6293 = vmatprep.mubr.bf16.mxu0 %v5767
        %6294 = vmatmul.mubr.bf16.gmra.mrb[0].mxu0 %v5766
        %v6295 = vpop.f32.mrb[0].mxu0
        %v6296 = vadd.f32 %v5859, %v6295
        %v6297 = vpop.f32.mrb[0].mxu0
        %v6298 = vpop.f32.mrb[0].mxu0
        %v6299 = vadd.f32 %v5859, %v6298
        %v6300 = vpop.f32.mrb[0].mxu0
        %6301 = vmatprep.mubr.bf16.mxu0 %v5771
        %6302 = vmatmul.mubr.bf16.gmra.mrb[0].mxu0 %v5770
        %v6303 = vpop.f32.mrb[0].mxu0
        %v6304 = vadd.f32 %v5859, %v6303
        %v6305 = vpop.f32.mrb[0].mxu0
        %v6306 = vpop.f32.mrb[0].mxu0
        %v6307 = vadd.f32 %v5859, %v6306
        %v6308 = vpop.f32.mrb[0].mxu0
        %6309 = vmatprep.mubr.bf16.mxu0 %v5775
        %6310 = vmatmul.mubr.bf16.gmra.mrb[0].mxu0 %v5774
        %v6311 = vpop.f32.mrb[0].mxu0
        %v6312 = vadd.f32 %v5859, %v6311
        %v6313 = vpop.f32.mrb[0].mxu0
        %v6314 = vpop.f32.mrb[0].mxu0
        %v6315 = vadd.f32 %v5859, %v6314
        %v6316 = vpop.f32.mrb[0].mxu0
        %6317 = vmatprep.mubr.bf16.mxu0 %v5779
        %6318 = vmatmul.mubr.bf16.gmra.mrb[0].mxu0 %v5778
        %v6319 = vpop.f32.mrb[0].mxu0
        %v6320 = vadd.f32 %v5859, %v6319
        %v6321 = vpop.f32.mrb[0].mxu0
        %v6322 = vpop.f32.mrb[0].mxu0
        %v6323 = vadd.f32 %v5859, %v6322
        %v6324 = vpop.f32.mrb[0].mxu0
        %6325 = vmatprep.mubr.bf16.mxu0 %v5783
        %6326 = vmatmul.mubr.bf16.gmra.mrb[0].mxu0 %v5782
        %v6327 = vpop.f32.mrb[0].mxu0
        %v6328 = vadd.f32 %v5859, %v6327
        %v6329 = vpop.f32.mrb[0].mxu0
        %v6330 = vpop.f32.mrb[0].mxu0
        %v6331 = vadd.f32 %v5859, %v6330
        %v6332 = vpop.f32.mrb[0].mxu0
        %6333 = vmatprep.mubr.bf16.mxu0 %v5787
        %6334 = vmatmul.mubr.bf16.gmra.mrb[0].mxu0 %v5786
        %v6335 = vpop.f32.mrb[0].mxu0
        %v6336 = vadd.f32 %v5859, %v6335
        %v6337 = vpop.f32.mrb[0].mxu0
        %v6338 = vpop.f32.mrb[0].mxu0
        %v6339 = vadd.f32 %v5859, %v6338
        %v6340 = vpop.f32.mrb[0].mxu0
        %6341 = vdwg.mxu0
        %6342 = vmatprep.subr.bf16.mxu0 0
        %6343 = vmatpush1.bf16.msra.mxu0 %v6005
        %6344 = vmatprep.subr.bf16.mxu0 0
        %6345 = vmatpush1.bf16.msra.mxu0 %v6006
        %6346 = vmatprep.subr.bf16.mxu0 0
        %6347 = vmatpush1.bf16.msra.mxu0 %v6007
        %6348 = vmatprep.subr.bf16.mxu0 0
        %6349 = vmatpush1.bf16.msra.mxu0 %v6008
        %6350 = vmatprep.subr.bf16.mxu0 0
        %6351 = vmatpush1.bf16.msra.mxu0 %v6009
        %6352 = vmatprep.subr.bf16.mxu0 0
        %6353 = vmatpush1.bf16.msra.mxu0 %v6010
        %6354 = vmatprep.subr.bf16.mxu0 0
        %6355 = vmatpush1.bf16.msra.mxu0 %v6011
        %6356 = vmatprep.subr.bf16.mxu0 0
        %6357 = vmatpush1.bf16.msra.mxu0 %v6012
        %6358 = vmatprep.subr.bf16.mxu0 0
        %6359 = vmatpush1.bf16.msra.mxu0 %v6013
        %6360 = vmatprep.subr.bf16.mxu0 0
        %6361 = vmatpush1.bf16.msra.mxu0 %v6014
        %6362 = vmatprep.subr.bf16.mxu0 0
        %6363 = vmatpush1.bf16.msra.mxu0 %v6015
        %6364 = vmatprep.subr.bf16.mxu0 0
        %6365 = vmatpush1.bf16.msra.mxu0 %v6016
        %6366 = vmatprep.subr.bf16.mxu0 0
        %6367 = vmatpush1.bf16.msra.mxu0 %v6017
        %6368 = vmatprep.subr.bf16.mxu0 0
        %6369 = vmatpush1.bf16.msra.mxu0 %v6018
        %6370 = vmatprep.subr.bf16.mxu0 0
        %6371 = vmatpush1.bf16.msra.mxu0 %v6019
        %6372 = vmatprep.subr.bf16.mxu0 0
        %6373 = vmatpush1.bf16.msra.mxu0 %v6020
        %6374 = vmatprep.mubr.bf16.mxu0 %v5665
        %6375 = vmatmul.mubr.bf16.gmra.mrb[0].mxu0 %v5664
        %v6376 = vpop.f32.mrb[0].mxu0
        %v6377 = vadd.f32 %v6088, %v6376
        %v6378 = vpop.f32.mrb[0].mxu0
        %v6379 = vpop.f32.mrb[0].mxu0
        %v6380 = vadd.f32 %v6091, %v6379
        %v6381 = vpop.f32.mrb[0].mxu0
        %6382 = vmatprep.mubr.bf16.mxu0 %v5669
        %6383 = vmatmul.mubr.bf16.gmra.mrb[0].mxu0 %v5668
        %v6384 = vpop.f32.mrb[0].mxu0
        %v6385 = vadd.f32 %v6096, %v6384
        %v6386 = vpop.f32.mrb[0].mxu0
        %v6387 = vpop.f32.mrb[0].mxu0
        %v6388 = vadd.f32 %v6099, %v6387
        %v6389 = vpop.f32.mrb[0].mxu0
        %6390 = vmatprep.mubr.bf16.mxu0 %v5673
        %6391 = vmatmul.mubr.bf16.gmra.mrb[0].mxu0 %v5672
        %v6392 = vpop.f32.mrb[0].mxu0
        %v6393 = vadd.f32 %v6104, %v6392
        %v6394 = vpop.f32.mrb[0].mxu0
        %v6395 = vpop.f32.mrb[0].mxu0
        %v6396 = vadd.f32 %v6107, %v6395
        %v6397 = vpop.f32.mrb[0].mxu0
        %6398 = vmatprep.mubr.bf16.mxu0 %v5677
        %6399 = vmatmul.mubr.bf16.gmra.mrb[0].mxu0 %v5676
        %v6400 = vpop.f32.mrb[0].mxu0
        %v6401 = vadd.f32 %v6112, %v6400
        %v6402 = vpop.f32.mrb[0].mxu0
        %v6403 = vpop.f32.mrb[0].mxu0
        %v6404 = vadd.f32 %v6115, %v6403
        %v6405 = vpop.f32.mrb[0].mxu0
        %6406 = vmatprep.mubr.bf16.mxu0 %v5681
        %6407 = vmatmul.mubr.bf16.gmra.mrb[0].mxu0 %v5680
        %v6408 = vpop.f32.mrb[0].mxu0
        %v6409 = vadd.f32 %v6120, %v6408
        %v6410 = vpop.f32.mrb[0].mxu0
        %v6411 = vpop.f32.mrb[0].mxu0
        %v6412 = vadd.f32 %v6123, %v6411
        %v6413 = vpop.f32.mrb[0].mxu0
        %6414 = vmatprep.mubr.bf16.mxu0 %v5685
        %6415 = vmatmul.mubr.bf16.gmra.mrb[0].mxu0 %v5684
        %v6416 = vpop.f32.mrb[0].mxu0
        %v6417 = vadd.f32 %v6128, %v6416
        %v6418 = vpop.f32.mrb[0].mxu0
        %v6419 = vpop.f32.mrb[0].mxu0
        %v6420 = vadd.f32 %v6131, %v6419
        %v6421 = vpop.f32.mrb[0].mxu0
        %6422 = vmatprep.mubr.bf16.mxu0 %v5689
        %6423 = vmatmul.mubr.bf16.gmra.mrb[0].mxu0 %v5688
        %v6424 = vpop.f32.mrb[0].mxu0
        %v6425 = vadd.f32 %v6136, %v6424
        %v6426 = vpop.f32.mrb[0].mxu0
        %v6427 = vpop.f32.mrb[0].mxu0
        %v6428 = vadd.f32 %v6139, %v6427
        %v6429 = vpop.f32.mrb[0].mxu0
        %6430 = vmatprep.mubr.bf16.mxu0 %v5693
        %6431 = vmatmul.mubr.bf16.gmra.mrb[0].mxu0 %v5692
        %v6432 = vpop.f32.mrb[0].mxu0
        %v6433 = vadd.f32 %v6144, %v6432
        %v6434 = vpop.f32.mrb[0].mxu0
        %v6435 = vpop.f32.mrb[0].mxu0
        %v6436 = vadd.f32 %v6147, %v6435
        %v6437 = vpop.f32.mrb[0].mxu0
        %6438 = vmatprep.mubr.bf16.mxu0 %v5697
        %6439 = vmatmul.mubr.bf16.gmra.mrb[0].mxu0 %v5696
        %v6440 = vpop.f32.mrb[0].mxu0
        %v6441 = vadd.f32 %v6152, %v6440
        %v6442 = vpop.f32.mrb[0].mxu0
        %v6443 = vpop.f32.mrb[0].mxu0
        %v6444 = vadd.f32 %v6155, %v6443
        %v6445 = vpop.f32.mrb[0].mxu0
        %6446 = vmatprep.mubr.bf16.mxu0 %v5701
        %6447 = vmatmul.mubr.bf16.gmra.mrb[0].mxu0 %v5700
        %v6448 = vpop.f32.mrb[0].mxu0
        %v6449 = vadd.f32 %v6160, %v6448
        %v6450 = vpop.f32.mrb[0].mxu0
        %v6451 = vpop.f32.mrb[0].mxu0
        %v6452 = vadd.f32 %v6163, %v6451
        %v6453 = vpop.f32.mrb[0].mxu0
        %6454 = vmatprep.mubr.bf16.mxu0 %v5705
        %6455 = vmatmul.mubr.bf16.gmra.mrb[0].mxu0 %v5704
        %v6456 = vpop.f32.mrb[0].mxu0
        %v6457 = vadd.f32 %v6168, %v6456
        %v6458 = vpop.f32.mrb[0].mxu0
        %v6459 = vpop.f32.mrb[0].mxu0
        %v6460 = vadd.f32 %v6171, %v6459
        %v6461 = vpop.f32.mrb[0].mxu0
        %6462 = vmatprep.mubr.bf16.mxu0 %v5709
        %6463 = vmatmul.mubr.bf16.gmra.mrb[0].mxu0 %v5708
        %v6464 = vpop.f32.mrb[0].mxu0
        %v6465 = vadd.f32 %v6176, %v6464
        %v6466 = vpop.f32.mrb[0].mxu0
        %v6467 = vpop.f32.mrb[0].mxu0
        %v6468 = vadd.f32 %v6179, %v6467
        %v6469 = vpop.f32.mrb[0].mxu0
        %6470 = vmatprep.mubr.bf16.mxu0 %v5713
        %6471 = vmatmul.mubr.bf16.gmra.mrb[0].mxu0 %v5712
        %v6472 = vpop.f32.mrb[0].mxu0
        %v6473 = vadd.f32 %v6184, %v6472
        %v6474 = vpop.f32.mrb[0].mxu0
        %v6475 = vpop.f32.mrb[0].mxu0
        %v6476 = vadd.f32 %v6187, %v6475
        %v6477 = vpop.f32.mrb[0].mxu0
        %6478 = vmatprep.mubr.bf16.mxu0 %v5717
        %6479 = vmatmul.mubr.bf16.gmra.mrb[0].mxu0 %v5716
        %v6480 = vpop.f32.mrb[0].mxu0
        %v6481 = vadd.f32 %v6192, %v6480
        %v6482 = vpop.f32.mrb[0].mxu0
        %v6483 = vpop.f32.mrb[0].mxu0
        %v6484 = vadd.f32 %v6195, %v6483
        %v6485 = vpop.f32.mrb[0].mxu0
        %6486 = vmatprep.mubr.bf16.mxu0 %v5721
        %6487 = vmatmul.mubr.bf16.gmra.mrb[0].mxu0 %v5720
        %v6488 = vpop.f32.mrb[0].mxu0
        %v6489 = vadd.f32 %v6200, %v6488
        %v6490 = vpop.f32.mrb[0].mxu0
        %v6491 = vpop.f32.mrb[0].mxu0
        %v6492 = vadd.f32 %v6203, %v6491
        %v6493 = vpop.f32.mrb[0].mxu0
        %6494 = vmatprep.mubr.bf16.mxu0 %v5725
        %6495 = vmatmul.mubr.bf16.gmra.mrb[0].mxu0 %v5724
        %v6496 = vpop.f32.mrb[0].mxu0
        %v6497 = vadd.f32 %v6208, %v6496
        %v6498 = vpop.f32.mrb[0].mxu0
        %v6499 = vpop.f32.mrb[0].mxu0
        %v6500 = vadd.f32 %v6211, %v6499
        %v6501 = vpop.f32.mrb[0].mxu0
        %6502 = vmatprep.mubr.bf16.mxu0 %v5729
        %6503 = vmatmul.mubr.bf16.gmra.mrb[0].mxu0 %v5728
        %v6504 = vpop.f32.mrb[0].mxu0
        %v6505 = vadd.f32 %v6216, %v6504
        %v6506 = vpop.f32.mrb[0].mxu0
        %v6507 = vpop.f32.mrb[0].mxu0
        %v6508 = vadd.f32 %v6219, %v6507
        %v6509 = vpop.f32.mrb[0].mxu0
        %6510 = vmatprep.mubr.bf16.mxu0 %v5733
        %6511 = vmatmul.mubr.bf16.gmra.mrb[0].mxu0 %v5732
        %v6512 = vpop.f32.mrb[0].mxu0
        %v6513 = vadd.f32 %v6224, %v6512
        %v6514 = vpop.f32.mrb[0].mxu0
        %v6515 = vpop.f32.mrb[0].mxu0
        %v6516 = vadd.f32 %v6227, %v6515
        %v6517 = vpop.f32.mrb[0].mxu0
        %6518 = vmatprep.mubr.bf16.mxu0 %v5737
        %6519 = vmatmul.mubr.bf16.gmra.mrb[0].mxu0 %v5736
        %v6520 = vpop.f32.mrb[0].mxu0
        %v6521 = vadd.f32 %v6232, %v6520
        %v6522 = vpop.f32.mrb[0].mxu0
        %v6523 = vpop.f32.mrb[0].mxu0
        %v6524 = vadd.f32 %v6235, %v6523
        %v6525 = vpop.f32.mrb[0].mxu0
        %6526 = vmatprep.mubr.bf16.mxu0 %v5741
        %6527 = vmatmul.mubr.bf16.gmra.mrb[0].mxu0 %v5740
        %v6528 = vpop.f32.mrb[0].mxu0
        %v6529 = vadd.f32 %v6240, %v6528
        %v6530 = vpop.f32.mrb[0].mxu0
        %v6531 = vpop.f32.mrb[0].mxu0
        %v6532 = vadd.f32 %v6243, %v6531
        %v6533 = vpop.f32.mrb[0].mxu0
        %6534 = vmatprep.mubr.bf16.mxu0 %v5745
        %6535 = vmatmul.mubr.bf16.gmra.mrb[0].mxu0 %v5744
        %v6536 = vpop.f32.mrb[0].mxu0
        %v6537 = vadd.f32 %v6248, %v6536
        %v6538 = vpop.f32.mrb[0].mxu0
        %v6539 = vpop.f32.mrb[0].mxu0
        %v6540 = vadd.f32 %v6251, %v6539
        %v6541 = vpop.f32.mrb[0].mxu0
        %6542 = vmatprep.mubr.bf16.mxu0 %v5749
        %6543 = vmatmul.mubr.bf16.gmra.mrb[0].mxu0 %v5748
        %v6544 = vpop.f32.mrb[0].mxu0
        %v6545 = vadd.f32 %v6256, %v6544
        %v6546 = vpop.f32.mrb[0].mxu0
        %v6547 = vpop.f32.mrb[0].mxu0
        %v6548 = vadd.f32 %v6259, %v6547
        %v6549 = vpop.f32.mrb[0].mxu0
        %6550 = vmatprep.mubr.bf16.mxu0 %v5753
        %6551 = vmatmul.mubr.bf16.gmra.mrb[0].mxu0 %v5752
        %v6552 = vpop.f32.mrb[0].mxu0
        %v6553 = vadd.f32 %v6264, %v6552
        %v6554 = vpop.f32.mrb[0].mxu0
        %v6555 = vpop.f32.mrb[0].mxu0
        %v6556 = vadd.f32 %v6267, %v6555
        %v6557 = vpop.f32.mrb[0].mxu0
        %6558 = vmatprep.mubr.bf16.mxu0 %v5757
        %6559 = vmatmul.mubr.bf16.gmra.mrb[0].mxu0 %v5756
        %v6560 = vpop.f32.mrb[0].mxu0
        %v6561 = vadd.f32 %v6272, %v6560
        %v6562 = vpop.f32.mrb[0].mxu0
        %v6563 = vpop.f32.mrb[0].mxu0
        %v6564 = vadd.f32 %v6275, %v6563
        %v6565 = vpop.f32.mrb[0].mxu0
        %6566 = vmatprep.mubr.bf16.mxu0 %v5761
        %6567 = vmatmul.mubr.bf16.gmra.mrb[0].mxu0 %v5760
        %v6568 = vpop.f32.mrb[0].mxu0
        %v6569 = vadd.f32 %v6280, %v6568
        %v6570 = vpop.f32.mrb[0].mxu0
        %v6571 = vpop.f32.mrb[0].mxu0
        %v6572 = vadd.f32 %v6283, %v6571
        %v6573 = vpop.f32.mrb[0].mxu0
        %6574 = vmatprep.mubr.bf16.mxu0 %v5765
        %6575 = vmatmul.mubr.bf16.gmra.mrb[0].mxu0 %v5764
        %v6576 = vpop.f32.mrb[0].mxu0
        %v6577 = vadd.f32 %v6288, %v6576
        %v6578 = vpop.f32.mrb[0].mxu0
        %v6579 = vpop.f32.mrb[0].mxu0
        %v6580 = vadd.f32 %v6291, %v6579
        %v6581 = vpop.f32.mrb[0].mxu0
        %6582 = vmatprep.mubr.bf16.mxu0 %v5769
        %6583 = vmatmul.mubr.bf16.gmra.mrb[0].mxu0 %v5768
        %v6584 = vpop.f32.mrb[0].mxu0
        %v6585 = vadd.f32 %v6296, %v6584
        %v6586 = vpop.f32.mrb[0].mxu0
        %v6587 = vpop.f32.mrb[0].mxu0
        %v6588 = vadd.f32 %v6299, %v6587
        %v6589 = vpop.f32.mrb[0].mxu0
        %6590 = vmatprep.mubr.bf16.mxu0 %v5773
        %6591 = vmatmul.mubr.bf16.gmra.mrb[0].mxu0 %v5772
        %v6592 = vpop.f32.mrb[0].mxu0
        %v6593 = vadd.f32 %v6304, %v6592
        %v6594 = vpop.f32.mrb[0].mxu0
        %v6595 = vpop.f32.mrb[0].mxu0
        %v6596 = vadd.f32 %v6307, %v6595
        %v6597 = vpop.f32.mrb[0].mxu0
        %6598 = vmatprep.mubr.bf16.mxu0 %v5777
        %6599 = vmatmul.mubr.bf16.gmra.mrb[0].mxu0 %v5776
        %v6600 = vpop.f32.mrb[0].mxu0
        %v6601 = vadd.f32 %v6312, %v6600
        %v6602 = vpop.f32.mrb[0].mxu0
        %v6603 = vpop.f32.mrb[0].mxu0
        %v6604 = vadd.f32 %v6315, %v6603
        %v6605 = vpop.f32.mrb[0].mxu0
        %6606 = vmatprep.mubr.bf16.mxu0 %v5781
        %6607 = vmatmul.mubr.bf16.gmra.mrb[0].mxu0 %v5780
        %v6608 = vpop.f32.mrb[0].mxu0
        %v6609 = vadd.f32 %v6320, %v6608
        %v6610 = vpop.f32.mrb[0].mxu0
        %v6611 = vpop.f32.mrb[0].mxu0
        %v6612 = vadd.f32 %v6323, %v6611
        %v6613 = vpop.f32.mrb[0].mxu0
        %6614 = vmatprep.mubr.bf16.mxu0 %v5785
        %6615 = vmatmul.mubr.bf16.gmra.mrb[0].mxu0 %v5784
        %v6616 = vpop.f32.mrb[0].mxu0
        %v6617 = vadd.f32 %v6328, %v6616
        %v6618 = vpop.f32.mrb[0].mxu0
        %v6619 = vpop.f32.mrb[0].mxu0
        %v6620 = vadd.f32 %v6331, %v6619
        %v6621 = vpop.f32.mrb[0].mxu0
        %6622 = vmatprep.mubr.bf16.mxu0 %v5789
        %6623 = vmatmul.mubr.bf16.gmra.mrb[0].mxu0 %v5788
        %v6624 = vpop.f32.mrb[0].mxu0
        %v6625 = vadd.f32 %v6336, %v6624
        %v6626 = vpop.f32.mrb[0].mxu0
        %v6627 = vpop.f32.mrb[0].mxu0
        %v6628 = vadd.f32 %v6339, %v6627
        %v6629 = vpop.f32.mrb[0].mxu0
        %6630 = vdwg.mxu0
        %v6631 = vmax.f32 %v6377, %v6380
        %v6632 = vmax.f32 %v6631, %v6385
        %v6633 = vmax.f32 %v6632, %v6388
        %v6634 = vrot.slane %v6633, 4
        %v6635 = vmax.f32 %v6633, %v6634
        %v6636 = vrot.slane %v6635, 2
        %v6637 = vmax.f32 %v6635, %v6636
        %v6638 = vrot.slane %v6637, 1
        %v6639 = vmax.f32 %v6637, %v6638
        %v6640 = vmax.f32 %v6393, %v6396
        %v6641 = vmax.f32 %v6640, %v6401
        %v6642 = vmax.f32 %v6641, %v6404
        %v6643 = vrot.slane %v6642, 4
        %v6644 = vmax.f32 %v6642, %v6643
        %v6645 = vrot.slane %v6644, 2
        %v6646 = vmax.f32 %v6644, %v6645
        %v6647 = vrot.slane %v6646, 1
        %v6648 = vmax.f32 %v6646, %v6647
        %v6649 = vmax.f32 %v6409, %v6412
        %v6650 = vmax.f32 %v6649, %v6417
        %v6651 = vmax.f32 %v6650, %v6420
        %v6652 = vrot.slane %v6651, 4
        %v6653 = vmax.f32 %v6651, %v6652
        %v6654 = vrot.slane %v6653, 2
        %v6655 = vmax.f32 %v6653, %v6654
        %v6656 = vrot.slane %v6655, 1
        %v6657 = vmax.f32 %v6655, %v6656
        %v6658 = vmax.f32 %v6425, %v6428
        %v6659 = vmax.f32 %v6658, %v6433
        %v6660 = vmax.f32 %v6659, %v6436
        %v6661 = vrot.slane %v6660, 4
        %v6662 = vmax.f32 %v6660, %v6661
        %v6663 = vrot.slane %v6662, 2
        %v6664 = vmax.f32 %v6662, %v6663
        %v6665 = vrot.slane %v6664, 1
        %v6666 = vmax.f32 %v6664, %v6665
        %v6667 = vmax.f32 %v6441, %v6444
        %v6668 = vmax.f32 %v6667, %v6449
        %v6669 = vmax.f32 %v6668, %v6452
        %v6670 = vrot.slane %v6669, 4
        %v6671 = vmax.f32 %v6669, %v6670
        %v6672 = vrot.slane %v6671, 2
        %v6673 = vmax.f32 %v6671, %v6672
        %v6674 = vrot.slane %v6673, 1
        %v6675 = vmax.f32 %v6673, %v6674
        %v6676 = vmax.f32 %v6457, %v6460
        %v6677 = vmax.f32 %v6676, %v6465
        %v6678 = vmax.f32 %v6677, %v6468
        %v6679 = vrot.slane %v6678, 4
        %v6680 = vmax.f32 %v6678, %v6679
        %v6681 = vrot.slane %v6680, 2
        %v6682 = vmax.f32 %v6680, %v6681
        %v6683 = vrot.slane %v6682, 1
        %v6684 = vmax.f32 %v6682, %v6683
        %v6685 = vmax.f32 %v6473, %v6476
        %v6686 = vmax.f32 %v6685, %v6481
        %v6687 = vmax.f32 %v6686, %v6484
        %v6688 = vrot.slane %v6687, 4
        %v6689 = vmax.f32 %v6687, %v6688
        %v6690 = vrot.slane %v6689, 2
        %v6691 = vmax.f32 %v6689, %v6690
        %v6692 = vrot.slane %v6691, 1
        %v6693 = vmax.f32 %v6691, %v6692
        %v6694 = vmax.f32 %v6489, %v6492
        %v6695 = vmax.f32 %v6694, %v6497
        %v6696 = vmax.f32 %v6695, %v6500
        %v6697 = vrot.slane %v6696, 4
        %v6698 = vmax.f32 %v6696, %v6697
        %v6699 = vrot.slane %v6698, 2
        %v6700 = vmax.f32 %v6698, %v6699
        %v6701 = vrot.slane %v6700, 1
        %v6702 = vmax.f32 %v6700, %v6701
        %v6703 = vmax.f32 %v6505, %v6508
        %v6704 = vmax.f32 %v6703, %v6513
        %v6705 = vmax.f32 %v6704, %v6516
        %v6706 = vrot.slane %v6705, 4
        %v6707 = vmax.f32 %v6705, %v6706
        %v6708 = vrot.slane %v6707, 2
        %v6709 = vmax.f32 %v6707, %v6708
        %v6710 = vrot.slane %v6709, 1
        %v6711 = vmax.f32 %v6709, %v6710
        %v6712 = vmax.f32 %v6521, %v6524
        %v6713 = vmax.f32 %v6712, %v6529
        %v6714 = vmax.f32 %v6713, %v6532
        %v6715 = vrot.slane %v6714, 4
        %v6716 = vmax.f32 %v6714, %v6715
        %v6717 = vrot.slane %v6716, 2
        %v6718 = vmax.f32 %v6716, %v6717
        %v6719 = vrot.slane %v6718, 1
        %v6720 = vmax.f32 %v6718, %v6719
        %v6721 = vmax.f32 %v6537, %v6540
        %v6722 = vmax.f32 %v6721, %v6545
        %v6723 = vmax.f32 %v6722, %v6548
        %v6724 = vrot.slane %v6723, 4
        %v6725 = vmax.f32 %v6723, %v6724
        %v6726 = vrot.slane %v6725, 2
        %v6727 = vmax.f32 %v6725, %v6726
        %v6728 = vrot.slane %v6727, 1
        %v6729 = vmax.f32 %v6727, %v6728
        %v6730 = vmax.f32 %v6553, %v6556
        %v6731 = vmax.f32 %v6730, %v6561
        %v6732 = vmax.f32 %v6731, %v6564
        %v6733 = vrot.slane %v6732, 4
        %v6734 = vmax.f32 %v6732, %v6733
        %v6735 = vrot.slane %v6734, 2
        %v6736 = vmax.f32 %v6734, %v6735
        %v6737 = vrot.slane %v6736, 1
        %v6738 = vmax.f32 %v6736, %v6737
        %v6739 = vmax.f32 %v6569, %v6572
        %v6740 = vmax.f32 %v6739, %v6577
        %v6741 = vmax.f32 %v6740, %v6580
        %v6742 = vrot.slane %v6741, 4
        %v6743 = vmax.f32 %v6741, %v6742
        %v6744 = vrot.slane %v6743, 2
        %v6745 = vmax.f32 %v6743, %v6744
        %v6746 = vrot.slane %v6745, 1
        %v6747 = vmax.f32 %v6745, %v6746
        %v6748 = vmax.f32 %v6585, %v6588
        %v6749 = vmax.f32 %v6748, %v6593
        %v6750 = vmax.f32 %v6749, %v6596
        %v6751 = vrot.slane %v6750, 4
        %v6752 = vmax.f32 %v6750, %v6751
        %v6753 = vrot.slane %v6752, 2
        %v6754 = vmax.f32 %v6752, %v6753
        %v6755 = vrot.slane %v6754, 1
        %v6756 = vmax.f32 %v6754, %v6755
        %v6757 = vmax.f32 %v6601, %v6604
        %v6758 = vmax.f32 %v6757, %v6609
        %v6759 = vmax.f32 %v6758, %v6612
        %v6760 = vrot.slane %v6759, 4
        %v6761 = vmax.f32 %v6759, %v6760
        %v6762 = vrot.slane %v6761, 2
        %v6763 = vmax.f32 %v6761, %v6762
        %v6764 = vrot.slane %v6763, 1
        %v6765 = vmax.f32 %v6763, %v6764
        %v6766 = vmax.f32 %v6617, %v6620
        %v6767 = vmax.f32 %v6766, %v6625
        %v6768 = vmax.f32 %v6767, %v6628
        %v6769 = vrot.slane %v6768, 4
        %v6770 = vmax.f32 %v6768, %v6769
        %v6771 = vrot.slane %v6770, 2
        %v6772 = vmax.f32 %v6770, %v6771
        %v6773 = vrot.slane %v6772, 1
        %v6774 = vmax.f32 %v6772, %v6773
        %v6791 = vsel %vm2809, %v6648, %v6639
        %v6792 = vsel %vm2811, %v6657, %v6791
        %v6793 = vsel %vm2813, %v6666, %v6792
        %v6794 = vsel %vm2815, %v6675, %v6793
        %v6795 = vsel %vm2817, %v6684, %v6794
        %v6796 = vsel %vm2819, %v6693, %v6795
        %v6797 = vsel %vm2821, %v6702, %v6796
        %v6798 = vsel %vm2809, %v6720, %v6711
        %v6799 = vsel %vm2811, %v6729, %v6798
        %v6800 = vsel %vm2813, %v6738, %v6799
        %v6801 = vsel %vm2815, %v6747, %v6800
        %v6802 = vsel %vm2817, %v6756, %v6801
        %v6803 = vsel %vm2819, %v6765, %v6802
        %v6804 = vsel %vm2821, %v6774, %v6803
        %6807 = vst [vmem:[%s498] sm:$0xff] %v6797
        %6808 = vst [vmem:[%s498 + $0x8] sm:$0xff] %v6804
        %s6809 = sand.u32 %s255, 1
        %s6810 = scalar_lea.sflag [#allocation4], %s6809
        %s6811 = sand.u32 %s255, 1
        %s6812 = smul.addr %s6811, 16
        %s6813 = scalar_lea.vmem [#allocation19], %s6812
        // Predicated region
        $region101: #{tpu_custom_call.1} parent=59 // pred_check
          %p6814 = pneg %p265
        $region102: #{tpu_custom_call.1} parent=59 // pred_check_branch
          %6816 = sbr.rel (%p6814) target = $region104
        $region103: #{tpu_custom_call.1} parent=59 // pred_region
          %s6817 = smul.u32 2, %s32
          %s6819 = ssub.s32 256, 256
          %6820 = vsyncadd %s6810, %s6819
          %s6821 = smul.addr %s6817, 128
          %s6822 = scalar_lea.hbm %s10, %s6821
          %s6823 = sshll.u32 %s6813, 4
          %s6824 = int_to_ptr.vmem [resolvable:$true] %s6823
          %6829 = dma.vmem_to_hbm [thread:$0]  %s6824, 256, %s6822, %s6810, 128, 128, 8
        $region104: #{tpu_custom_call.1} parent=59 // pred_fallthru
          _
      $region60: #{tpu_custom_call.1} parent=5 // pred_fallthru
        _
      %p6830 = scmp.le.s32.totalorder 2, %s27
      // Predicated region
      $region105: #{tpu_custom_call.1} parent=5 // pred_check
        %p6831 = pneg %p6830
      $region106: #{tpu_custom_call.1} parent=5 // pred_check_branch
        %6833 = sbr.rel (%p6831) target = $region108
      $region107: #{tpu_custom_call.1} parent=5 // pred_region
        %s6834 = ssub.s32 %s27, 2
        // Predicated region
        $region109: #{tpu_custom_call.1} parent=107 // pred_check
          %p6835 = pneg %p271
        $region110: #{tpu_custom_call.1} parent=107 // pred_check_branch
          %6837 = sbr.rel (%p6835) target = $region112
        $region111: #{tpu_custom_call.1} parent=107 // pred_region
          %s6838 = sand.u32 %s256, 1
          %s6839 = scalar_lea.sflag [#allocation4], %s6838
          %s6840 = sand.u32 %s256, 1
          %s6841 = smul.addr %s6840, 16
          %s6842 = scalar_lea.vmem [#allocation19], %s6841
          %6843 = dma.done %s6839, 256
        $region112: #{tpu_custom_call.1} parent=107 // pred_fallthru
          _
      $region108: #{tpu_custom_call.1} parent=5 // pred_fallthru
        _
    $region6: #{tpu_custom_call.1} parent=1 // loop_footer
      %s31 = sadd.s32 1, %s27
    $region7: #{tpu_custom_call.1} parent=1 // loop_footer_branch
      %26 = sbr.rel target = $region3
    $region8: #{tpu_custom_call.1} parent=1 // loop_exit
      _
    %6844 = vsyncpa [#allocation3], 1
    %s6845 = scalar_lea.sflag [#allocation3], 1
    %6846 = vsyncpa %s6845, 1
    %6847 = vsyncpa [#allocation6], 1
    %6848 = vsyncpa [#allocation9], 1
    %6849 = vsyncpa [#allocation12], 1
    %6850 = vsyncpa [#allocation15], 1
    %6851 = vsyncpa [#allocation18], 1
    %6852 = vsyncpa [#allocation4], 1
    %s6853 = scalar_lea.sflag [#allocation4], 1
    %6854 = vsyncpa %s6853, 1

</llo_original>
